<compile_context>
chip_gen: v6e
topology: v6e:2x2x1
jax: 0.10.0
libtpu: 0.0.40
codegen_flags: <defaults>
</compile_context>

<pallas_src>
import functools
import numpy as np
import jax
import jax.numpy as jnp
from jax import lax
from jax.experimental import pallas as pl
from jax.experimental.pallas import tpu as pltpu

BN_EPS = 1e-5


# --------------------------------------------------------------------------
# Constant helpers
# --------------------------------------------------------------------------
@functools.lru_cache(maxsize=None)
def _phase_scatter(hh, wh):
    """Phase-interleave scatter matrices for the x2 depthwise deconv.

    S[py*2+px, m*wh+n, (2m+py)*(2*wh) + (2n+px)] = 1, so a lane-flattened
    half-res phase map (C, hh*wh) @ S[phase] lands on the right stride-2
    positions of the lane-flattened full-res map (C, 4*hh*wh)."""
    h, w = 2 * hh, 2 * wh
    s = np.zeros((4, hh * wh, h * w), np.float32)
    for py in range(2):
        for px in range(2):
            for m in range(hh):
                for n in range(wh):
                    s[py * 2 + px, m * wh + n, (2 * m + py) * w + (2 * n + px)] = 1.0
    return s


# --------------------------------------------------------------------------
# In-kernel helpers
# --------------------------------------------------------------------------
def _shifted(a, dy, dx, w, col):
    """In-register zero-padded spatial shift of a lane-flattened (C, H*W) map.

    Returns b with b[c, y*w + x] = a[c, (y+dy)*w + (x+dx)], zero whenever the
    source pixel falls outside the H x W map (this is the fused replacement
    for jnp.pad + im2col).  `col` is a (1, H*W) iota of x coordinates."""
    c, hw = a.shape
    s = dy * w + dx
    if s != 0:
        zpad = jnp.zeros((c, w + 1), a.dtype)
        a = jnp.concatenate([zpad, a, zpad], axis=1)[:, w + 1 + s:w + 1 + s + hw]
    if dx == -1:                       # reading x-1: invalid on the left edge
        a = jnp.where(col > 0, a, 0.0)
    elif dx == 1:                      # reading x+1: invalid on the right edge
        a = jnp.where(col < w - 1, a, 0.0)
    return a


# --------------------------------------------------------------------------
# Fused IDAUp-node Pallas kernel
#   proj(1x1 conv+BN+ReLU) -> depthwise deconv x2 -> 3x3 node conv+BN+ReLU
# --------------------------------------------------------------------------
def _ida_node_kernel(xprev_ref, layer_ref, wp_ref, bp_ref, wup_ref, scat_ref,
                     wnx_ref, wnu_ref, bnb_ref, o_ref, *, has_proj, spatial):
    H, W = spatial
    Hh, Wh = H // 2, W // 2
    HW, HWh = H * W, Hh * Wh
    C = o_ref.shape[1]                                   # out_dim

    # ---- proj: 1x1 conv + folded BN + ReLU (pixels on lanes) -----------------
    lay = layer_ref[0]                                   # (c_in, Hh*Wh)
    if has_proj:
        p = jnp.dot(wp_ref[...], lay, preferred_element_type=jnp.float32)
        p = jnp.maximum(p + bp_ref[...], 0.0)
    else:
        p = lay

    # ---- up: depthwise ConvTranspose2d(k=4, s=2, p=1, groups=C) --------------
    # out[2m+py, 2n+px] = sum of 4 taps w[ky,kx] * p[m+dy, n+dx]; the constant
    # scatter matmuls interleave the 4 phases straight into the lane-flattened
    # (C, H*W) map, so no phase tensor / transpose ever reaches HBM.
    colh = lax.broadcasted_iota(jnp.int32, (1, HWh), 1) % Wh
    wup = wup_ref[...]                                   # (C, 16), k = ky*4 + kx

    def dtap(k, dy, dx):
        return _shifted(p, dy, dx, Wh, colh) * wup[:, k:k + 1]

    ph00 = dtap(5, 0, 0) + dtap(7, 0, -1) + dtap(13, -1, 0) + dtap(15, -1, -1)
    ph01 = dtap(4, 0, 1) + dtap(6, 0, 0) + dtap(12, -1, 1) + dtap(14, -1, 0)
    ph10 = dtap(1, 1, 0) + dtap(3, 1, -1) + dtap(9, 0, 0) + dtap(11, 0, -1)
    ph11 = dtap(0, 1, 1) + dtap(2, 1, 0) + dtap(8, 0, 1) + dtap(10, 0, 0)
    u = (jnp.dot(ph00, scat_ref[0], preferred_element_type=jnp.float32)
         + jnp.dot(ph01, scat_ref[1], preferred_element_type=jnp.float32)
         + jnp.dot(ph10, scat_ref[2], preferred_element_type=jnp.float32)
         + jnp.dot(ph11, scat_ref[3], preferred_element_type=jnp.float32))

    # ---- node: 3x3 conv (pad=1) on cat([x_prev, up]) + folded BN + ReLU -------
    # concat-free: the node weight is pre-split into an x_prev half and an
    # upsampled half; the im2col is 9 in-register shifted views accumulated as
    # 18 small MXU matmuls.
    xprev = xprev_ref[0]                                 # (C, H*W)
    col = lax.broadcasted_iota(jnp.int32, (1, HW), 1) % W
    wnx = wnx_ref[...]                                   # (C, 9*C)
    wnu = wnu_ref[...]                                   # (C, 9*C)
    acc = jnp.zeros((C, HW), jnp.float32)
    t = 0
    for dy in (-1, 0, 1):
        for dx in (-1, 0, 1):
            acc = acc + jnp.dot(wnx[:, t * C:(t + 1) * C],
                                _shifted(xprev, dy, dx, W, col),
                                preferred_element_type=jnp.float32)
            acc = acc + jnp.dot(wnu[:, t * C:(t + 1) * C],
                                _shifted(u, dy, dx, W, col),
                                preferred_element_type=jnp.float32)
            t += 1
    o_ref[0] = jnp.maximum(acc + bnb_ref[...], 0.0)


def _fused_ida_node(x_prev, layer, proj, up_w, node_p):
    """One fused IDAUp node step (NCHW in / NCHW out):
         p   = ReLU(BN(conv1x1(layer)))                [skipped if proj is None]
         u   = depthwise ConvTranspose2d_x2(p)
         out = ReLU(BN(conv3x3(cat([x_prev, u]))))
       The whole chain runs inside one pallas_call, gridded over the batch."""
    B, C, H, W = x_prev.shape
    c_in, Hh, Wh = layer.shape[1:]
    assert (2 * Hh, 2 * Wh) == (H, W), "node inputs are upsampled by exactly 2"
    HW, HWh = H * W, Hh * Wh

    has_proj = proj is not None
    if has_proj:
        wp, bp = proj
    else:
        assert c_in == C
        wp = jnp.zeros((1, 1), jnp.float32)              # dummies (unused)
        bp = jnp.zeros((1, 1), jnp.float32)
    wnx, wnu, bnb = node_p
    scat = jnp.asarray(_phase_scatter(Hh, Wh))           # (4, HWh, HW) constants

    # Contiguous NCHW -> (B, C, H*W) is a free metadata reshape; H*W rides the
    # vector lanes inside the kernel (lane-dense even though C is only 4..16).
    xf = x_prev.reshape(B, C, HW)
    lf = layer.reshape(B, c_in, HWh)

    kernel = functools.partial(_ida_node_kernel, has_proj=has_proj,
                               spatial=(H, W))
    out = pl.pallas_call(
        kernel,
        out_shape=jax.ShapeDtypeStruct((B, C, HW), jnp.float32),
        grid=(B,),
        in_specs=[
            pl.BlockSpec((1, C, HW), lambda b: (b, 0, 0)),
            pl.BlockSpec((1, c_in, HWh), lambda b: (b, 0, 0)),
            pl.BlockSpec(wp.shape, lambda b: (0, 0)),
            pl.BlockSpec(bp.shape, lambda b: (0, 0)),
            pl.BlockSpec(up_w.shape, lambda b: (0, 0)),
            pl.BlockSpec(scat.shape, lambda b: (0, 0, 0)),
            pl.BlockSpec(wnx.shape, lambda b: (0, 0)),
            pl.BlockSpec(wnu.shape, lambda b: (0, 0)),
            pl.BlockSpec(bnb.shape, lambda b: (0, 0)),
        ],
        out_specs=pl.BlockSpec((1, C, HW), lambda b: (b, 0, 0)),
        compiler_params=pltpu.CompilerParams(dimension_semantics=("parallel",)),
    )(xf, lf, wp, bp, up_w, scat, wnx, wnu, bnb)
    # TODO(synk): add spatial tiling (+halo) for realistic DLA resolutions; the
    # fused kernel currently assumes one image's feature maps fit in VMEM.
    return out.reshape(B, C, H, W)


# --------------------------------------------------------------------------
# Parameter construction mirroring IDAUp / DLAUp __init__ (BN folded, eval mode)
# --------------------------------------------------------------------------
# TODO(synk): BatchNorm2d is implemented in eval mode (affine with running stats
# folded into the conv weights / bias); training-mode batch statistics are not
# reproduced.
def _make_bn_fold(key, c):
    k1, k2, k3, k4 = jax.random.split(key, 4)
    gamma = 1.0 + 0.1 * jax.random.normal(k1, (c,), jnp.float32)
    beta = 0.1 * jax.random.normal(k2, (c,), jnp.float32)
    running_mean = 0.1 * jax.random.normal(k3, (c,), jnp.float32)
    running_var = jnp.abs(1.0 + 0.1 * jax.random.normal(k4, (c,), jnp.float32))
    scale = gamma / jnp.sqrt(running_var + BN_EPS)
    bias = beta - running_mean * scale
    return scale, bias


def _fold_proj(w_torch, scale, bias):
    # w_torch: (out_dim, c_in, 1, 1) Conv2d weight; BN scale folded into rows.
    out_dim, c_in = w_torch.shape[:2]
    wp = w_torch.reshape(out_dim, c_in) * scale[:, None]
    return wp, bias.reshape(out_dim, 1)


def _fold_up(w_torch):
    # w_torch: (C, 1, 4, 4) ConvTranspose2d weight (groups=C) -> (C, ky*4+kx).
    c = w_torch.shape[0]
    return w_torch.reshape(c, 16)


def _fold_node(w_torch, scale, bias):
    # w_torch: (out_dim, 2*out_dim, 3, 3); first out_dim input channels = x_prev
    # (torch.cat puts x first).  BN scale folded; split into the two halves and
    # laid out as (out_dim, (ky*3+kx)*out_dim + ci) to match the in-kernel taps.
    out_dim = w_torch.shape[0]
    w = w_torch * scale[:, None, None, None]
    w = jnp.transpose(w, (0, 2, 3, 1))                   # (o, ky, kx, ci)
    wnx = w[..., :out_dim].reshape(out_dim, 9 * out_dim)
    wnu = w[..., out_dim:].reshape(out_dim, 9 * out_dim)
    return wnx, wnu, bias.reshape(out_dim, 1)


def init_ida(key, out_dim, channels, up_factors):
    proj, up = [], []
    for i, c in enumerate(channels):
        kp = jax.random.fold_in(key, 2 * i)
        ku = jax.random.fold_in(key, 2 * i + 1)
        if c == out_dim:
            proj.append(None)                            # Identity
        else:
            w = jax.random.normal(kp, (out_dim, c, 1, 1), jnp.float32) / np.sqrt(c)
            scale, bias = _make_bn_fold(jax.random.fold_in(kp, 7), out_dim)
            proj.append(_fold_proj(w, scale, bias))
        f = int(up_factors[i])
        if f == 1:
            up.append(None)                              # Identity
        else:
            assert f == 2, "DLAUp only produces relative up-factors of 2"
            # TODO(synk): general up factors (>2) not implemented (never hit by DLAUp)
            wup = 0.25 * jax.random.normal(ku, (out_dim, 1, 4, 4), jnp.float32) + 0.25
            up.append(_fold_up(wup))
    nodes = []
    for i in range(1, len(channels)):
        kn = jax.random.fold_in(key, 1000 + i)
        w = jax.random.normal(kn, (out_dim, 2 * out_dim, 3, 3), jnp.float32)
        w = w / np.sqrt(9 * 2 * out_dim)
        scale, bias = _make_bn_fold(jax.random.fold_in(kn, 7), out_dim)
        nodes.append(_fold_node(w, scale, bias))
    return {"proj": proj, "up": up, "node": nodes, "out_dim": out_dim}


def init_dla_up(key, channels, scales):
    channels = list(channels)
    in_channels = list(channels)
    scales = np.array(scales, dtype=np.int64)
    idas = []
    for i in range(len(channels) - 1):
        j = -i - 2
        idas.append(init_ida(jax.random.fold_in(key, i),
                             channels[j],
                             in_channels[j:],
                             (scales[j:] // scales[j]).tolist()))
        scales[j + 1:] = scales[j]
        in_channels[j + 1:] = [channels[j] for _ in channels[j + 1:]]
    return idas


# --------------------------------------------------------------------------
# Forward passes mirroring IDAUp.forward / DLAUp.forward (NCHW end to end)
# --------------------------------------------------------------------------
def ida_forward(params, inputs):
    layers = list(inputs)
    # In DLAUp the first layer of every IDA stage is always Identity/Identity.
    assert params["proj"][0] is None and params["up"][0] is None
    x = layers[0]
    y = []
    for i in range(1, len(layers)):
        assert params["up"][i] is not None, "node inputs are always upsampled x2"
        x = _fused_ida_node(x, layers[i], params["proj"][i], params["up"][i],
                            params["node"][i - 1])
        y.append(x)
    return x, y


def dla_up_forward(idas, inputs_nchw):
    layers = list(inputs_nchw)                           # stays NCHW throughout
    assert len(layers) > 1
    x = None
    for i in range(len(layers) - 1):
        x, y = ida_forward(idas[i], layers[-i - 2:])
        layers[-i - 1:] = y
    return x


# --------------------------------------------------------------------------
if __name__ == "__main__":
    key = jax.random.PRNGKey(0)
    k_in, k_par = jax.random.split(key)

    channels = (4, 8, 16)
    scales = (1, 2, 4)
    B, H, W = 2, 16, 16

    # Multi-scale feature pyramid (NCHW, like the PyTorch module's input list).
    inputs = []
    for lvl, c in enumerate(channels):
        kk = jax.random.fold_in(k_in, lvl)
        inputs.append(jax.random.normal(kk, (B, c, H >> lvl, W >> lvl), jnp.float32))

    params = init_dla_up(k_par, channels, scales)
    out = dla_up_forward(params, inputs)
    out = jax.block_until_ready(out)

    assert out.shape == (B, channels[0], H, W), out.shape
    assert bool(jnp.isfinite(out).all())
    print("KERNEL_OK")
</pallas_src>

<mosaic_0001>
module attributes {stable_mosaic.version = 11 : i64} {
  func.func @_ida_node_kernel(%arg0: i32, %arg1: memref<1x8x64xf32, #tpu.memory_space<vmem>>, %arg2: memref<1x16x16xf32, #tpu.memory_space<vmem>>, %arg3: memref<8x16xf32, #tpu.memory_space<vmem>>, %arg4: memref<8x1xf32, #tpu.memory_space<vmem>>, %arg5: memref<8x16xf32, #tpu.memory_space<vmem>>, %arg6: memref<4x16x64xf32, #tpu.memory_space<vmem>>, %arg7: memref<8x72xf32, #tpu.memory_space<vmem>>, %arg8: memref<8x72xf32, #tpu.memory_space<vmem>>, %arg9: memref<8x1xf32, #tpu.memory_space<vmem>>, %arg10: memref<1x8x64xf32, #tpu.memory_space<vmem>>) attributes {dimension_semantics = [#tpu.dimension_semantics<parallel>], iteration_bounds = array<i64: 2>, scalar_prefetch = 0 : i64, scratch_operands = 0 : i64, tpu.core_type = #tpu.core_type<tc>, window_params = [{transform_indices = @transform_0, window_bounds = array<i64: 1, 8, 64>}, {transform_indices = @transform_1, window_bounds = array<i64: 1, 16, 16>}, {pipeline_mode = #tpu.pipeline_mode<synchronous>, transform_indices = @transform_2, window_bounds = array<i64: 8, 16>}, {pipeline_mode = #tpu.pipeline_mode<synchronous>, transform_indices = @transform_3, window_bounds = array<i64: 8, 1>}, {pipeline_mode = #tpu.pipeline_mode<synchronous>, transform_indices = @transform_4, window_bounds = array<i64: 8, 16>}, {pipeline_mode = #tpu.pipeline_mode<synchronous>, transform_indices = @transform_5, window_bounds = array<i64: 4, 16, 64>}, {pipeline_mode = #tpu.pipeline_mode<synchronous>, transform_indices = @transform_6, window_bounds = array<i64: 8, 72>}, {pipeline_mode = #tpu.pipeline_mode<synchronous>, transform_indices = @transform_7, window_bounds = array<i64: 8, 72>}, {pipeline_mode = #tpu.pipeline_mode<synchronous>, transform_indices = @transform_8, window_bounds = array<i64: 8, 1>}, {transform_indices = @transform_9, window_bounds = array<i64: 1, 8, 64>}]} {
    %c0 = arith.constant 0 : index
    %c0_0 = arith.constant 0 : index
    %c0_1 = arith.constant 0 : index
    %0 = vector.load %arg2[%c0, %c0_0, %c0_1] : memref<1x16x16xf32, #tpu.memory_space<vmem>>, vector<1x16x16xf32>
    %1 = vector.shape_cast %0 : vector<1x16x16xf32> to vector<16x16xf32>
    %c0_2 = arith.constant 0 : index
    %c0_3 = arith.constant 0 : index
    %2 = vector.load %arg3[%c0_2, %c0_3] : memref<8x16xf32, #tpu.memory_space<vmem>>, vector<8x16xf32>
    %cst = arith.constant dense<0.000000e+00> : vector<8x16xf32>
    %3 = tpu.matmul %2, %1, %cst {dimension_numbers = #tpu.dot_dimension_numbers<[1], [0], [0], [1], [0, 0, 1, 1], [], []>} : vector<8x16xf32>, vector<16x16xf32>, vector<8x16xf32> -> vector<8x16xf32>
    %c0_4 = arith.constant 0 : index
    %c0_5 = arith.constant 0 : index
    %4 = vector.load %arg4[%c0_4, %c0_5] : memref<8x1xf32, #tpu.memory_space<vmem>>, vector<8x1xf32>
    %5 = vector.broadcast %4 : vector<8x1xf32> to vector<8x16xf32>
    %6 = arith.addf %3, %5 : vector<8x16xf32>
    %cst_6 = arith.constant 0.000000e+00 : f32
    %7 = vector.broadcast %cst_6 : f32 to vector<8x16xf32>
    %8 = arith.maximumf %6, %7 : vector<8x16xf32>
    %9 = tpu.iota {dimensions = array<i32: 1>} : vector<1x16xi32>
    %c4_i32 = arith.constant 4 : i32
    %c0_i32 = arith.constant 0 : i32
    %10 = arith.cmpi eq, %c4_i32, %c0_i32 : i32
    %c1_i32 = arith.constant 1 : i32
    %11 = arith.select %10, %c1_i32, %c4_i32 : i32
    %12 = vector.broadcast %11 : i32 to vector<1x16xi32>
    %13 = arith.remsi %9, %12 : vector<1x16xi32>
    %c0_i32_7 = arith.constant 0 : i32
    %14 = vector.broadcast %c0_i32_7 : i32 to vector<1x16xi32>
    %15 = arith.cmpi ne, %13, %14 : vector<1x16xi32>
    %c0_i32_8 = arith.constant 0 : i32
    %16 = vector.broadcast %c0_i32_8 : i32 to vector<1x16xi32>
    %17 = arith.cmpi slt, %13, %16 : vector<1x16xi32>
    %c0_i32_9 = arith.constant 0 : i32
    %18 = arith.cmpi slt, %11, %c0_i32_9 : i32
    %19 = vector.broadcast %18 : i1 to vector<1x16xi1>
    %20 = vector.broadcast %19 : vector<1x16xi1> to vector<1x16xi1>
    %21 = arith.xori %17, %20 : vector<1x16xi1>
    %22 = arith.andi %21, %15 : vector<1x16xi1>
    %23 = vector.broadcast %11 : i32 to vector<1x16xi32>
    %24 = arith.addi %13, %23 : vector<1x16xi32>
    %25 = arith.select %22, %24, %13 : vector<1x16xi1>, vector<1x16xi32>
    %c0_10 = arith.constant 0 : index
    %c0_11 = arith.constant 0 : index
    %26 = vector.load %arg5[%c0_10, %c0_11] : memref<8x16xf32, #tpu.memory_space<vmem>>, vector<8x16xf32>
    %27 = vector.extract_strided_slice %26 {offsets = [0, 5], sizes = [8, 1], strides = [1, 1]} : vector<8x16xf32> to vector<8x1xf32>
    %28 = vector.broadcast %27 : vector<8x1xf32> to vector<8x16xf32>
    %29 = arith.mulf %8, %28 : vector<8x16xf32>
    %cst_12 = arith.constant 0.000000e+00 : f32
    %30 = vector.broadcast %cst_12 : f32 to vector<8x5xf32>
    %31 = tpu.concatenate %30, %8, %30 in 1 : vector<8x5xf32>, vector<8x16xf32>, vector<8x5xf32> -> vector<8x26xf32>
    %32 = vector.extract_strided_slice %31 {offsets = [0, 4], sizes = [8, 16], strides = [1, 1]} : vector<8x26xf32> to vector<8x16xf32>
    %c0_i32_13 = arith.constant 0 : i32
    %33 = vector.broadcast %c0_i32_13 : i32 to vector<1x16xi32>
    %34 = arith.cmpi sgt, %25, %33 : vector<1x16xi32>
    %cst_14 = arith.constant 0.000000e+00 : f32
    %35 = vector.shape_cast %34 : vector<1x16xi1> to vector<1x16xi1>
    %36 = vector.broadcast %35 : vector<1x16xi1> to vector<8x16xi1>
    %37 = vector.broadcast %cst_14 : f32 to vector<8x16xf32>
    %38 = arith.select %36, %32, %37 : vector<8x16xi1>, vector<8x16xf32>
    %39 = vector.extract_strided_slice %26 {offsets = [0, 7], sizes = [8, 1], strides = [1, 1]} : vector<8x16xf32> to vector<8x1xf32>
    %40 = vector.broadcast %39 : vector<8x1xf32> to vector<8x16xf32>
    %41 = arith.mulf %38, %40 : vector<8x16xf32>
    %42 = arith.addf %29, %41 : vector<8x16xf32>
    %cst_15 = arith.constant 0.000000e+00 : f32
    %43 = vector.broadcast %cst_15 : f32 to vector<8x5xf32>
    %44 = tpu.concatenate %43, %8, %43 in 1 : vector<8x5xf32>, vector<8x16xf32>, vector<8x5xf32> -> vector<8x26xf32>
    %45 = vector.extract_strided_slice %44 {offsets = [0, 1], sizes = [8, 16], strides = [1, 1]} : vector<8x26xf32> to vector<8x16xf32>
    %46 = vector.extract_strided_slice %26 {offsets = [0, 13], sizes = [8, 1], strides = [1, 1]} : vector<8x16xf32> to vector<8x1xf32>
    %47 = vector.broadcast %46 : vector<8x1xf32> to vector<8x16xf32>
    %48 = arith.mulf %45, %47 : vector<8x16xf32>
    %49 = arith.addf %42, %48 : vector<8x16xf32>
    %cst_16 = arith.constant 0.000000e+00 : f32
    %50 = vector.broadcast %cst_16 : f32 to vector<8x5xf32>
    %51 = tpu.concatenate %50, %8, %50 in 1 : vector<8x5xf32>, vector<8x16xf32>, vector<8x5xf32> -> vector<8x26xf32>
    %52 = vector.extract_strided_slice %51 {offsets = [0, 0], sizes = [8, 16], strides = [1, 1]} : vector<8x26xf32> to vector<8x16xf32>
    %c0_i32_17 = arith.constant 0 : i32
    %53 = vector.broadcast %c0_i32_17 : i32 to vector<1x16xi32>
    %54 = arith.cmpi sgt, %25, %53 : vector<1x16xi32>
    %cst_18 = arith.constant 0.000000e+00 : f32
    %55 = vector.shape_cast %54 : vector<1x16xi1> to vector<1x16xi1>
    %56 = vector.broadcast %55 : vector<1x16xi1> to vector<8x16xi1>
    %57 = vector.broadcast %cst_18 : f32 to vector<8x16xf32>
    %58 = arith.select %56, %52, %57 : vector<8x16xi1>, vector<8x16xf32>
    %59 = vector.extract_strided_slice %26 {offsets = [0, 15], sizes = [8, 1], strides = [1, 1]} : vector<8x16xf32> to vector<8x1xf32>
    %60 = vector.broadcast %59 : vector<8x1xf32> to vector<8x16xf32>
    %61 = arith.mulf %58, %60 : vector<8x16xf32>
    %62 = arith.addf %49, %61 : vector<8x16xf32>
    %cst_19 = arith.constant 0.000000e+00 : f32
    %63 = vector.broadcast %cst_19 : f32 to vector<8x5xf32>
    %64 = tpu.concatenate %63, %8, %63 in 1 : vector<8x5xf32>, vector<8x16xf32>, vector<8x5xf32> -> vector<8x26xf32>
    %65 = vector.extract_strided_slice %64 {offsets = [0, 6], sizes = [8, 16], strides = [1, 1]} : vector<8x26xf32> to vector<8x16xf32>
    %c3_i32 = arith.constant 3 : i32
    %66 = vector.broadcast %c3_i32 : i32 to vector<1x16xi32>
    %67 = arith.cmpi slt, %25, %66 : vector<1x16xi32>
    %cst_20 = arith.constant 0.000000e+00 : f32
    %68 = vector.shape_cast %67 : vector<1x16xi1> to vector<1x16xi1>
    %69 = vector.broadcast %68 : vector<1x16xi1> to vector<8x16xi1>
    %70 = vector.broadcast %cst_20 : f32 to vector<8x16xf32>
    %71 = arith.select %69, %65, %70 : vector<8x16xi1>, vector<8x16xf32>
    %72 = vector.extract_strided_slice %26 {offsets = [0, 4], sizes = [8, 1], strides = [1, 1]} : vector<8x16xf32> to vector<8x1xf32>
    %73 = vector.broadcast %72 : vector<8x1xf32> to vector<8x16xf32>
    %74 = arith.mulf %71, %73 : vector<8x16xf32>
    %75 = vector.extract_strided_slice %26 {offsets = [0, 6], sizes = [8, 1], strides = [1, 1]} : vector<8x16xf32> to vector<8x1xf32>
    %76 = vector.broadcast %75 : vector<8x1xf32> to vector<8x16xf32>
    %77 = arith.mulf %8, %76 : vector<8x16xf32>
    %78 = arith.addf %74, %77 : vector<8x16xf32>
    %cst_21 = arith.constant 0.000000e+00 : f32
    %79 = vector.broadcast %cst_21 : f32 to vector<8x5xf32>
    %80 = tpu.concatenate %79, %8, %79 in 1 : vector<8x5xf32>, vector<8x16xf32>, vector<8x5xf32> -> vector<8x26xf32>
    %81 = vector.extract_strided_slice %80 {offsets = [0, 2], sizes = [8, 16], strides = [1, 1]} : vector<8x26xf32> to vector<8x16xf32>
    %c3_i32_22 = arith.constant 3 : i32
    %82 = vector.broadcast %c3_i32_22 : i32 to vector<1x16xi32>
    %83 = arith.cmpi slt, %25, %82 : vector<1x16xi32>
    %cst_23 = arith.constant 0.000000e+00 : f32
    %84 = vector.shape_cast %83 : vector<1x16xi1> to vector<1x16xi1>
    %85 = vector.broadcast %84 : vector<1x16xi1> to vector<8x16xi1>
    %86 = vector.broadcast %cst_23 : f32 to vector<8x16xf32>
    %87 = arith.select %85, %81, %86 : vector<8x16xi1>, vector<8x16xf32>
    %88 = vector.extract_strided_slice %26 {offsets = [0, 12], sizes = [8, 1], strides = [1, 1]} : vector<8x16xf32> to vector<8x1xf32>
    %89 = vector.broadcast %88 : vector<8x1xf32> to vector<8x16xf32>
    %90 = arith.mulf %87, %89 : vector<8x16xf32>
    %91 = arith.addf %78, %90 : vector<8x16xf32>
    %cst_24 = arith.constant 0.000000e+00 : f32
    %92 = vector.broadcast %cst_24 : f32 to vector<8x5xf32>
    %93 = tpu.concatenate %92, %8, %92 in 1 : vector<8x5xf32>, vector<8x16xf32>, vector<8x5xf32> -> vector<8x26xf32>
    %94 = vector.extract_strided_slice %93 {offsets = [0, 1], sizes = [8, 16], strides = [1, 1]} : vector<8x26xf32> to vector<8x16xf32>
    %95 = vector.extract_strided_slice %26 {offsets = [0, 14], sizes = [8, 1], strides = [1, 1]} : vector<8x16xf32> to vector<8x1xf32>
    %96 = vector.broadcast %95 : vector<8x1xf32> to vector<8x16xf32>
    %97 = arith.mulf %94, %96 : vector<8x16xf32>
    %98 = arith.addf %91, %97 : vector<8x16xf32>
    %cst_25 = arith.constant 0.000000e+00 : f32
    %99 = vector.broadcast %cst_25 : f32 to vector<8x5xf32>
    %100 = tpu.concatenate %99, %8, %99 in 1 : vector<8x5xf32>, vector<8x16xf32>, vector<8x5xf32> -> vector<8x26xf32>
    %101 = vector.extract_strided_slice %100 {offsets = [0, 9], sizes = [8, 16], strides = [1, 1]} : vector<8x26xf32> to vector<8x16xf32>
    %102 = vector.extract_strided_slice %26 {offsets = [0, 1], sizes = [8, 1], strides = [1, 1]} : vector<8x16xf32> to vector<8x1xf32>
    %103 = vector.broadcast %102 : vector<8x1xf32> to vector<8x16xf32>
    %104 = arith.mulf %101, %103 : vector<8x16xf32>
    %cst_26 = arith.constant 0.000000e+00 : f32
    %105 = vector.broadcast %cst_26 : f32 to vector<8x5xf32>
    %106 = tpu.concatenate %105, %8, %105 in 1 : vector<8x5xf32>, vector<8x16xf32>, vector<8x5xf32> -> vector<8x26xf32>
    %107 = vector.extract_strided_slice %106 {offsets = [0, 8], sizes = [8, 16], strides = [1, 1]} : vector<8x26xf32> to vector<8x16xf32>
    %c0_i32_27 = arith.constant 0 : i32
    %108 = vector.broadcast %c0_i32_27 : i32 to vector<1x16xi32>
    %109 = arith.cmpi sgt, %25, %108 : vector<1x16xi32>
    %cst_28 = arith.constant 0.000000e+00 : f32
    %110 = vector.shape_cast %109 : vector<1x16xi1> to vector<1x16xi1>
    %111 = vector.broadcast %110 : vector<1x16xi1> to vector<8x16xi1>
    %112 = vector.broadcast %cst_28 : f32 to vector<8x16xf32>
    %113 = arith.select %111, %107, %112 : vector<8x16xi1>, vector<8x16xf32>
    %114 = vector.extract_strided_slice %26 {offsets = [0, 3], sizes = [8, 1], strides = [1, 1]} : vector<8x16xf32> to vector<8x1xf32>
    %115 = vector.broadcast %114 : vector<8x1xf32> to vector<8x16xf32>
    %116 = arith.mulf %113, %115 : vector<8x16xf32>
    %117 = arith.addf %104, %116 : vector<8x16xf32>
    %118 = vector.extract_strided_slice %26 {offsets = [0, 9], sizes = [8, 1], strides = [1, 1]} : vector<8x16xf32> to vector<8x1xf32>
    %119 = vector.broadcast %118 : vector<8x1xf32> to vector<8x16xf32>
    %120 = arith.mulf %8, %119 : vector<8x16xf32>
    %121 = arith.addf %117, %120 : vector<8x16xf32>
    %cst_29 = arith.constant 0.000000e+00 : f32
    %122 = vector.broadcast %cst_29 : f32 to vector<8x5xf32>
    %123 = tpu.concatenate %122, %8, %122 in 1 : vector<8x5xf32>, vector<8x16xf32>, vector<8x5xf32> -> vector<8x26xf32>
    %124 = vector.extract_strided_slice %123 {offsets = [0, 4], sizes = [8, 16], strides = [1, 1]} : vector<8x26xf32> to vector<8x16xf32>
    %c0_i32_30 = arith.constant 0 : i32
    %125 = vector.broadcast %c0_i32_30 : i32 to vector<1x16xi32>
    %126 = arith.cmpi sgt, %25, %125 : vector<1x16xi32>
    %cst_31 = arith.constant 0.000000e+00 : f32
    %127 = vector.shape_cast %126 : vector<1x16xi1> to vector<1x16xi1>
    %128 = vector.broadcast %127 : vector<1x16xi1> to vector<8x16xi1>
    %129 = vector.broadcast %cst_31 : f32 to vector<8x16xf32>
    %130 = arith.select %128, %124, %129 : vector<8x16xi1>, vector<8x16xf32>
    %131 = vector.extract_strided_slice %26 {offsets = [0, 11], sizes = [8, 1], strides = [1, 1]} : vector<8x16xf32> to vector<8x1xf32>
    %132 = vector.broadcast %131 : vector<8x1xf32> to vector<8x16xf32>
    %133 = arith.mulf %130, %132 : vector<8x16xf32>
    %134 = arith.addf %121, %133 : vector<8x16xf32>
    %cst_32 = arith.constant 0.000000e+00 : f32
    %135 = vector.broadcast %cst_32 : f32 to vector<8x5xf32>
    %136 = tpu.concatenate %135, %8, %135 in 1 : vector<8x5xf32>, vector<8x16xf32>, vector<8x5xf32> -> vector<8x26xf32>
    %137 = vector.extract_strided_slice %136 {offsets = [0, 10], sizes = [8, 16], strides = [1, 1]} : vector<8x26xf32> to vector<8x16xf32>
    %c3_i32_33 = arith.constant 3 : i32
    %138 = vector.broadcast %c3_i32_33 : i32 to vector<1x16xi32>
    %139 = arith.cmpi slt, %25, %138 : vector<1x16xi32>
    %cst_34 = arith.constant 0.000000e+00 : f32
    %140 = vector.shape_cast %139 : vector<1x16xi1> to vector<1x16xi1>
    %141 = vector.broadcast %140 : vector<1x16xi1> to vector<8x16xi1>
    %142 = vector.broadcast %cst_34 : f32 to vector<8x16xf32>
    %143 = arith.select %141, %137, %142 : vector<8x16xi1>, vector<8x16xf32>
    %144 = vector.extract_strided_slice %26 {offsets = [0, 0], sizes = [8, 1], strides = [1, 1]} : vector<8x16xf32> to vector<8x1xf32>
    %145 = vector.broadcast %144 : vector<8x1xf32> to vector<8x16xf32>
    %146 = arith.mulf %143, %145 : vector<8x16xf32>
    %cst_35 = arith.constant 0.000000e+00 : f32
    %147 = vector.broadcast %cst_35 : f32 to vector<8x5xf32>
    %148 = tpu.concatenate %147, %8, %147 in 1 : vector<8x5xf32>, vector<8x16xf32>, vector<8x5xf32> -> vector<8x26xf32>
    %149 = vector.extract_strided_slice %148 {offsets = [0, 9], sizes = [8, 16], strides = [1, 1]} : vector<8x26xf32> to vector<8x16xf32>
    %150 = vector.extract_strided_slice %26 {offsets = [0, 2], sizes = [8, 1], strides = [1, 1]} : vector<8x16xf32> to vector<8x1xf32>
    %151 = vector.broadcast %150 : vector<8x1xf32> to vector<8x16xf32>
    %152 = arith.mulf %149, %151 : vector<8x16xf32>
    %153 = arith.addf %146, %152 : vector<8x16xf32>
    %cst_36 = arith.constant 0.000000e+00 : f32
    %154 = vector.broadcast %cst_36 : f32 to vector<8x5xf32>
    %155 = tpu.concatenate %154, %8, %154 in 1 : vector<8x5xf32>, vector<8x16xf32>, vector<8x5xf32> -> vector<8x26xf32>
    %156 = vector.extract_strided_slice %155 {offsets = [0, 6], sizes = [8, 16], strides = [1, 1]} : vector<8x26xf32> to vector<8x16xf32>
    %c3_i32_37 = arith.constant 3 : i32
    %157 = vector.broadcast %c3_i32_37 : i32 to vector<1x16xi32>
    %158 = arith.cmpi slt, %25, %157 : vector<1x16xi32>
    %cst_38 = arith.constant 0.000000e+00 : f32
    %159 = vector.shape_cast %158 : vector<1x16xi1> to vector<1x16xi1>
    %160 = vector.broadcast %159 : vector<1x16xi1> to vector<8x16xi1>
    %161 = vector.broadcast %cst_38 : f32 to vector<8x16xf32>
    %162 = arith.select %160, %156, %161 : vector<8x16xi1>, vector<8x16xf32>
    %163 = vector.extract_strided_slice %26 {offsets = [0, 8], sizes = [8, 1], strides = [1, 1]} : vector<8x16xf32> to vector<8x1xf32>
    %164 = vector.broadcast %163 : vector<8x1xf32> to vector<8x16xf32>
    %165 = arith.mulf %162, %164 : vector<8x16xf32>
    %166 = arith.addf %153, %165 : vector<8x16xf32>
    %167 = vector.extract_strided_slice %26 {offsets = [0, 10], sizes = [8, 1], strides = [1, 1]} : vector<8x16xf32> to vector<8x1xf32>
    %168 = vector.broadcast %167 : vector<8x1xf32> to vector<8x16xf32>
    %169 = arith.mulf %8, %168 : vector<8x16xf32>
    %170 = arith.addf %166, %169 : vector<8x16xf32>
    %c0_39 = arith.constant 0 : index
    %c0_40 = arith.constant 0 : index
    %c0_41 = arith.constant 0 : index
    %171 = vector.load %arg6[%c0_39, %c0_40, %c0_41] : memref<4x16x64xf32, #tpu.memory_space<vmem>>, vector<1x16x64xf32>
    %172 = vector.shape_cast %171 : vector<1x16x64xf32> to vector<16x64xf32>
    %cst_42 = arith.constant dense<0.000000e+00> : vector<8x64xf32>
    %173 = tpu.matmul %62, %172, %cst_42 {dimension_numbers = #tpu.dot_dimension_numbers<[1], [0], [0], [1], [0, 0, 1, 1], [], []>} : vector<8x16xf32>, vector<16x64xf32>, vector<8x64xf32> -> vector<8x64xf32>
    %c1 = arith.constant 1 : index
    %c0_43 = arith.constant 0 : index
    %c0_44 = arith.constant 0 : index
    %174 = vector.load %arg6[%c1, %c0_43, %c0_44] : memref<4x16x64xf32, #tpu.memory_space<vmem>>, vector<1x16x64xf32>
    %175 = vector.shape_cast %174 : vector<1x16x64xf32> to vector<16x64xf32>
    %cst_45 = arith.constant dense<0.000000e+00> : vector<8x64xf32>
    %176 = tpu.matmul %98, %175, %cst_45 {dimension_numbers = #tpu.dot_dimension_numbers<[1], [0], [0], [1], [0, 0, 1, 1], [], []>} : vector<8x16xf32>, vector<16x64xf32>, vector<8x64xf32> -> vector<8x64xf32>
    %177 = arith.addf %173, %176 : vector<8x64xf32>
    %c2 = arith.constant 2 : index
    %c0_46 = arith.constant 0 : index
    %c0_47 = arith.constant 0 : index
    %178 = vector.load %arg6[%c2, %c0_46, %c0_47] : memref<4x16x64xf32, #tpu.memory_space<vmem>>, vector<1x16x64xf32>
    %179 = vector.shape_cast %178 : vector<1x16x64xf32> to vector<16x64xf32>
    %cst_48 = arith.constant dense<0.000000e+00> : vector<8x64xf32>
    %180 = tpu.matmul %134, %179, %cst_48 {dimension_numbers = #tpu.dot_dimension_numbers<[1], [0], [0], [1], [0, 0, 1, 1], [], []>} : vector<8x16xf32>, vector<16x64xf32>, vector<8x64xf32> -> vector<8x64xf32>
    %181 = arith.addf %177, %180 : vector<8x64xf32>
    %c3 = arith.constant 3 : index
    %c0_49 = arith.constant 0 : index
    %c0_50 = arith.constant 0 : index
    %182 = vector.load %arg6[%c3, %c0_49, %c0_50] : memref<4x16x64xf32, #tpu.memory_space<vmem>>, vector<1x16x64xf32>
    %183 = vector.shape_cast %182 : vector<1x16x64xf32> to vector<16x64xf32>
    %cst_51 = arith.constant dense<0.000000e+00> : vector<8x64xf32>
    %184 = tpu.matmul %170, %183, %cst_51 {dimension_numbers = #tpu.dot_dimension_numbers<[1], [0], [0], [1], [0, 0, 1, 1], [], []>} : vector<8x16xf32>, vector<16x64xf32>, vector<8x64xf32> -> vector<8x64xf32>
    %185 = arith.addf %181, %184 : vector<8x64xf32>
    %c0_52 = arith.constant 0 : index
    %c0_53 = arith.constant 0 : index
    %c0_54 = arith.constant 0 : index
    %186 = vector.load %arg1[%c0_52, %c0_53, %c0_54] : memref<1x8x64xf32, #tpu.memory_space<vmem>>, vector<1x8x64xf32>
    %187 = vector.shape_cast %186 : vector<1x8x64xf32> to vector<8x64xf32>
    %188 = tpu.iota {dimensions = array<i32: 1>} : vector<1x64xi32>
    %c8_i32 = arith.constant 8 : i32
    %c0_i32_55 = arith.constant 0 : i32
    %189 = arith.cmpi eq, %c8_i32, %c0_i32_55 : i32
    %c1_i32_56 = arith.constant 1 : i32
    %190 = arith.select %189, %c1_i32_56, %c8_i32 : i32
    %191 = vector.broadcast %190 : i32 to vector<1x64xi32>
    %192 = arith.remsi %188, %191 : vector<1x64xi32>
    %c0_i32_57 = arith.constant 0 : i32
    %193 = vector.broadcast %c0_i32_57 : i32 to vector<1x64xi32>
    %194 = arith.cmpi ne, %192, %193 : vector<1x64xi32>
    %c0_i32_58 = arith.constant 0 : i32
    %195 = vector.broadcast %c0_i32_58 : i32 to vector<1x64xi32>
    %196 = arith.cmpi slt, %192, %195 : vector<1x64xi32>
    %c0_i32_59 = arith.constant 0 : i32
    %197 = arith.cmpi slt, %190, %c0_i32_59 : i32
    %198 = vector.broadcast %197 : i1 to vector<1x64xi1>
    %199 = vector.broadcast %198 : vector<1x64xi1> to vector<1x64xi1>
    %200 = arith.xori %196, %199 : vector<1x64xi1>
    %201 = arith.andi %200, %194 : vector<1x64xi1>
    %202 = vector.broadcast %190 : i32 to vector<1x64xi32>
    %203 = arith.addi %192, %202 : vector<1x64xi32>
    %204 = arith.select %201, %203, %192 : vector<1x64xi1>, vector<1x64xi32>
    %c0_60 = arith.constant 0 : index
    %c0_61 = arith.constant 0 : index
    %205 = vector.load %arg7[%c0_60, %c0_61] : memref<8x72xf32, #tpu.memory_space<vmem>>, vector<8x72xf32>
    %c0_62 = arith.constant 0 : index
    %c0_63 = arith.constant 0 : index
    %206 = vector.load %arg8[%c0_62, %c0_63] : memref<8x72xf32, #tpu.memory_space<vmem>>, vector<8x72xf32>
    %cst_64 = arith.constant 0.000000e+00 : f32
    %207 = vector.broadcast %cst_64 : f32 to vector<8x64xf32>
    %208 = vector.extract_strided_slice %205 {offsets = [0, 0], sizes = [8, 8], strides = [1, 1]} : vector<8x72xf32> to vector<8x8xf32>
    %cst_65 = arith.constant 0.000000e+00 : f32
    %209 = vector.broadcast %cst_65 : f32 to vector<8x9xf32>
    %210 = tpu.concatenate %209, %187, %209 in 1 : vector<8x9xf32>, vector<8x64xf32>, vector<8x9xf32> -> vector<8x82xf32>
    %211 = vector.extract_strided_slice %210 {offsets = [0, 0], sizes = [8, 64], strides = [1, 1]} : vector<8x82xf32> to vector<8x64xf32>
    %c0_i32_66 = arith.constant 0 : i32
    %212 = vector.broadcast %c0_i32_66 : i32 to vector<1x64xi32>
    %213 = arith.cmpi sgt, %204, %212 : vector<1x64xi32>
    %cst_67 = arith.constant 0.000000e+00 : f32
    %214 = vector.shape_cast %213 : vector<1x64xi1> to vector<1x64xi1>
    %215 = vector.broadcast %214 : vector<1x64xi1> to vector<8x64xi1>
    %216 = vector.broadcast %cst_67 : f32 to vector<8x64xf32>
    %217 = arith.select %215, %211, %216 : vector<8x64xi1>, vector<8x64xf32>
    %cst_68 = arith.constant dense<0.000000e+00> : vector<8x64xf32>
    %218 = tpu.matmul %208, %217, %cst_68 {dimension_numbers = #tpu.dot_dimension_numbers<[1], [0], [0], [1], [0, 0, 1, 1], [], []>} : vector<8x8xf32>, vector<8x64xf32>, vector<8x64xf32> -> vector<8x64xf32>
    %219 = arith.addf %207, %218 : vector<8x64xf32>
    %220 = vector.extract_strided_slice %206 {offsets = [0, 0], sizes = [8, 8], strides = [1, 1]} : vector<8x72xf32> to vector<8x8xf32>
    %cst_69 = arith.constant 0.000000e+00 : f32
    %221 = vector.broadcast %cst_69 : f32 to vector<8x9xf32>
    %222 = tpu.concatenate %221, %185, %221 in 1 : vector<8x9xf32>, vector<8x64xf32>, vector<8x9xf32> -> vector<8x82xf32>
    %223 = vector.extract_strided_slice %222 {offsets = [0, 0], sizes = [8, 64], strides = [1, 1]} : vector<8x82xf32> to vector<8x64xf32>
    %c0_i32_70 = arith.constant 0 : i32
    %224 = vector.broadcast %c0_i32_70 : i32 to vector<1x64xi32>
    %225 = arith.cmpi sgt, %204, %224 : vector<1x64xi32>
    %cst_71 = arith.constant 0.000000e+00 : f32
    %226 = vector.shape_cast %225 : vector<1x64xi1> to vector<1x64xi1>
    %227 = vector.broadcast %226 : vector<1x64xi1> to vector<8x64xi1>
    %228 = vector.broadcast %cst_71 : f32 to vector<8x64xf32>
    %229 = arith.select %227, %223, %228 : vector<8x64xi1>, vector<8x64xf32>
    %cst_72 = arith.constant dense<0.000000e+00> : vector<8x64xf32>
    %230 = tpu.matmul %220, %229, %cst_72 {dimension_numbers = #tpu.dot_dimension_numbers<[1], [0], [0], [1], [0, 0, 1, 1], [], []>} : vector<8x8xf32>, vector<8x64xf32>, vector<8x64xf32> -> vector<8x64xf32>
    %231 = arith.addf %219, %230 : vector<8x64xf32>
    %232 = vector.extract_strided_slice %205 {offsets = [0, 8], sizes = [8, 8], strides = [1, 1]} : vector<8x72xf32> to vector<8x8xf32>
    %cst_73 = arith.constant 0.000000e+00 : f32
    %233 = vector.broadcast %cst_73 : f32 to vector<8x9xf32>
    %234 = tpu.concatenate %233, %187, %233 in 1 : vector<8x9xf32>, vector<8x64xf32>, vector<8x9xf32> -> vector<8x82xf32>
    %235 = vector.extract_strided_slice %234 {offsets = [0, 1], sizes = [8, 64], strides = [1, 1]} : vector<8x82xf32> to vector<8x64xf32>
    %cst_74 = arith.constant dense<0.000000e+00> : vector<8x64xf32>
    %236 = tpu.matmul %232, %235, %cst_74 {dimension_numbers = #tpu.dot_dimension_numbers<[1], [0], [0], [1], [0, 0, 1, 1], [], []>} : vector<8x8xf32>, vector<8x64xf32>, vector<8x64xf32> -> vector<8x64xf32>
    %237 = arith.addf %231, %236 : vector<8x64xf32>
    %238 = vector.extract_strided_slice %206 {offsets = [0, 8], sizes = [8, 8], strides = [1, 1]} : vector<8x72xf32> to vector<8x8xf32>
    %cst_75 = arith.constant 0.000000e+00 : f32
    %239 = vector.broadcast %cst_75 : f32 to vector<8x9xf32>
    %240 = tpu.concatenate %239, %185, %239 in 1 : vector<8x9xf32>, vector<8x64xf32>, vector<8x9xf32> -> vector<8x82xf32>
    %241 = vector.extract_strided_slice %240 {offsets = [0, 1], sizes = [8, 64], strides = [1, 1]} : vector<8x82xf32> to vector<8x64xf32>
    %cst_76 = arith.constant dense<0.000000e+00> : vector<8x64xf32>
    %242 = tpu.matmul %238, %241, %cst_76 {dimension_numbers = #tpu.dot_dimension_numbers<[1], [0], [0], [1], [0, 0, 1, 1], [], []>} : vector<8x8xf32>, vector<8x64xf32>, vector<8x64xf32> -> vector<8x64xf32>
    %243 = arith.addf %237, %242 : vector<8x64xf32>
    %244 = vector.extract_strided_slice %205 {offsets = [0, 16], sizes = [8, 8], strides = [1, 1]} : vector<8x72xf32> to vector<8x8xf32>
    %cst_77 = arith.constant 0.000000e+00 : f32
    %245 = vector.broadcast %cst_77 : f32 to vector<8x9xf32>
    %246 = tpu.concatenate %245, %187, %245 in 1 : vector<8x9xf32>, vector<8x64xf32>, vector<8x9xf32> -> vector<8x82xf32>
    %247 = vector.extract_strided_slice %246 {offsets = [0, 2], sizes = [8, 64], strides = [1, 1]} : vector<8x82xf32> to vector<8x64xf32>
    %c7_i32 = arith.constant 7 : i32
    %248 = vector.broadcast %c7_i32 : i32 to vector<1x64xi32>
    %249 = arith.cmpi slt, %204, %248 : vector<1x64xi32>
    %cst_78 = arith.constant 0.000000e+00 : f32
    %250 = vector.shape_cast %249 : vector<1x64xi1> to vector<1x64xi1>
    %251 = vector.broadcast %250 : vector<1x64xi1> to vector<8x64xi1>
    %252 = vector.broadcast %cst_78 : f32 to vector<8x64xf32>
    %253 = arith.select %251, %247, %252 : vector<8x64xi1>, vector<8x64xf32>
    %cst_79 = arith.constant dense<0.000000e+00> : vector<8x64xf32>
    %254 = tpu.matmul %244, %253, %cst_79 {dimension_numbers = #tpu.dot_dimension_numbers<[1], [0], [0], [1], [0, 0, 1, 1], [], []>} : vector<8x8xf32>, vector<8x64xf32>, vector<8x64xf32> -> vector<8x64xf32>
    %255 = arith.addf %243, %254 : vector<8x64xf32>
    %256 = vector.extract_strided_slice %206 {offsets = [0, 16], sizes = [8, 8], strides = [1, 1]} : vector<8x72xf32> to vector<8x8xf32>
    %cst_80 = arith.constant 0.000000e+00 : f32
    %257 = vector.broadcast %cst_80 : f32 to vector<8x9xf32>
    %258 = tpu.concatenate %257, %185, %257 in 1 : vector<8x9xf32>, vector<8x64xf32>, vector<8x9xf32> -> vector<8x82xf32>
    %259 = vector.extract_strided_slice %258 {offsets = [0, 2], sizes = [8, 64], strides = [1, 1]} : vector<8x82xf32> to vector<8x64xf32>
    %c7_i32_81 = arith.constant 7 : i32
    %260 = vector.broadcast %c7_i32_81 : i32 to vector<1x64xi32>
    %261 = arith.cmpi slt, %204, %260 : vector<1x64xi32>
    %cst_82 = arith.constant 0.000000e+00 : f32
    %262 = vector.shape_cast %261 : vector<1x64xi1> to vector<1x64xi1>
    %263 = vector.broadcast %262 : vector<1x64xi1> to vector<8x64xi1>
    %264 = vector.broadcast %cst_82 : f32 to vector<8x64xf32>
    %265 = arith.select %263, %259, %264 : vector<8x64xi1>, vector<8x64xf32>
    %cst_83 = arith.constant dense<0.000000e+00> : vector<8x64xf32>
    %266 = tpu.matmul %256, %265, %cst_83 {dimension_numbers = #tpu.dot_dimension_numbers<[1], [0], [0], [1], [0, 0, 1, 1], [], []>} : vector<8x8xf32>, vector<8x64xf32>, vector<8x64xf32> -> vector<8x64xf32>
    %267 = arith.addf %255, %266 : vector<8x64xf32>
    %268 = vector.extract_strided_slice %205 {offsets = [0, 24], sizes = [8, 8], strides = [1, 1]} : vector<8x72xf32> to vector<8x8xf32>
    %cst_84 = arith.constant 0.000000e+00 : f32
    %269 = vector.broadcast %cst_84 : f32 to vector<8x9xf32>
    %270 = tpu.concatenate %269, %187, %269 in 1 : vector<8x9xf32>, vector<8x64xf32>, vector<8x9xf32> -> vector<8x82xf32>
    %271 = vector.extract_strided_slice %270 {offsets = [0, 8], sizes = [8, 64], strides = [1, 1]} : vector<8x82xf32> to vector<8x64xf32>
    %c0_i32_85 = arith.constant 0 : i32
    %272 = vector.broadcast %c0_i32_85 : i32 to vector<1x64xi32>
    %273 = arith.cmpi sgt, %204, %272 : vector<1x64xi32>
    %cst_86 = arith.constant 0.000000e+00 : f32
    %274 = vector.shape_cast %273 : vector<1x64xi1> to vector<1x64xi1>
    %275 = vector.broadcast %274 : vector<1x64xi1> to vector<8x64xi1>
    %276 = vector.broadcast %cst_86 : f32 to vector<8x64xf32>
    %277 = arith.select %275, %271, %276 : vector<8x64xi1>, vector<8x64xf32>
    %cst_87 = arith.constant dense<0.000000e+00> : vector<8x64xf32>
    %278 = tpu.matmul %268, %277, %cst_87 {dimension_numbers = #tpu.dot_dimension_numbers<[1], [0], [0], [1], [0, 0, 1, 1], [], []>} : vector<8x8xf32>, vector<8x64xf32>, vector<8x64xf32> -> vector<8x64xf32>
    %279 = arith.addf %267, %278 : vector<8x64xf32>
    %280 = vector.extract_strided_slice %206 {offsets = [0, 24], sizes = [8, 8], strides = [1, 1]} : vector<8x72xf32> to vector<8x8xf32>
    %cst_88 = arith.constant 0.000000e+00 : f32
    %281 = vector.broadcast %cst_88 : f32 to vector<8x9xf32>
    %282 = tpu.concatenate %281, %185, %281 in 1 : vector<8x9xf32>, vector<8x64xf32>, vector<8x9xf32> -> vector<8x82xf32>
    %283 = vector.extract_strided_slice %282 {offsets = [0, 8], sizes = [8, 64], strides = [1, 1]} : vector<8x82xf32> to vector<8x64xf32>
    %c0_i32_89 = arith.constant 0 : i32
    %284 = vector.broadcast %c0_i32_89 : i32 to vector<1x64xi32>
    %285 = arith.cmpi sgt, %204, %284 : vector<1x64xi32>
    %cst_90 = arith.constant 0.000000e+00 : f32
    %286 = vector.shape_cast %285 : vector<1x64xi1> to vector<1x64xi1>
    %287 = vector.broadcast %286 : vector<1x64xi1> to vector<8x64xi1>
    %288 = vector.broadcast %cst_90 : f32 to vector<8x64xf32>
    %289 = arith.select %287, %283, %288 : vector<8x64xi1>, vector<8x64xf32>
    %cst_91 = arith.constant dense<0.000000e+00> : vector<8x64xf32>
    %290 = tpu.matmul %280, %289, %cst_91 {dimension_numbers = #tpu.dot_dimension_numbers<[1], [0], [0], [1], [0, 0, 1, 1], [], []>} : vector<8x8xf32>, vector<8x64xf32>, vector<8x64xf32> -> vector<8x64xf32>
    %291 = arith.addf %279, %290 : vector<8x64xf32>
    %292 = vector.extract_strided_slice %205 {offsets = [0, 32], sizes = [8, 8], strides = [1, 1]} : vector<8x72xf32> to vector<8x8xf32>
    %cst_92 = arith.constant dense<0.000000e+00> : vector<8x64xf32>
    %293 = tpu.matmul %292, %187, %cst_92 {dimension_numbers = #tpu.dot_dimension_numbers<[1], [0], [0], [1], [0, 0, 1, 1], [], []>} : vector<8x8xf32>, vector<8x64xf32>, vector<8x64xf32> -> vector<8x64xf32>
    %294 = arith.addf %291, %293 : vector<8x64xf32>
    %295 = vector.extract_strided_slice %206 {offsets = [0, 32], sizes = [8, 8], strides = [1, 1]} : vector<8x72xf32> to vector<8x8xf32>
    %cst_93 = arith.constant dense<0.000000e+00> : vector<8x64xf32>
    %296 = tpu.matmul %295, %185, %cst_93 {dimension_numbers = #tpu.dot_dimension_numbers<[1], [0], [0], [1], [0, 0, 1, 1], [], []>} : vector<8x8xf32>, vector<8x64xf32>, vector<8x64xf32> -> vector<8x64xf32>
    %297 = arith.addf %294, %296 : vector<8x64xf32>
    %298 = vector.extract_strided_slice %205 {offsets = [0, 40], sizes = [8, 8], strides = [1, 1]} : vector<8x72xf32> to vector<8x8xf32>
    %cst_94 = arith.constant 0.000000e+00 : f32
    %299 = vector.broadcast %cst_94 : f32 to vector<8x9xf32>
    %300 = tpu.concatenate %299, %187, %299 in 1 : vector<8x9xf32>, vector<8x64xf32>, vector<8x9xf32> -> vector<8x82xf32>
    %301 = vector.extract_strided_slice %300 {offsets = [0, 10], sizes = [8, 64], strides = [1, 1]} : vector<8x82xf32> to vector<8x64xf32>
    %c7_i32_95 = arith.constant 7 : i32
    %302 = vector.broadcast %c7_i32_95 : i32 to vector<1x64xi32>
    %303 = arith.cmpi slt, %204, %302 : vector<1x64xi32>
    %cst_96 = arith.constant 0.000000e+00 : f32
    %304 = vector.shape_cast %303 : vector<1x64xi1> to vector<1x64xi1>
    %305 = vector.broadcast %304 : vector<1x64xi1> to vector<8x64xi1>
    %306 = vector.broadcast %cst_96 : f32 to vector<8x64xf32>
    %307 = arith.select %305, %301, %306 : vector<8x64xi1>, vector<8x64xf32>
    %cst_97 = arith.constant dense<0.000000e+00> : vector<8x64xf32>
    %308 = tpu.matmul %298, %307, %cst_97 {dimension_numbers = #tpu.dot_dimension_numbers<[1], [0], [0], [1], [0, 0, 1, 1], [], []>} : vector<8x8xf32>, vector<8x64xf32>, vector<8x64xf32> -> vector<8x64xf32>
    %309 = arith.addf %297, %308 : vector<8x64xf32>
    %310 = vector.extract_strided_slice %206 {offsets = [0, 40], sizes = [8, 8], strides = [1, 1]} : vector<8x72xf32> to vector<8x8xf32>
    %cst_98 = arith.constant 0.000000e+00 : f32
    %311 = vector.broadcast %cst_98 : f32 to vector<8x9xf32>
    %312 = tpu.concatenate %311, %185, %311 in 1 : vector<8x9xf32>, vector<8x64xf32>, vector<8x9xf32> -> vector<8x82xf32>
    %313 = vector.extract_strided_slice %312 {offsets = [0, 10], sizes = [8, 64], strides = [1, 1]} : vector<8x82xf32> to vector<8x64xf32>
    %c7_i32_99 = arith.constant 7 : i32
    %314 = vector.broadcast %c7_i32_99 : i32 to vector<1x64xi32>
    %315 = arith.cmpi slt, %204, %314 : vector<1x64xi32>
    %cst_100 = arith.constant 0.000000e+00 : f32
    %316 = vector.shape_cast %315 : vector<1x64xi1> to vector<1x64xi1>
    %317 = vector.broadcast %316 : vector<1x64xi1> to vector<8x64xi1>
    %318 = vector.broadcast %cst_100 : f32 to vector<8x64xf32>
    %319 = arith.select %317, %313, %318 : vector<8x64xi1>, vector<8x64xf32>
    %cst_101 = arith.constant dense<0.000000e+00> : vector<8x64xf32>
    %320 = tpu.matmul %310, %319, %cst_101 {dimension_numbers = #tpu.dot_dimension_numbers<[1], [0], [0], [1], [0, 0, 1, 1], [], []>} : vector<8x8xf32>, vector<8x64xf32>, vector<8x64xf32> -> vector<8x64xf32>
    %321 = arith.addf %309, %320 : vector<8x64xf32>
    %322 = vector.extract_strided_slice %205 {offsets = [0, 48], sizes = [8, 8], strides = [1, 1]} : vector<8x72xf32> to vector<8x8xf32>
    %cst_102 = arith.constant 0.000000e+00 : f32
    %323 = vector.broadcast %cst_102 : f32 to vector<8x9xf32>
    %324 = tpu.concatenate %323, %187, %323 in 1 : vector<8x9xf32>, vector<8x64xf32>, vector<8x9xf32> -> vector<8x82xf32>
    %325 = vector.extract_strided_slice %324 {offsets = [0, 16], sizes = [8, 64], strides = [1, 1]} : vector<8x82xf32> to vector<8x64xf32>
    %c0_i32_103 = arith.constant 0 : i32
    %326 = vector.broadcast %c0_i32_103 : i32 to vector<1x64xi32>
    %327 = arith.cmpi sgt, %204, %326 : vector<1x64xi32>
    %cst_104 = arith.constant 0.000000e+00 : f32
    %328 = vector.shape_cast %327 : vector<1x64xi1> to vector<1x64xi1>
    %329 = vector.broadcast %328 : vector<1x64xi1> to vector<8x64xi1>
    %330 = vector.broadcast %cst_104 : f32 to vector<8x64xf32>
    %331 = arith.select %329, %325, %330 : vector<8x64xi1>, vector<8x64xf32>
    %cst_105 = arith.constant dense<0.000000e+00> : vector<8x64xf32>
    %332 = tpu.matmul %322, %331, %cst_105 {dimension_numbers = #tpu.dot_dimension_numbers<[1], [0], [0], [1], [0, 0, 1, 1], [], []>} : vector<8x8xf32>, vector<8x64xf32>, vector<8x64xf32> -> vector<8x64xf32>
    %333 = arith.addf %321, %332 : vector<8x64xf32>
    %334 = vector.extract_strided_slice %206 {offsets = [0, 48], sizes = [8, 8], strides = [1, 1]} : vector<8x72xf32> to vector<8x8xf32>
    %cst_106 = arith.constant 0.000000e+00 : f32
    %335 = vector.broadcast %cst_106 : f32 to vector<8x9xf32>
    %336 = tpu.concatenate %335, %185, %335 in 1 : vector<8x9xf32>, vector<8x64xf32>, vector<8x9xf32> -> vector<8x82xf32>
    %337 = vector.extract_strided_slice %336 {offsets = [0, 16], sizes = [8, 64], strides = [1, 1]} : vector<8x82xf32> to vector<8x64xf32>
    %c0_i32_107 = arith.constant 0 : i32
    %338 = vector.broadcast %c0_i32_107 : i32 to vector<1x64xi32>
    %339 = arith.cmpi sgt, %204, %338 : vector<1x64xi32>
    %cst_108 = arith.constant 0.000000e+00 : f32
    %340 = vector.shape_cast %339 : vector<1x64xi1> to vector<1x64xi1>
    %341 = vector.broadcast %340 : vector<1x64xi1> to vector<8x64xi1>
    %342 = vector.broadcast %cst_108 : f32 to vector<8x64xf32>
    %343 = arith.select %341, %337, %342 : vector<8x64xi1>, vector<8x64xf32>
    %cst_109 = arith.constant dense<0.000000e+00> : vector<8x64xf32>
    %344 = tpu.matmul %334, %343, %cst_109 {dimension_numbers = #tpu.dot_dimension_numbers<[1], [0], [0], [1], [0, 0, 1, 1], [], []>} : vector<8x8xf32>, vector<8x64xf32>, vector<8x64xf32> -> vector<8x64xf32>
    %345 = arith.addf %333, %344 : vector<8x64xf32>
    %346 = vector.extract_strided_slice %205 {offsets = [0, 56], sizes = [8, 8], strides = [1, 1]} : vector<8x72xf32> to vector<8x8xf32>
    %cst_110 = arith.constant 0.000000e+00 : f32
    %347 = vector.broadcast %cst_110 : f32 to vector<8x9xf32>
    %348 = tpu.concatenate %347, %187, %347 in 1 : vector<8x9xf32>, vector<8x64xf32>, vector<8x9xf32> -> vector<8x82xf32>
    %349 = vector.extract_strided_slice %348 {offsets = [0, 17], sizes = [8, 64], strides = [1, 1]} : vector<8x82xf32> to vector<8x64xf32>
    %cst_111 = arith.constant dense<0.000000e+00> : vector<8x64xf32>
    %350 = tpu.matmul %346, %349, %cst_111 {dimension_numbers = #tpu.dot_dimension_numbers<[1], [0], [0], [1], [0, 0, 1, 1], [], []>} : vector<8x8xf32>, vector<8x64xf32>, vector<8x64xf32> -> vector<8x64xf32>
    %351 = arith.addf %345, %350 : vector<8x64xf32>
    %352 = vector.extract_strided_slice %206 {offsets = [0, 56], sizes = [8, 8], strides = [1, 1]} : vector<8x72xf32> to vector<8x8xf32>
    %cst_112 = arith.constant 0.000000e+00 : f32
    %353 = vector.broadcast %cst_112 : f32 to vector<8x9xf32>
    %354 = tpu.concatenate %353, %185, %353 in 1 : vector<8x9xf32>, vector<8x64xf32>, vector<8x9xf32> -> vector<8x82xf32>
    %355 = vector.extract_strided_slice %354 {offsets = [0, 17], sizes = [8, 64], strides = [1, 1]} : vector<8x82xf32> to vector<8x64xf32>
    %cst_113 = arith.constant dense<0.000000e+00> : vector<8x64xf32>
    %356 = tpu.matmul %352, %355, %cst_113 {dimension_numbers = #tpu.dot_dimension_numbers<[1], [0], [0], [1], [0, 0, 1, 1], [], []>} : vector<8x8xf32>, vector<8x64xf32>, vector<8x64xf32> -> vector<8x64xf32>
    %357 = arith.addf %351, %356 : vector<8x64xf32>
    %358 = vector.extract_strided_slice %205 {offsets = [0, 64], sizes = [8, 8], strides = [1, 1]} : vector<8x72xf32> to vector<8x8xf32>
    %cst_114 = arith.constant 0.000000e+00 : f32
    %359 = vector.broadcast %cst_114 : f32 to vector<8x9xf32>
    %360 = tpu.concatenate %359, %187, %359 in 1 : vector<8x9xf32>, vector<8x64xf32>, vector<8x9xf32> -> vector<8x82xf32>
    %361 = vector.extract_strided_slice %360 {offsets = [0, 18], sizes = [8, 64], strides = [1, 1]} : vector<8x82xf32> to vector<8x64xf32>
    %c7_i32_115 = arith.constant 7 : i32
    %362 = vector.broadcast %c7_i32_115 : i32 to vector<1x64xi32>
    %363 = arith.cmpi slt, %204, %362 : vector<1x64xi32>
    %cst_116 = arith.constant 0.000000e+00 : f32
    %364 = vector.shape_cast %363 : vector<1x64xi1> to vector<1x64xi1>
    %365 = vector.broadcast %364 : vector<1x64xi1> to vector<8x64xi1>
    %366 = vector.broadcast %cst_116 : f32 to vector<8x64xf32>
    %367 = arith.select %365, %361, %366 : vector<8x64xi1>, vector<8x64xf32>
    %cst_117 = arith.constant dense<0.000000e+00> : vector<8x64xf32>
    %368 = tpu.matmul %358, %367, %cst_117 {dimension_numbers = #tpu.dot_dimension_numbers<[1], [0], [0], [1], [0, 0, 1, 1], [], []>} : vector<8x8xf32>, vector<8x64xf32>, vector<8x64xf32> -> vector<8x64xf32>
    %369 = arith.addf %357, %368 : vector<8x64xf32>
    %370 = vector.extract_strided_slice %206 {offsets = [0, 64], sizes = [8, 8], strides = [1, 1]} : vector<8x72xf32> to vector<8x8xf32>
    %cst_118 = arith.constant 0.000000e+00 : f32
    %371 = vector.broadcast %cst_118 : f32 to vector<8x9xf32>
    %372 = tpu.concatenate %371, %185, %371 in 1 : vector<8x9xf32>, vector<8x64xf32>, vector<8x9xf32> -> vector<8x82xf32>
    %373 = vector.extract_strided_slice %372 {offsets = [0, 18], sizes = [8, 64], strides = [1, 1]} : vector<8x82xf32> to vector<8x64xf32>
    %c7_i32_119 = arith.constant 7 : i32
    %374 = vector.broadcast %c7_i32_119 : i32 to vector<1x64xi32>
    %375 = arith.cmpi slt, %204, %374 : vector<1x64xi32>
    %cst_120 = arith.constant 0.000000e+00 : f32
    %376 = vector.shape_cast %375 : vector<1x64xi1> to vector<1x64xi1>
    %377 = vector.broadcast %376 : vector<1x64xi1> to vector<8x64xi1>
    %378 = vector.broadcast %cst_120 : f32 to vector<8x64xf32>
    %379 = arith.select %377, %373, %378 : vector<8x64xi1>, vector<8x64xf32>
    %cst_121 = arith.constant dense<0.000000e+00> : vector<8x64xf32>
    %380 = tpu.matmul %370, %379, %cst_121 {dimension_numbers = #tpu.dot_dimension_numbers<[1], [0], [0], [1], [0, 0, 1, 1], [], []>} : vector<8x8xf32>, vector<8x64xf32>, vector<8x64xf32> -> vector<8x64xf32>
    %381 = arith.addf %369, %380 : vector<8x64xf32>
    %c0_122 = arith.constant 0 : index
    %c0_123 = arith.constant 0 : index
    %382 = vector.load %arg9[%c0_122, %c0_123] : memref<8x1xf32, #tpu.memory_space<vmem>>, vector<8x1xf32>
    %383 = vector.broadcast %382 : vector<8x1xf32> to vector<8x64xf32>
    %384 = arith.addf %381, %383 : vector<8x64xf32>
    %cst_124 = arith.constant 0.000000e+00 : f32
    %385 = vector.broadcast %cst_124 : f32 to vector<8x64xf32>
    %386 = arith.maximumf %384, %385 : vector<8x64xf32>
    %c0_125 = arith.constant 0 : index
    %c0_126 = arith.constant 0 : index
    %c0_127 = arith.constant 0 : index
    %387 = vector.load %arg10[%c0_125, %c0_126, %c0_127] : memref<1x8x64xf32, #tpu.memory_space<vmem>>, vector<1x8x64xf32>
    %388 = vector.shape_cast %387 : vector<1x8x64xf32> to vector<8x64xf32>
    %389 = vector.shape_cast %386 : vector<8x64xf32> to vector<1x8x64xf32>
    tpu.vector_store %arg10[%c0_125, %c0_126, %c0_127], %389 {strides = array<i32>} : memref<1x8x64xf32, #tpu.memory_space<vmem>>, vector<1x8x64xf32>,
    return
  }
  func.func @transform_0(%arg0: i32) -> (i32, i32, i32) {
    %c0_i32 = arith.constant 0 : i32
    %c0_i32_0 = arith.constant 0 : i32
    %c0_i32_1 = arith.constant 0 : i32
    return %arg0, %c0_i32, %c0_i32_0 : i32, i32, i32
  }
  func.func @transform_1(%arg0: i32) -> (i32, i32, i32) {
    %c0_i32 = arith.constant 0 : i32
    %c0_i32_0 = arith.constant 0 : i32
    %c0_i32_1 = arith.constant 0 : i32
    return %arg0, %c0_i32, %c0_i32_0 : i32, i32, i32
  }
  func.func @transform_2(%arg0: i32) -> (i32, i32) {
    %c0_i32 = arith.constant 0 : i32
    %c0_i32_0 = arith.constant 0 : i32
    %c0_i32_1 = arith.constant 0 : i32
    return %c0_i32, %c0_i32_0 : i32, i32
  }
  func.func @transform_3(%arg0: i32) -> (i32, i32) {
    %c0_i32 = arith.constant 0 : i32
    %c0_i32_0 = arith.constant 0 : i32
    %c0_i32_1 = arith.constant 0 : i32
    return %c0_i32, %c0_i32_0 : i32, i32
  }
  func.func @transform_4(%arg0: i32) -> (i32, i32) {
    %c0_i32 = arith.constant 0 : i32
    %c0_i32_0 = arith.constant 0 : i32
    %c0_i32_1 = arith.constant 0 : i32
    return %c0_i32, %c0_i32_0 : i32, i32
  }
  func.func @transform_5(%arg0: i32) -> (i32, i32, i32) {
    %c0_i32 = arith.constant 0 : i32
    %c0_i32_0 = arith.constant 0 : i32
    %c0_i32_1 = arith.constant 0 : i32
    %c0_i32_2 = arith.constant 0 : i32
    return %c0_i32, %c0_i32_0, %c0_i32_1 : i32, i32, i32
  }
  func.func @transform_6(%arg0: i32) -> (i32, i32) {
    %c0_i32 = arith.constant 0 : i32
    %c0_i32_0 = arith.constant 0 : i32
    %c0_i32_1 = arith.constant 0 : i32
    return %c0_i32, %c0_i32_0 : i32, i32
  }
  func.func @transform_7(%arg0: i32) -> (i32, i32) {
    %c0_i32 = arith.constant 0 : i32
    %c0_i32_0 = arith.constant 0 : i32
    %c0_i32_1 = arith.constant 0 : i32
    return %c0_i32, %c0_i32_0 : i32, i32
  }
  func.func @transform_8(%arg0: i32) -> (i32, i32) {
    %c0_i32 = arith.constant 0 : i32
    %c0_i32_0 = arith.constant 0 : i32
    %c0_i32_1 = arith.constant 0 : i32
    return %c0_i32, %c0_i32_0 : i32, i32
  }
  func.func @transform_9(%arg0: i32) -> (i32, i32, i32) {
    %c0_i32 = arith.constant 0 : i32
    %c0_i32_0 = arith.constant 0 : i32
    %c0_i32_1 = arith.constant 0 : i32
    return %arg0, %c0_i32, %c0_i32_0 : i32, i32, i32
  }
}

</mosaic_0001>

<llo_original>
// kernel: tpu_custom_call.1
$region0: #{tpu_custom_call.1}
  #allocation0 [shape = 'u32[]', space=smem, size = 0x4, offset = 0x4, fixed_abs, tag = 'smem constant byte address 0x4 - core index']
  #allocation1 [shape = 'u32[144,128]{1,0:T(1,128)}', space=vmem, size = 0x12000, scoped, tag = 'internal scratch']
  %s0 = inlined_call_operand.vmem [shape: f32[2,8,64], index: 0, kind: input, shape index: {}]
  %s1 = inlined_call_operand.hbm [shape: f32[2,16,16], index: 1, kind: input, shape index: {}]
  %s2 = inlined_call_operand.hbm [shape: f32[8,16], index: 2, kind: input, shape index: {}]
  %s3 = inlined_call_operand.vmem [shape: f32[8,1], index: 3, kind: input, shape index: {}]
  %s4 = inlined_call_operand.vmem [shape: f32[8,16], index: 4, kind: input, shape index: {}]
  %s5 = inlined_call_operand.hbm [shape: f32[4,16,64], index: 5, kind: input, shape index: {}]
  %s6 = inlined_call_operand.hbm [shape: f32[8,72], index: 6, kind: input, shape index: {}]
  %s7 = inlined_call_operand.hbm [shape: f32[8,72], index: 7, kind: input, shape index: {}]
  %s8 = inlined_call_operand.vmem [shape: f32[8,1], index: 8, kind: input, shape index: {}]
  %s9 = inlined_call_operand.hbm [shape: f32[2,8,64], index: 9, kind: output, shape index: {}]
  %s10 = sld [smem:[#allocation0]]
  $region89: #{tpu_custom_call.1} parent=0
    _
  %s12 = ssub.s32 1, %s10
  %s13 = scalar_select 0, %s12, %s10
  $region1: #{tpu_custom_call.1} parent=0
    #allocation2 [shape = 'u8[16384]{0}', space=vmem, size = 0x4000, scoped, tag = 'input window, operand 1']
    #allocation3 [shape = 's32[2]{0}', space=sflag, size = 0x8, scoped, tag = 'scoped memory for tpu_custom_call.1']
    #allocation4 [shape = 's32[2]{0}', space=sflag, size = 0x8, scoped, tag = 'scoped memory for tpu_custom_call.1']
    #allocation5 [shape = 'u8[4096]{0}', space=vmem, size = 0x1000, scoped, tag = 'input window, operand 2, single buffered']
    #allocation6 [shape = 's32[1]{0}', space=sflag, size = 0x4, scoped, tag = 'scoped memory for tpu_custom_call.1']
    #allocation7 [shape = 'u8[32768]{0}', space=vmem, size = 0x8000, scoped, tag = 'input window, operand 5, single buffered']
    #allocation8 [shape = 'u8[4096]{0}', space=vmem, size = 0x1000, scoped, tag = 'input window, operand 6, single buffered']
    #allocation9 [shape = 's32[1]{0}', space=sflag, size = 0x4, scoped, tag = 'scoped memory for tpu_custom_call.1']
    #allocation10 [shape = 'u8[4096]{0}', space=vmem, size = 0x1000, scoped, tag = 'input window, operand 7, single buffered']
    #allocation11 [shape = 'u8[8192]{0}', space=vmem, size = 0x2000, scoped, tag = 'output window, operand 0']
    %14 = vsyncpa [#allocation3], 0
    %s15 = scalar_lea.sflag [#allocation3], 1
    %16 = vsyncpa %s15, 0
    %17 = vsyncpa [#allocation6], 0
    %18 = vsyncpa [#allocation9], 0
    %19 = vsyncpa [#allocation4], 0
    %s20 = scalar_lea.sflag [#allocation4], 1
    %21 = vsyncpa %s20, 0
    loop: start=0, step=1, limit=4
    $region2: #{tpu_custom_call.1} parent=1 // loop_pre_header
      _
    $region3: #{tpu_custom_call.1} parent=1 // loop_header
      %s23 = sphi 0, %s27
      %p24 = scmp.ge.s32.totalorder %s23, 4
      %s33 = sphi 0, %s35
      %s36 = sphi 0, %s33
      %s37 = sphi 0, %s36
      %s53 = sphi 0, %s37
      %s59 = sphi 0, %s61
      %s62 = sphi 0, %s59
      %s63 = sphi 0, %s62
      %s79 = sphi 0, %s63
      %s83 = sphi 0, %s83
      %s85 = sphi 0, %s83
      %s86 = sphi 0, %s85
      %s100 = sphi 0, %s86
      %s104 = sphi 0, %s104
      %s106 = sphi 0, %s104
      %s107 = sphi 0, %s106
      %s121 = sphi 0, %s107
      %s125 = sphi 0, %s125
      %s127 = sphi 0, %s125
      %s128 = sphi 0, %s127
      %s142 = sphi 0, %s128
      %s146 = sphi 0, %s146
      %s148 = sphi 0, %s146
      %s149 = sphi 0, %s148
      %s163 = sphi 0, %s149
      %s167 = sphi 0, %s167
      %s169 = sphi 0, %s167
      %s170 = sphi 0, %s169
      %s184 = sphi 0, %s170
      %s188 = sphi 0, %s188
      %s190 = sphi 0, %s188
      %s191 = sphi 0, %s190
      %s205 = sphi 0, %s191
      %s209 = sphi 0, %s209
      %s211 = sphi 0, %s209
      %s212 = sphi 0, %s211
      %s226 = sphi 0, %s212
      %s232 = sphi 0, %s234
      %s235 = sphi 0, %s232
      %s236 = sphi 0, %s235
      %s252 = sphi 0, %s236
    $region4: #{tpu_custom_call.1} parent=1 // loop_header_branch
      %26 = sbr.rel (%p24) target = $region8
    $region5: #{tpu_custom_call.1} parent=1 // loop_body
      %s28 = ssub.s32 %s23, 1
      %s29 = ssub.s32 %s23, 2
      %s30 = sadd.s32 %s23, 1
      %s31 = ssub.s32 %s23, %s30
      %p32 = scmp.eq.s32.totalorder %s31, 0
      %s34 = sadd.s32 %s33, 1
      %s35 = scalar_select %p32, %s33, %s34
      %p38 = pneg %p32
      %p39 = scmp.eq.s32.totalorder %s23, 1
      %p40 = por %p38, %p39
      %p41 = scmp.ne.s32.totalorder %s33, %s36
      %p42 = scmp.eq.s32.totalorder %s23, 0
      %p43 = por %p41, %p42
      %p44 = scmp.ne.s32.totalorder %s33, %s36
      %p45 = scmp.eq.s32.totalorder %s28, 1
      %p46 = por %p44, %p45
      %p47 = scmp.ne.s32.totalorder %s36, %s37
      %p48 = scmp.eq.s32.totalorder %s28, 0
      %p49 = por %p47, %p48
      %p50 = scmp.ne.s32.totalorder %s36, %s37
      %p51 = scmp.eq.s32.totalorder %s29, 1
      %p52 = por %p50, %p51
      %p54 = scmp.ne.s32.totalorder %s37, %s53
      %p55 = scmp.eq.s32.totalorder %s29, 0
      %p56 = por %p54, %p55
      %s57 = ssub.s32 %s23, %s30
      %p58 = scmp.eq.s32.totalorder %s57, 0
      %s60 = sadd.s32 %s59, 1
      %s61 = scalar_select %p58, %s59, %s60
      %p64 = pneg %p58
      %p65 = scmp.eq.s32.totalorder %s23, 1
      %p66 = por %p64, %p65
      %p67 = scmp.ne.s32.totalorder %s59, %s62
      %p68 = scmp.eq.s32.totalorder %s23, 0
      %p69 = por %p67, %p68
      %p70 = scmp.ne.s32.totalorder %s59, %s62
      %p71 = scmp.eq.s32.totalorder %s28, 1
      %p72 = por %p70, %p71
      %p73 = scmp.ne.s32.totalorder %s62, %s63
      %p74 = scmp.eq.s32.totalorder %s28, 0
      %p75 = por %p73, %p74
      %p76 = scmp.ne.s32.totalorder %s62, %s63
      %p77 = scmp.eq.s32.totalorder %s29, 1
      %p78 = por %p76, %p77
      %p80 = scmp.ne.s32.totalorder %s63, %s79
      %p81 = scmp.eq.s32.totalorder %s29, 0
      %p82 = por %p80, %p81
      %s84 = sadd.s32 %s83, 1
      %p87 = scmp.eq.s32.totalorder %s23, 1
      %p88 = scmp.ne.s32.totalorder %s83, %s85
      %p89 = scmp.eq.s32.totalorder %s23, 0
      %p90 = por %p88, %p89
      %p91 = scmp.ne.s32.totalorder %s83, %s85
      %p92 = scmp.eq.s32.totalorder %s28, 1
      %p93 = por %p91, %p92
      %p94 = scmp.ne.s32.totalorder %s85, %s86
      %p95 = scmp.eq.s32.totalorder %s28, 0
      %p96 = por %p94, %p95
      %p97 = scmp.ne.s32.totalorder %s85, %s86
      %p98 = scmp.eq.s32.totalorder %s29, 1
      %p99 = por %p97, %p98
      %p101 = scmp.ne.s32.totalorder %s86, %s100
      %p102 = scmp.eq.s32.totalorder %s29, 0
      %p103 = por %p101, %p102
      %s105 = sadd.s32 %s104, 1
      %p108 = scmp.eq.s32.totalorder %s23, 1
      %p109 = scmp.ne.s32.totalorder %s104, %s106
      %p110 = scmp.eq.s32.totalorder %s23, 0
      %p111 = por %p109, %p110
      %p112 = scmp.ne.s32.totalorder %s104, %s106
      %p113 = scmp.eq.s32.totalorder %s28, 1
      %p114 = por %p112, %p113
      %p115 = scmp.ne.s32.totalorder %s106, %s107
      %p116 = scmp.eq.s32.totalorder %s28, 0
      %p117 = por %p115, %p116
      %p118 = scmp.ne.s32.totalorder %s106, %s107
      %p119 = scmp.eq.s32.totalorder %s29, 1
      %p120 = por %p118, %p119
      %p122 = scmp.ne.s32.totalorder %s107, %s121
      %p123 = scmp.eq.s32.totalorder %s29, 0
      %p124 = por %p122, %p123
      %s126 = sadd.s32 %s125, 1
      %p129 = scmp.eq.s32.totalorder %s23, 1
      %p130 = scmp.ne.s32.totalorder %s125, %s127
      %p131 = scmp.eq.s32.totalorder %s23, 0
      %p132 = por %p130, %p131
      %p133 = scmp.ne.s32.totalorder %s125, %s127
      %p134 = scmp.eq.s32.totalorder %s28, 1
      %p135 = por %p133, %p134
      %p136 = scmp.ne.s32.totalorder %s127, %s128
      %p137 = scmp.eq.s32.totalorder %s28, 0
      %p138 = por %p136, %p137
      %p139 = scmp.ne.s32.totalorder %s127, %s128
      %p140 = scmp.eq.s32.totalorder %s29, 1
      %p141 = por %p139, %p140
      %p143 = scmp.ne.s32.totalorder %s128, %s142
      %p144 = scmp.eq.s32.totalorder %s29, 0
      %p145 = por %p143, %p144
      %s147 = sadd.s32 %s146, 1
      %p150 = scmp.eq.s32.totalorder %s23, 1
      %p151 = scmp.ne.s32.totalorder %s146, %s148
      %p152 = scmp.eq.s32.totalorder %s23, 0
      %p153 = por %p151, %p152
      %p154 = scmp.ne.s32.totalorder %s146, %s148
      %p155 = scmp.eq.s32.totalorder %s28, 1
      %p156 = por %p154, %p155
      %p157 = scmp.ne.s32.totalorder %s148, %s149
      %p158 = scmp.eq.s32.totalorder %s28, 0
      %p159 = por %p157, %p158
      %p160 = scmp.ne.s32.totalorder %s148, %s149
      %p161 = scmp.eq.s32.totalorder %s29, 1
      %p162 = por %p160, %p161
      %p164 = scmp.ne.s32.totalorder %s149, %s163
      %p165 = scmp.eq.s32.totalorder %s29, 0
      %p166 = por %p164, %p165
      %s168 = sadd.s32 %s167, 1
      %p171 = scmp.eq.s32.totalorder %s23, 1
      %p172 = scmp.ne.s32.totalorder %s167, %s169
      %p173 = scmp.eq.s32.totalorder %s23, 0
      %p174 = por %p172, %p173
      %p175 = scmp.ne.s32.totalorder %s167, %s169
      %p176 = scmp.eq.s32.totalorder %s28, 1
      %p177 = por %p175, %p176
      %p178 = scmp.ne.s32.totalorder %s169, %s170
      %p179 = scmp.eq.s32.totalorder %s28, 0
      %p180 = por %p178, %p179
      %p181 = scmp.ne.s32.totalorder %s169, %s170
      %p182 = scmp.eq.s32.totalorder %s29, 1
      %p183 = por %p181, %p182
      %p185 = scmp.ne.s32.totalorder %s170, %s184
      %p186 = scmp.eq.s32.totalorder %s29, 0
      %p187 = por %p185, %p186
      %s189 = sadd.s32 %s188, 1
      %p192 = scmp.eq.s32.totalorder %s23, 1
      %p193 = scmp.ne.s32.totalorder %s188, %s190
      %p194 = scmp.eq.s32.totalorder %s23, 0
      %p195 = por %p193, %p194
      %p196 = scmp.ne.s32.totalorder %s188, %s190
      %p197 = scmp.eq.s32.totalorder %s28, 1
      %p198 = por %p196, %p197
      %p199 = scmp.ne.s32.totalorder %s190, %s191
      %p200 = scmp.eq.s32.totalorder %s28, 0
      %p201 = por %p199, %p200
      %p202 = scmp.ne.s32.totalorder %s190, %s191
      %p203 = scmp.eq.s32.totalorder %s29, 1
      %p204 = por %p202, %p203
      %p206 = scmp.ne.s32.totalorder %s191, %s205
      %p207 = scmp.eq.s32.totalorder %s29, 0
      %p208 = por %p206, %p207
      %s210 = sadd.s32 %s209, 1
      %p213 = scmp.eq.s32.totalorder %s23, 1
      %p214 = scmp.ne.s32.totalorder %s209, %s211
      %p215 = scmp.eq.s32.totalorder %s23, 0
      %p216 = por %p214, %p215
      %p217 = scmp.ne.s32.totalorder %s209, %s211
      %p218 = scmp.eq.s32.totalorder %s28, 1
      %p219 = por %p217, %p218
      %p220 = scmp.ne.s32.totalorder %s211, %s212
      %p221 = scmp.eq.s32.totalorder %s28, 0
      %p222 = por %p220, %p221
      %p223 = scmp.ne.s32.totalorder %s211, %s212
      %p224 = scmp.eq.s32.totalorder %s29, 1
      %p225 = por %p223, %p224
      %p227 = scmp.ne.s32.totalorder %s212, %s226
      %p228 = scmp.eq.s32.totalorder %s29, 0
      %p229 = por %p227, %p228
      %s230 = ssub.s32 %s23, %s30
      %p231 = scmp.eq.s32.totalorder %s230, 0
      %s233 = sadd.s32 %s232, 1
      %s234 = scalar_select %p231, %s232, %s233
      %p237 = pneg %p231
      %p238 = scmp.eq.s32.totalorder %s23, 1
      %p239 = por %p237, %p238
      %p240 = scmp.ne.s32.totalorder %s232, %s235
      %p241 = scmp.eq.s32.totalorder %s23, 0
      %p242 = por %p240, %p241
      %p243 = scmp.ne.s32.totalorder %s232, %s235
      %p244 = scmp.eq.s32.totalorder %s28, 1
      %p245 = por %p243, %p244
      %p246 = scmp.ne.s32.totalorder %s235, %s236
      %p247 = scmp.eq.s32.totalorder %s28, 0
      %p248 = por %p246, %p247
      %p249 = scmp.ne.s32.totalorder %s235, %s236
      %p250 = scmp.eq.s32.totalorder %s29, 1
      %p251 = por %p249, %p250
      %p253 = scmp.ne.s32.totalorder %s236, %s252
      %p254 = scmp.eq.s32.totalorder %s29, 0
      %p255 = por %p253, %p254
      %p256 = scmp.le.s32.totalorder 1, %s23
      %p257 = scmp.lt.s32.totalorder %s23, 3
      %p258 = pnand %p256, %p257
      %p259 = pneg %p258
      // Predicated region
      $region9: #{tpu_custom_call.1} parent=5 // pred_check
        _
      $region10: #{tpu_custom_call.1} parent=5 // pred_check_branch
        %261 = sbr.rel (%p258) target = $region12
      $region11: #{tpu_custom_call.1} parent=5 // pred_region
        %s262 = ssub.s32 %s23, 1
        // Predicated region
        $region13: #{tpu_custom_call.1} parent=11 // pred_check
          %p263 = pneg %p96
        $region14: #{tpu_custom_call.1} parent=11 // pred_check_branch
          %265 = sbr.rel (%p263) target = $region16
        $region15: #{tpu_custom_call.1} parent=11 // pred_region
          %s267 = ssub.s32 128, 128
          %268 = vsyncadd [#allocation6], %s267
          %s270 = sshll.u32 [#allocation5], 4
          %s271 = int_to_ptr.vmem [resolvable:$true] %s270
          %273 = dma.hbm_to_vmem [thread:$0]  %s2, 128, %s271, [#allocation6]
        $region16: #{tpu_custom_call.1} parent=11 // pred_fallthru
          _
        // Predicated region
        $region17: #{tpu_custom_call.1} parent=11 // pred_check
          %p274 = pneg %p117
        $region18: #{tpu_custom_call.1} parent=11 // pred_check_branch
          %276 = sbr.rel (%p274) target = $region20
        $region19: #{tpu_custom_call.1} parent=11 // pred_region
          _
        $region20: #{tpu_custom_call.1} parent=11 // pred_fallthru
          _
        // Predicated region
        $region21: #{tpu_custom_call.1} parent=11 // pred_check
          %p277 = pneg %p138
        $region22: #{tpu_custom_call.1} parent=11 // pred_check_branch
          %279 = sbr.rel (%p277) target = $region24
        $region23: #{tpu_custom_call.1} parent=11 // pred_region
          _
        $region24: #{tpu_custom_call.1} parent=11 // pred_fallthru
          _
        // Predicated region
        $region25: #{tpu_custom_call.1} parent=11 // pred_check
          %p280 = pneg %p159
        $region26: #{tpu_custom_call.1} parent=11 // pred_check_branch
          %282 = sbr.rel (%p280) target = $region28
        $region27: #{tpu_custom_call.1} parent=11 // pred_region
          %s284 = ssub.s32 1024, 1024
          %285 = vsyncadd [#allocation6], %s284
          %s286 = sshll.u32 [#allocation7], 4
          %s287 = int_to_ptr.vmem [resolvable:$true] %s286
          %292 = dma.hbm_to_vmem [thread:$0]  %s5, 1024, %s287, [#allocation6], 128, 128, 8
        $region28: #{tpu_custom_call.1} parent=11 // pred_fallthru
          _
        // Predicated region
        $region29: #{tpu_custom_call.1} parent=11 // pred_check
          %p293 = pneg %p180
        $region30: #{tpu_custom_call.1} parent=11 // pred_check_branch
          %295 = sbr.rel (%p293) target = $region32
        $region31: #{tpu_custom_call.1} parent=11 // pred_region
          %s297 = ssub.s32 128, 128
          %298 = vsyncadd [#allocation9], %s297
          %s300 = sshll.u32 [#allocation8], 4
          %s301 = int_to_ptr.vmem [resolvable:$true] %s300
          %303 = dma.hbm_to_vmem [thread:$0]  %s6, 128, %s301, [#allocation9]
        $region32: #{tpu_custom_call.1} parent=11 // pred_fallthru
          _
        // Predicated region
        $region33: #{tpu_custom_call.1} parent=11 // pred_check
          %p304 = pneg %p201
        $region34: #{tpu_custom_call.1} parent=11 // pred_check_branch
          %306 = sbr.rel (%p304) target = $region36
        $region35: #{tpu_custom_call.1} parent=11 // pred_region
          %s308 = ssub.s32 128, 128
          %309 = vsyncadd [#allocation9], %s308
          %s311 = sshll.u32 [#allocation10], 4
          %s312 = int_to_ptr.vmem [resolvable:$true] %s311
          %314 = dma.hbm_to_vmem [thread:$0]  %s7, 128, %s312, [#allocation9]
        $region36: #{tpu_custom_call.1} parent=11 // pred_fallthru
          _
        // Predicated region
        $region37: #{tpu_custom_call.1} parent=11 // pred_check
          %p315 = pneg %p222
        $region38: #{tpu_custom_call.1} parent=11 // pred_check_branch
          %317 = sbr.rel (%p315) target = $region40
        $region39: #{tpu_custom_call.1} parent=11 // pred_region
          _
        $region40: #{tpu_custom_call.1} parent=11 // pred_fallthru
          _
      $region12: #{tpu_custom_call.1} parent=5 // pred_fallthru
        _
      %p318 = scmp.lt.s32.totalorder %s23, 2
      // Predicated region
      $region41: #{tpu_custom_call.1} parent=5 // pred_check
        %p319 = pneg %p318
      $region42: #{tpu_custom_call.1} parent=5 // pred_check_branch
        %321 = sbr.rel (%p319) target = $region44
      $region43: #{tpu_custom_call.1} parent=5 // pred_region
        // Predicated region
        $region45: #{tpu_custom_call.1} parent=43 // pred_check
          %p322 = pneg %p43
        $region46: #{tpu_custom_call.1} parent=43 // pred_check_branch
          %324 = sbr.rel (%p322) target = $region48
        $region47: #{tpu_custom_call.1} parent=43 // pred_region
          %p325 = scmp.lt.s32.totalorder %s23, 1
          %s326 = scalar_select %p325, %s23, 1
          %s327 = smul.addr %s326, 8
          %s328 = scalar_lea.vmem %s0, %s327
        $region48: #{tpu_custom_call.1} parent=43 // pred_fallthru
          _
        // Predicated region
        $region49: #{tpu_custom_call.1} parent=43 // pred_check
          %p329 = pneg %p69
        $region50: #{tpu_custom_call.1} parent=43 // pred_check_branch
          %331 = sbr.rel (%p329) target = $region52
        $region51: #{tpu_custom_call.1} parent=43 // pred_region
          %s332 = sand.u32 %s59, 1
          %s333 = scalar_lea.sflag [#allocation3], %s332
          %s334 = sand.u32 %s59, 1
          %s335 = smul.addr %s334, 16
          %s336 = scalar_lea.vmem [#allocation2], %s335
          %s338 = ssub.s32 256, 256
          %339 = vsyncadd %s333, %s338
          %s340 = smul.addr %s23, 2
          %s341 = smul.addr %s340, 128
          %s342 = scalar_lea.hbm %s1, %s341
          %s343 = sshll.u32 %s336, 4
          %s344 = int_to_ptr.vmem [resolvable:$true] %s343
          %349 = dma.hbm_to_vmem [thread:$0]  %s342, 256, %s344, %s333, 128, 128, 8
        $region52: #{tpu_custom_call.1} parent=43 // pred_fallthru
          _
      $region44: #{tpu_custom_call.1} parent=5 // pred_fallthru
        _
      %p350 = scmp.le.s32.totalorder 1, %s23
      %p351 = scmp.lt.s32.totalorder %s23, 3
      %p352 = pnand %p350, %p351
      %p353 = pneg %p352
      // Predicated region
      $region53: #{tpu_custom_call.1} parent=5 // pred_check
        _
      $region54: #{tpu_custom_call.1} parent=5 // pred_check_branch
        %355 = sbr.rel (%p352) target = $region56
      $region55: #{tpu_custom_call.1} parent=5 // pred_region
        %s356 = ssub.s32 %s23, 1
        %s357 = sand.u32 %s62, 1
        %s358 = scalar_lea.sflag [#allocation3], %s357
        %s359 = sand.u32 %s62, 1
        %s360 = smul.addr %s359, 16
        %s361 = scalar_lea.vmem [#allocation2], %s360
        // Predicated region
        $region57: #{tpu_custom_call.1} parent=55 // pred_check
          %p362 = pneg %p75
        $region58: #{tpu_custom_call.1} parent=55 // pred_check_branch
          %364 = sbr.rel (%p362) target = $region60
        $region59: #{tpu_custom_call.1} parent=55 // pred_region
          %365 = dma.done %s358, 256
        $region60: #{tpu_custom_call.1} parent=55 // pred_fallthru
          _
        // Predicated region
        $region61: #{tpu_custom_call.1} parent=55 // pred_check
          %p366 = pneg %p96
        $region62: #{tpu_custom_call.1} parent=55 // pred_check_branch
          %368 = sbr.rel (%p366) target = $region64
        $region63: #{tpu_custom_call.1} parent=55 // pred_region
          %369 = dma.done [#allocation6], 128
        $region64: #{tpu_custom_call.1} parent=55 // pred_fallthru
          _
        // Predicated region
        $region65: #{tpu_custom_call.1} parent=55 // pred_check
          %p370 = pneg %p159
        $region66: #{tpu_custom_call.1} parent=55 // pred_check_branch
          %372 = sbr.rel (%p370) target = $region68
        $region67: #{tpu_custom_call.1} parent=55 // pred_region
          %373 = dma.done [#allocation6], 1024
        $region68: #{tpu_custom_call.1} parent=55 // pred_fallthru
          _
        // Predicated region
        $region69: #{tpu_custom_call.1} parent=55 // pred_check
          %p374 = pneg %p180
        $region70: #{tpu_custom_call.1} parent=55 // pred_check_branch
          %376 = sbr.rel (%p374) target = $region72
        $region71: #{tpu_custom_call.1} parent=55 // pred_region
          %377 = dma.done [#allocation9], 128
        $region72: #{tpu_custom_call.1} parent=55 // pred_fallthru
          _
        // Predicated region
        $region73: #{tpu_custom_call.1} parent=55 // pred_check
          %p378 = pneg %p201
        $region74: #{tpu_custom_call.1} parent=55 // pred_check_branch
          %380 = sbr.rel (%p378) target = $region76
        $region75: #{tpu_custom_call.1} parent=55 // pred_region
          %381 = dma.done [#allocation9], 128
        $region76: #{tpu_custom_call.1} parent=55 // pred_fallthru
          _
        %p382 = scmp.lt.s32.totalorder %s28, 1
        %s383 = scalar_select %p382, %s28, 1
        %s384 = smul.addr %s383, 8
        %s385 = scalar_lea.vmem %s0, %s384
        %p386 = pneg %p49
        %p387 = pneg %p46
        %s388 = sand.u32 %s62, 1
        %s389 = scalar_lea.sflag [#allocation3], %s388
        %s390 = sand.u32 %s62, 1
        %s391 = smul.addr %s390, 16
        %s392 = scalar_lea.vmem [#allocation2], %s391
        %p393 = pneg %p75
        %p394 = pneg %p72
        %p395 = pneg %p96
        %p396 = pneg %p93
        %p397 = pneg %p117
        %p398 = pneg %p114
        %p399 = pneg %p138
        %p400 = pneg %p135
        %p401 = pneg %p159
        %p402 = pneg %p156
        %p403 = pneg %p180
        %p404 = pneg %p177
        %p405 = pneg %p201
        %p406 = pneg %p198
        %p407 = pneg %p222
        %p408 = pneg %p219
        %p409 = pneg %p248
        %p410 = pneg %p245
        %s411 = sand.u32 %s235, 1
        %s412 = scalar_lea.sflag [#allocation4], %s411
        %s413 = sand.u32 %s235, 1
        %s414 = smul.addr %s413, 8
        %s415 = scalar_lea.vmem [#allocation11], %s414
        %p416 = scmp.lt.s32.totalorder %s28, 1
        %s417 = scalar_select %p416, %s28, 1
        %s418 = smul.addr %s417, 8
        %s419 = scalar_lea.vmem %s0, %s418
        %v420 = vld [vmem:[%s361] sm:$0xff]
        %v421 = vld [vmem:[%s361 + $0x8] sm:$0xff]
        %v422 = vld [vmem:[#allocation5] sm:$0xff]
        %v423 = vld [vmem:[%s3] sm:$0xff]
        %425 = vset.pattern.permute.xlu0 0
        %426 = vperm.xlu0 %425, %v423
        %v427 = vpop.permute.xlu0 %426
        %vm429 = vcmask 130048
        %v431 = vsel %vm429, %v422, 0
        %433 = vmatprep.subr.mxu0 0.0
        %434 = vmatpush1.msra.mxu0 0.0
        %435 = vmatprep.subr.mxu0 0.0
        %436 = vmatpush1.msra.mxu0 0.0
        %437 = vmatprep.subr.mxu0 0.0
        %438 = vmatpush1.msra.mxu0 0.0
        %439 = vmatprep.subr.mxu0 0.0
        %440 = vmatpush1.msra.mxu0 0.0
        %441 = vmatprep.subr.mxu0 0.0
        %442 = vmatpush1.msra.mxu0 0.0
        %443 = vmatprep.subr.mxu0 0.0
        %444 = vmatpush1.msra.mxu0 0.0
        %445 = vmatprep.subr.mxu0 0.0
        %446 = vmatpush1.msra.mxu0 0.0
        %447 = vmatprep.subr.mxu0 0.0
        %448 = vmatpush1.msra.mxu0 0.0
        %449 = vmatprep.subr.mxu0 0.0
        %450 = vmatpush1.msra.mxu0 0.0
        %451 = vmatprep.subr.mxu0 0.0
        %452 = vmatpush1.msra.mxu0 0.0
        %453 = vmatprep.subr.mxu0 0.0
        %454 = vmatpush1.msra.mxu0 0.0
        %455 = vmatprep.subr.mxu0 0.0
        %456 = vmatpush1.msra.mxu0 0.0
        %457 = vmatprep.subr.mxu0 0.0
        %458 = vmatpush1.msra.mxu0 0.0
        %459 = vmatprep.subr.mxu0 0.0
        %460 = vmatpush1.msra.mxu0 0.0
        %461 = vmatprep.subr.mxu0 0.0
        %462 = vmatpush1.msra.mxu0 %v421
        %463 = vmatprep.subr.mxu0 0.0
        %464 = vmatpush1.msra.mxu0 %v420
        %465 = vmatprep.subr.mxu0 0.0
        %466 = vmatpush2.msra.mxu0 0.0
        %467 = vmatprep.subr.mxu0 0.0
        %468 = vmatpush2.msra.mxu0 0.0
        %469 = vmatprep.subr.mxu0 0.0
        %470 = vmatpush2.msra.mxu0 0.0
        %471 = vmatprep.subr.mxu0 0.0
        %472 = vmatpush2.msra.mxu0 0.0
        %473 = vmatprep.subr.mxu0 0.0
        %474 = vmatpush2.msra.mxu0 0.0
        %475 = vmatprep.subr.mxu0 0.0
        %476 = vmatpush2.msra.mxu0 0.0
        %477 = vmatprep.subr.mxu0 0.0
        %478 = vmatpush2.msra.mxu0 0.0
        %479 = vmatprep.subr.mxu0 0.0
        %480 = vmatpush2.msra.mxu0 0.0
        %481 = vmatprep.subr.mxu0 0.0
        %482 = vmatpush2.msra.mxu0 0.0
        %483 = vmatprep.subr.mxu0 0.0
        %484 = vmatpush2.msra.mxu0 0.0
        %485 = vmatprep.subr.mxu0 0.0
        %486 = vmatpush2.msra.mxu0 0.0
        %487 = vmatprep.subr.mxu0 0.0
        %488 = vmatpush2.msra.mxu0 0.0
        %489 = vmatprep.subr.mxu0 0.0
        %490 = vmatpush2.msra.mxu0 0.0
        %491 = vmatprep.subr.mxu0 0.0
        %492 = vmatpush2.msra.mxu0 0.0
        %493 = vmatprep.subr.mxu0 0.0
        %494 = vmatpush2.msra.mxu0 0.0
        %495 = vmatprep.subr.mxu0 0.0
        %496 = vmatpush2.msra.mxu0 0.0
        %497 = vmatprep.mubr.f32.mxu0 0.0
        %498 = vmatmul.mubr.f32.gmra.mxu0 %v431
        %v499 = vpop.f32.mrf.mxu0
        %v500 = vadd.f32 %v427, %v499
        %v501 = vpop.f32.mrf.mxu0
        %502 = vdwg.mxu0
        %v503 = vmax.f32 %v500, 0.0
        %v504 = vlaneseq
        %v505 = vand.u32 %v504, 127
        %vm506 = vcmp.lt.s32.totalorder %v505, 0
        %v507 = vsub.s32 0, %v505
        %v508 = vsel %vm506, %v507, %v505
        %v509 = vshrl.u32 %v508, 2
        %v510 = vand.u32 %v508, 3
        %v511 = vsub.s32 0, %v510
        %v512 = vsel %vm506, %v511, %v510
        %vm513 = vcmp.ne.s32.totalorder %v512, 0
        %vm514 = vcmp.lt.s32.totalorder %v512, 0
        %vm515 = vmand %vm514, %vm513
        %v516 = vadd.s32 %v512, 4
        %v517 = vsel %vm515, %v516, %v512
        %v518 = vld [vmem:[%s4] sm:$0xff]
        %520 = vset.pattern.permute.xlu0 5
        %521 = vperm.xlu0 %520, %v518
        %v522 = vpop.permute.xlu0 %521
        %v524 = vmul.f32 %v503, %v522
        %526 = vrot.lane.b32.xlu0 %v503, 5
        %v527 = vpop.permute.xlu0 %526
        %vm529 = vcmask 39936
        %v530 = vsel %vm529, 0.0, %v527
        %vm531 = vcmask 171008
        %v532 = vsel %vm531, %v530, 0.0
        %vm533 = vcmp.gt.s32.totalorder %v517, 0
        %v534 = vsel %vm533, 1, 0
        %vm535 = vcmp.eq.s32.totalorder %v534, 1
        %537 = vrot.lane.b32.xlu0 %v532, 124
        %v538 = vpop.permute.xlu0 %537
        %v540 = vsel %vm535, %v538, 0.0
        %541 = vset.pattern.permute.xlu0 7
        %542 = vperm.xlu0 %541, %v518
        %v543 = vpop.permute.xlu0 %542
        %v545 = vmul.f32 %v540, %v543
        %v546 = vadd.f32 %v524, %v545
        %547 = vset.pattern.permute.xlu0 13
        %548 = vperm.xlu0 %547, %v518
        %v549 = vpop.permute.xlu0 %548
        %v551 = vmul.f32 %v532, %v549
        %553 = vrot.lane.b32.xlu0 %v551, 127
        %v554 = vpop.permute.xlu0 %553
        %v556 = vadd.f32 %v546, %v554
        %v557 = vsel %vm535, %v532, 0.0
        %558 = vset.pattern.permute.xlu0 15
        %559 = vperm.xlu0 %558, %v518
        %v560 = vpop.permute.xlu0 %559
        %v562 = vmul.f32 %v557, %v560
        %v563 = vadd.f32 %v556, %v562
        %vm564 = vcmp.lt.s32.totalorder %v517, 3
        %v565 = vsel %vm564, 1, 0
        %vm566 = vcmp.eq.s32.totalorder %v565, 1
        %567 = vrot.lane.b32.xlu0 %v532, 122
        %v568 = vpop.permute.xlu0 %567
        %v570 = vsel %vm566, %v568, 0.0
        %571 = vset.pattern.permute.xlu0 4
        %572 = vperm.xlu0 %571, %v518
        %v573 = vpop.permute.xlu0 %572
        %v575 = vmul.f32 %v570, %v573
        %576 = vset.pattern.permute.xlu0 6
        %577 = vperm.xlu0 %576, %v518
        %v578 = vpop.permute.xlu0 %577
        %v580 = vmul.f32 %v503, %v578
        %v581 = vadd.f32 %v575, %v580
        %582 = vrot.lane.b32.xlu0 %v532, 126
        %v583 = vpop.permute.xlu0 %582
        %v585 = vsel %vm566, %v583, 0.0
        %586 = vset.pattern.permute.xlu0 12
        %587 = vperm.xlu0 %586, %v518
        %v588 = vpop.permute.xlu0 %587
        %v590 = vmul.f32 %v585, %v588
        %v591 = vadd.f32 %v581, %v590
        %592 = vset.pattern.permute.xlu0 14
        %593 = vperm.xlu0 %592, %v518
        %v594 = vpop.permute.xlu0 %593
        %v596 = vmul.f32 %v532, %v594
        %598 = vrot.lane.b32.xlu0 %v596, 127
        %v599 = vpop.permute.xlu0 %598
        %v601 = vadd.f32 %v591, %v599
        %602 = vset.pattern.permute.xlu0 1
        %603 = vperm.xlu0 %602, %v518
        %v604 = vpop.permute.xlu0 %603
        %v606 = vmul.f32 %v532, %v604
        %607 = vrot.lane.b32.xlu0 %v532, 120
        %v608 = vpop.permute.xlu0 %607
        %v610 = vsel %vm535, %v608, 0.0
        %611 = vset.pattern.permute.xlu0 3
        %612 = vperm.xlu0 %611, %v518
        %v613 = vpop.permute.xlu0 %612
        %v615 = vmul.f32 %v610, %v613
        %617 = vrot.lane.b32.xlu0 %v615, 9
        %v618 = vpop.permute.xlu0 %617
        %v620 = vadd.f32 %v606, %v618
        %621 = vset.pattern.permute.xlu0 9
        %622 = vperm.xlu0 %621, %v518
        %v623 = vpop.permute.xlu0 %622
        %v625 = vmul.f32 %v503, %v623
        %627 = vrot.lane.b32.xlu0 %v625, 9
        %v628 = vpop.permute.xlu0 %627
        %v630 = vadd.f32 %v620, %v628
        %631 = vset.pattern.permute.xlu0 11
        %632 = vperm.xlu0 %631, %v518
        %v633 = vpop.permute.xlu0 %632
        %v635 = vmul.f32 %v540, %v633
        %637 = vrot.lane.b32.xlu0 %v635, 9
        %v638 = vpop.permute.xlu0 %637
        %v640 = vadd.f32 %v630, %v638
        %641 = vrot.lane.b32.xlu0 %v532, 118
        %v642 = vpop.permute.xlu0 %641
        %v644 = vsel %vm566, %v642, 0.0
        %645 = vset.pattern.permute.xlu0 0
        %646 = vperm.xlu0 %645, %v518
        %v647 = vpop.permute.xlu0 %646
        %v649 = vmul.f32 %v644, %v647
        %650 = vset.pattern.permute.xlu0 2
        %651 = vperm.xlu0 %650, %v518
        %v652 = vpop.permute.xlu0 %651
        %v654 = vmul.f32 %v532, %v652
        %656 = vrot.lane.b32.xlu0 %v654, 119
        %v657 = vpop.permute.xlu0 %656
        %v659 = vadd.f32 %v649, %v657
        %660 = vset.pattern.permute.xlu0 8
        %661 = vperm.xlu0 %660, %v518
        %v662 = vpop.permute.xlu0 %661
        %v664 = vmul.f32 %v570, %v662
        %v665 = vadd.f32 %v659, %v664
        %666 = vset.pattern.permute.xlu0 10
        %667 = vperm.xlu0 %666, %v518
        %v668 = vpop.permute.xlu0 %667
        %v670 = vmul.f32 %v503, %v668
        %v671 = vadd.f32 %v665, %v670
        %v672 = vld [vmem:[#allocation7] sm:$0xff]
        %v673 = vld [vmem:[#allocation7 + $0x8] sm:$0xff]
        %s674 = scalar_lea.vmem [#allocation7], 16
        %v675 = vld [vmem:[%s674] sm:$0xff]
        %v676 = vld [vmem:[%s674 + $0x8] sm:$0xff]
        %v678 = vsel %vm429, %v601, 0
        %680 = vmatprep.subr.mxu0 0.0
        %681 = vmatpush1.msra.mxu0 0.0
        %682 = vmatprep.subr.mxu0 0.0
        %683 = vmatpush1.msra.mxu0 0.0
        %684 = vmatprep.subr.mxu0 0.0
        %685 = vmatpush1.msra.mxu0 0.0
        %686 = vmatprep.subr.mxu0 0.0
        %687 = vmatpush1.msra.mxu0 0.0
        %688 = vmatprep.subr.mxu0 0.0
        %689 = vmatpush1.msra.mxu0 0.0
        %690 = vmatprep.subr.mxu0 0.0
        %691 = vmatpush1.msra.mxu0 0.0
        %692 = vmatprep.subr.mxu0 0.0
        %693 = vmatpush1.msra.mxu0 0.0
        %694 = vmatprep.subr.mxu0 0.0
        %695 = vmatpush1.msra.mxu0 0.0
        %696 = vmatprep.subr.mxu0 0.0
        %697 = vmatpush1.msra.mxu0 0.0
        %698 = vmatprep.subr.mxu0 0.0
        %699 = vmatpush1.msra.mxu0 0.0
        %700 = vmatprep.subr.mxu0 0.0
        %701 = vmatpush1.msra.mxu0 0.0
        %702 = vmatprep.subr.mxu0 0.0
        %703 = vmatpush1.msra.mxu0 0.0
        %704 = vmatprep.subr.mxu0 0.0
        %705 = vmatpush1.msra.mxu0 0.0
        %706 = vmatprep.subr.mxu0 0.0
        %707 = vmatpush1.msra.mxu0 0.0
        %708 = vmatprep.subr.mxu0 0.0
        %709 = vmatpush1.msra.mxu0 %v676
        %710 = vmatprep.subr.mxu0 0.0
        %711 = vmatpush1.msra.mxu0 %v675
        %712 = vmatprep.subr.mxu0 0.0
        %713 = vmatpush2.msra.mxu0 0.0
        %714 = vmatprep.subr.mxu0 0.0
        %715 = vmatpush2.msra.mxu0 0.0
        %716 = vmatprep.subr.mxu0 0.0
        %717 = vmatpush2.msra.mxu0 0.0
        %718 = vmatprep.subr.mxu0 0.0
        %719 = vmatpush2.msra.mxu0 0.0
        %720 = vmatprep.subr.mxu0 0.0
        %721 = vmatpush2.msra.mxu0 0.0
        %722 = vmatprep.subr.mxu0 0.0
        %723 = vmatpush2.msra.mxu0 0.0
        %724 = vmatprep.subr.mxu0 0.0
        %725 = vmatpush2.msra.mxu0 0.0
        %726 = vmatprep.subr.mxu0 0.0
        %727 = vmatpush2.msra.mxu0 0.0
        %728 = vmatprep.subr.mxu0 0.0
        %729 = vmatpush2.msra.mxu0 0.0
        %730 = vmatprep.subr.mxu0 0.0
        %731 = vmatpush2.msra.mxu0 0.0
        %732 = vmatprep.subr.mxu0 0.0
        %733 = vmatpush2.msra.mxu0 0.0
        %734 = vmatprep.subr.mxu0 0.0
        %735 = vmatpush2.msra.mxu0 0.0
        %736 = vmatprep.subr.mxu0 0.0
        %737 = vmatpush2.msra.mxu0 0.0
        %738 = vmatprep.subr.mxu0 0.0
        %739 = vmatpush2.msra.mxu0 0.0
        %740 = vmatprep.subr.mxu0 0.0
        %741 = vmatpush2.msra.mxu0 0.0
        %742 = vmatprep.subr.mxu0 0.0
        %743 = vmatpush2.msra.mxu0 0.0
        %744 = vmatprep.mubr.f32.mxu0 0.0
        %745 = vmatmul.mubr.f32.gmra.mxu0 %v678
        %v746 = vpop.f32.mrf.mxu0
        %v747 = vadd.f32 0.0, %v746
        %v748 = vpop.f32.mrf.mxu0
        %749 = vdwg.mxu0
        %v751 = vsel %vm429, %v563, 0
        %753 = vmatprep.subr.mxu0 0.0
        %754 = vmatpush1.msra.mxu0 0.0
        %755 = vmatprep.subr.mxu0 0.0
        %756 = vmatpush1.msra.mxu0 0.0
        %757 = vmatprep.subr.mxu0 0.0
        %758 = vmatpush1.msra.mxu0 0.0
        %759 = vmatprep.subr.mxu0 0.0
        %760 = vmatpush1.msra.mxu0 0.0
        %761 = vmatprep.subr.mxu0 0.0
        %762 = vmatpush1.msra.mxu0 0.0
        %763 = vmatprep.subr.mxu0 0.0
        %764 = vmatpush1.msra.mxu0 0.0
        %765 = vmatprep.subr.mxu0 0.0
        %766 = vmatpush1.msra.mxu0 0.0
        %767 = vmatprep.subr.mxu0 0.0
        %768 = vmatpush1.msra.mxu0 0.0
        %769 = vmatprep.subr.mxu0 0.0
        %770 = vmatpush1.msra.mxu0 0.0
        %771 = vmatprep.subr.mxu0 0.0
        %772 = vmatpush1.msra.mxu0 0.0
        %773 = vmatprep.subr.mxu0 0.0
        %774 = vmatpush1.msra.mxu0 0.0
        %775 = vmatprep.subr.mxu0 0.0
        %776 = vmatpush1.msra.mxu0 0.0
        %777 = vmatprep.subr.mxu0 0.0
        %778 = vmatpush1.msra.mxu0 0.0
        %779 = vmatprep.subr.mxu0 0.0
        %780 = vmatpush1.msra.mxu0 0.0
        %781 = vmatprep.subr.mxu0 0.0
        %782 = vmatpush1.msra.mxu0 %v673
        %783 = vmatprep.subr.mxu0 0.0
        %784 = vmatpush1.msra.mxu0 %v672
        %785 = vmatprep.subr.mxu0 0.0
        %786 = vmatpush2.msra.mxu0 0.0
        %787 = vmatprep.subr.mxu0 0.0
        %788 = vmatpush2.msra.mxu0 0.0
        %789 = vmatprep.subr.mxu0 0.0
        %790 = vmatpush2.msra.mxu0 0.0
        %791 = vmatprep.subr.mxu0 0.0
        %792 = vmatpush2.msra.mxu0 0.0
        %793 = vmatprep.subr.mxu0 0.0
        %794 = vmatpush2.msra.mxu0 0.0
        %795 = vmatprep.subr.mxu0 0.0
        %796 = vmatpush2.msra.mxu0 0.0
        %797 = vmatprep.subr.mxu0 0.0
        %798 = vmatpush2.msra.mxu0 0.0
        %799 = vmatprep.subr.mxu0 0.0
        %800 = vmatpush2.msra.mxu0 0.0
        %801 = vmatprep.subr.mxu0 0.0
        %802 = vmatpush2.msra.mxu0 0.0
        %803 = vmatprep.subr.mxu0 0.0
        %804 = vmatpush2.msra.mxu0 0.0
        %805 = vmatprep.subr.mxu0 0.0
        %806 = vmatpush2.msra.mxu0 0.0
        %807 = vmatprep.subr.mxu0 0.0
        %808 = vmatpush2.msra.mxu0 0.0
        %809 = vmatprep.subr.mxu0 0.0
        %810 = vmatpush2.msra.mxu0 0.0
        %811 = vmatprep.subr.mxu0 0.0
        %812 = vmatpush2.msra.mxu0 0.0
        %813 = vmatprep.subr.mxu0 0.0
        %814 = vmatpush2.msra.mxu0 0.0
        %815 = vmatprep.subr.mxu0 0.0
        %816 = vmatpush2.msra.mxu0 0.0
        %817 = vmatprep.mubr.f32.mxu0 0.0
        %818 = vmatmul.mubr.f32.gmra.mxu0 %v751
        %v819 = vpop.f32.mrf.mxu0
        %v820 = vadd.f32 %v747, %v819
        %v821 = vpop.f32.mrf.mxu0
        %822 = vdwg.mxu0
        %s823 = scalar_lea.vmem [#allocation7], 32
        %v824 = vld [vmem:[%s823] sm:$0xff]
        %v825 = vld [vmem:[%s823 + $0x8] sm:$0xff]
        %827 = vrot.lane.b32.xlu0 %v640, 119
        %v828 = vpop.permute.xlu0 %827
        %v829 = vsel %vm429, %v828, 0
        %831 = vmatprep.subr.mxu0 0.0
        %832 = vmatpush1.msra.mxu0 0.0
        %833 = vmatprep.subr.mxu0 0.0
        %834 = vmatpush1.msra.mxu0 0.0
        %835 = vmatprep.subr.mxu0 0.0
        %836 = vmatpush1.msra.mxu0 0.0
        %837 = vmatprep.subr.mxu0 0.0
        %838 = vmatpush1.msra.mxu0 0.0
        %839 = vmatprep.subr.mxu0 0.0
        %840 = vmatpush1.msra.mxu0 0.0
        %841 = vmatprep.subr.mxu0 0.0
        %842 = vmatpush1.msra.mxu0 0.0
        %843 = vmatprep.subr.mxu0 0.0
        %844 = vmatpush1.msra.mxu0 0.0
        %845 = vmatprep.subr.mxu0 0.0
        %846 = vmatpush1.msra.mxu0 0.0
        %847 = vmatprep.subr.mxu0 0.0
        %848 = vmatpush1.msra.mxu0 0.0
        %849 = vmatprep.subr.mxu0 0.0
        %850 = vmatpush1.msra.mxu0 0.0
        %851 = vmatprep.subr.mxu0 0.0
        %852 = vmatpush1.msra.mxu0 0.0
        %853 = vmatprep.subr.mxu0 0.0
        %854 = vmatpush1.msra.mxu0 0.0
        %855 = vmatprep.subr.mxu0 0.0
        %856 = vmatpush1.msra.mxu0 0.0
        %857 = vmatprep.subr.mxu0 0.0
        %858 = vmatpush1.msra.mxu0 0.0
        %859 = vmatprep.subr.mxu0 0.0
        %860 = vmatpush1.msra.mxu0 %v825
        %861 = vmatprep.subr.mxu0 0.0
        %862 = vmatpush1.msra.mxu0 %v824
        %863 = vmatprep.subr.mxu0 0.0
        %864 = vmatpush2.msra.mxu0 0.0
        %865 = vmatprep.subr.mxu0 0.0
        %866 = vmatpush2.msra.mxu0 0.0
        %867 = vmatprep.subr.mxu0 0.0
        %868 = vmatpush2.msra.mxu0 0.0
        %869 = vmatprep.subr.mxu0 0.0
        %870 = vmatpush2.msra.mxu0 0.0
        %871 = vmatprep.subr.mxu0 0.0
        %872 = vmatpush2.msra.mxu0 0.0
        %873 = vmatprep.subr.mxu0 0.0
        %874 = vmatpush2.msra.mxu0 0.0
        %875 = vmatprep.subr.mxu0 0.0
        %876 = vmatpush2.msra.mxu0 0.0
        %877 = vmatprep.subr.mxu0 0.0
        %878 = vmatpush2.msra.mxu0 0.0
        %879 = vmatprep.subr.mxu0 0.0
        %880 = vmatpush2.msra.mxu0 0.0
        %881 = vmatprep.subr.mxu0 0.0
        %882 = vmatpush2.msra.mxu0 0.0
        %883 = vmatprep.subr.mxu0 0.0
        %884 = vmatpush2.msra.mxu0 0.0
        %885 = vmatprep.subr.mxu0 0.0
        %886 = vmatpush2.msra.mxu0 0.0
        %887 = vmatprep.subr.mxu0 0.0
        %888 = vmatpush2.msra.mxu0 0.0
        %889 = vmatprep.subr.mxu0 0.0
        %890 = vmatpush2.msra.mxu0 0.0
        %891 = vmatprep.subr.mxu0 0.0
        %892 = vmatpush2.msra.mxu0 0.0
        %893 = vmatprep.subr.mxu0 0.0
        %894 = vmatpush2.msra.mxu0 0.0
        %895 = vmatprep.mubr.f32.mxu0 0.0
        %896 = vmatmul.mubr.f32.gmra.mxu0 %v829
        %v897 = vpop.f32.mrf.mxu0
        %v898 = vadd.f32 0.0, %v897
        %v899 = vpop.f32.mrf.mxu0
        %900 = vdwg.mxu0
        %v901 = vadd.f32 %v820, %v898
        %s902 = scalar_lea.vmem [#allocation7], 48
        %v903 = vld [vmem:[%s902] sm:$0xff]
        %v904 = vld [vmem:[%s902 + $0x8] sm:$0xff]
        %v906 = vsel %vm429, %v671, 0
        %908 = vmatprep.subr.mxu0 0.0
        %909 = vmatpush1.msra.mxu0 0.0
        %910 = vmatprep.subr.mxu0 0.0
        %911 = vmatpush1.msra.mxu0 0.0
        %912 = vmatprep.subr.mxu0 0.0
        %913 = vmatpush1.msra.mxu0 0.0
        %914 = vmatprep.subr.mxu0 0.0
        %915 = vmatpush1.msra.mxu0 0.0
        %916 = vmatprep.subr.mxu0 0.0
        %917 = vmatpush1.msra.mxu0 0.0
        %918 = vmatprep.subr.mxu0 0.0
        %919 = vmatpush1.msra.mxu0 0.0
        %920 = vmatprep.subr.mxu0 0.0
        %921 = vmatpush1.msra.mxu0 0.0
        %922 = vmatprep.subr.mxu0 0.0
        %923 = vmatpush1.msra.mxu0 0.0
        %924 = vmatprep.subr.mxu0 0.0
        %925 = vmatpush1.msra.mxu0 0.0
        %926 = vmatprep.subr.mxu0 0.0
        %927 = vmatpush1.msra.mxu0 0.0
        %928 = vmatprep.subr.mxu0 0.0
        %929 = vmatpush1.msra.mxu0 0.0
        %930 = vmatprep.subr.mxu0 0.0
        %931 = vmatpush1.msra.mxu0 0.0
        %932 = vmatprep.subr.mxu0 0.0
        %933 = vmatpush1.msra.mxu0 0.0
        %934 = vmatprep.subr.mxu0 0.0
        %935 = vmatpush1.msra.mxu0 0.0
        %936 = vmatprep.subr.mxu0 0.0
        %937 = vmatpush1.msra.mxu0 %v904
        %938 = vmatprep.subr.mxu0 0.0
        %939 = vmatpush1.msra.mxu0 %v903
        %940 = vmatprep.subr.mxu0 0.0
        %941 = vmatpush2.msra.mxu0 0.0
        %942 = vmatprep.subr.mxu0 0.0
        %943 = vmatpush2.msra.mxu0 0.0
        %944 = vmatprep.subr.mxu0 0.0
        %945 = vmatpush2.msra.mxu0 0.0
        %946 = vmatprep.subr.mxu0 0.0
        %947 = vmatpush2.msra.mxu0 0.0
        %948 = vmatprep.subr.mxu0 0.0
        %949 = vmatpush2.msra.mxu0 0.0
        %950 = vmatprep.subr.mxu0 0.0
        %951 = vmatpush2.msra.mxu0 0.0
        %952 = vmatprep.subr.mxu0 0.0
        %953 = vmatpush2.msra.mxu0 0.0
        %954 = vmatprep.subr.mxu0 0.0
        %955 = vmatpush2.msra.mxu0 0.0
        %956 = vmatprep.subr.mxu0 0.0
        %957 = vmatpush2.msra.mxu0 0.0
        %958 = vmatprep.subr.mxu0 0.0
        %959 = vmatpush2.msra.mxu0 0.0
        %960 = vmatprep.subr.mxu0 0.0
        %961 = vmatpush2.msra.mxu0 0.0
        %962 = vmatprep.subr.mxu0 0.0
        %963 = vmatpush2.msra.mxu0 0.0
        %964 = vmatprep.subr.mxu0 0.0
        %965 = vmatpush2.msra.mxu0 0.0
        %966 = vmatprep.subr.mxu0 0.0
        %967 = vmatpush2.msra.mxu0 0.0
        %968 = vmatprep.subr.mxu0 0.0
        %969 = vmatpush2.msra.mxu0 0.0
        %970 = vmatprep.subr.mxu0 0.0
        %971 = vmatpush2.msra.mxu0 0.0
        %972 = vmatprep.mubr.f32.mxu0 0.0
        %973 = vmatmul.mubr.f32.gmra.mxu0 %v906
        %v974 = vpop.f32.mrf.mxu0
        %v975 = vadd.f32 0.0, %v974
        %v976 = vpop.f32.mrf.mxu0
        %977 = vdwg.mxu0
        %v978 = vadd.f32 %v901, %v975
        %v979 = vld [vmem:[%s419] sm:$0xff]
        %vm980 = vcmp.lt.s32.totalorder %v505, 0
        %v981 = vsub.s32 0, %v505
        %v982 = vsel %vm980, %v981, %v505
        %v983 = vshrl.u32 %v982, 3
        %v984 = vand.u32 %v982, 7
        %v985 = vsub.s32 0, %v984
        %v986 = vsel %vm980, %v985, %v984
        %vm987 = vcmp.ne.s32.totalorder %v986, 0
        %vm988 = vcmp.lt.s32.totalorder %v986, 0
        %vm989 = vmand %vm988, %vm987
        %v990 = vadd.s32 %v986, 8
        %v991 = vsel %vm989, %v990, %v986
        %v992 = vld [vmem:[#allocation8] sm:$0xff]
        %v993 = vld [vmem:[#allocation10] sm:$0xff]
        %995 = vrot.lane.b32.xlu0 %v979, 9
        %v996 = vpop.permute.xlu0 %995
        %vm998 = vcmask 72704
        %v999 = vsel %vm998, 0.0, %v996
        %vm1000 = vcmask 596992
        %v1001 = vsel %vm1000, %v999, 0.0
        %vm1002 = vcmp.gt.s32.totalorder %v991, 0
        %v1003 = vsel %vm1002, 1, 0
        %vm1004 = vcmp.eq.s32.totalorder %v1003, 1
        %v1005 = vsel %vm1004, %v1001, 0.0
        %1007 = vrot.lane.b32.xlu0 %v978, 9
        %v1008 = vpop.permute.xlu0 %1007
        %v1010 = vsel %vm998, 0.0, %v1008
        %v1011 = vsel %vm1000, %v1010, 0.0
        %v1012 = vsel %vm1004, %v1011, 0.0
        %vm1013 = vcmask 64512
        %v1015 = vsel %vm1013, %v993, 0
        %1017 = vmatprep.subr.mxu0 0.0
        %1018 = vmatpush1.msra.mxu0 0.0
        %1019 = vmatprep.subr.mxu0 0.0
        %1020 = vmatpush1.msra.mxu0 0.0
        %1021 = vmatprep.subr.mxu0 0.0
        %1022 = vmatpush1.msra.mxu0 0.0
        %1023 = vmatprep.subr.mxu0 0.0
        %1024 = vmatpush1.msra.mxu0 0.0
        %1025 = vmatprep.subr.mxu0 0.0
        %1026 = vmatpush1.msra.mxu0 0.0
        %1027 = vmatprep.subr.mxu0 0.0
        %1028 = vmatpush1.msra.mxu0 0.0
        %1029 = vmatprep.subr.mxu0 0.0
        %1030 = vmatpush1.msra.mxu0 0.0
        %1031 = vmatprep.subr.mxu0 0.0
        %1032 = vmatpush1.msra.mxu0 0.0
        %1033 = vmatprep.subr.mxu0 0.0
        %1034 = vmatpush1.msra.mxu0 0.0
        %1035 = vmatprep.subr.mxu0 0.0
        %1036 = vmatpush1.msra.mxu0 0.0
        %1037 = vmatprep.subr.mxu0 0.0
        %1038 = vmatpush1.msra.mxu0 0.0
        %1039 = vmatprep.subr.mxu0 0.0
        %1040 = vmatpush1.msra.mxu0 0.0
        %1041 = vmatprep.subr.mxu0 0.0
        %1042 = vmatpush1.msra.mxu0 0.0
        %1043 = vmatprep.subr.mxu0 0.0
        %1044 = vmatpush1.msra.mxu0 0.0
        %1045 = vmatprep.subr.mxu0 0.0
        %1046 = vmatpush1.msra.mxu0 0.0
        %1047 = vmatprep.subr.mxu0 0.0
        %1048 = vmatpush1.msra.mxu0 %v1012
        %1049 = vmatprep.subr.mxu0 0.0
        %1050 = vmatpush2.msra.mxu0 0.0
        %1051 = vmatprep.subr.mxu0 0.0
        %1052 = vmatpush2.msra.mxu0 0.0
        %1053 = vmatprep.subr.mxu0 0.0
        %1054 = vmatpush2.msra.mxu0 0.0
        %1055 = vmatprep.subr.mxu0 0.0
        %1056 = vmatpush2.msra.mxu0 0.0
        %1057 = vmatprep.subr.mxu0 0.0
        %1058 = vmatpush2.msra.mxu0 0.0
        %1059 = vmatprep.subr.mxu0 0.0
        %1060 = vmatpush2.msra.mxu0 0.0
        %1061 = vmatprep.subr.mxu0 0.0
        %1062 = vmatpush2.msra.mxu0 0.0
        %1063 = vmatprep.subr.mxu0 0.0
        %1064 = vmatpush2.msra.mxu0 0.0
        %1065 = vmatprep.subr.mxu0 0.0
        %1066 = vmatpush2.msra.mxu0 0.0
        %1067 = vmatprep.subr.mxu0 0.0
        %1068 = vmatpush2.msra.mxu0 0.0
        %1069 = vmatprep.subr.mxu0 0.0
        %1070 = vmatpush2.msra.mxu0 0.0
        %1071 = vmatprep.subr.mxu0 0.0
        %1072 = vmatpush2.msra.mxu0 0.0
        %1073 = vmatprep.subr.mxu0 0.0
        %1074 = vmatpush2.msra.mxu0 0.0
        %1075 = vmatprep.subr.mxu0 0.0
        %1076 = vmatpush2.msra.mxu0 0.0
        %1077 = vmatprep.subr.mxu0 0.0
        %1078 = vmatpush2.msra.mxu0 0.0
        %1079 = vmatprep.subr.mxu0 0.0
        %1080 = vmatpush2.msra.mxu0 0.0
        %1081 = vmatprep.mubr.f32.mxu0 0.0
        %1082 = vmatmul.mubr.f32.gmra.mxu0 %v1015
        %v1083 = vpop.f32.mrf.mxu0
        %v1084 = vadd.f32 0.0, %v1083
        %v1085 = vpop.f32.mrf.mxu0
        %1086 = vdwg.mxu0
        %v1088 = vsel %vm1013, %v992, 0
        %1090 = vmatprep.subr.mxu0 0.0
        %1091 = vmatpush1.msra.mxu0 0.0
        %1092 = vmatprep.subr.mxu0 0.0
        %1093 = vmatpush1.msra.mxu0 0.0
        %1094 = vmatprep.subr.mxu0 0.0
        %1095 = vmatpush1.msra.mxu0 0.0
        %1096 = vmatprep.subr.mxu0 0.0
        %1097 = vmatpush1.msra.mxu0 0.0
        %1098 = vmatprep.subr.mxu0 0.0
        %1099 = vmatpush1.msra.mxu0 0.0
        %1100 = vmatprep.subr.mxu0 0.0
        %1101 = vmatpush1.msra.mxu0 0.0
        %1102 = vmatprep.subr.mxu0 0.0
        %1103 = vmatpush1.msra.mxu0 0.0
        %1104 = vmatprep.subr.mxu0 0.0
        %1105 = vmatpush1.msra.mxu0 0.0
        %1106 = vmatprep.subr.mxu0 0.0
        %1107 = vmatpush1.msra.mxu0 0.0
        %1108 = vmatprep.subr.mxu0 0.0
        %1109 = vmatpush1.msra.mxu0 0.0
        %1110 = vmatprep.subr.mxu0 0.0
        %1111 = vmatpush1.msra.mxu0 0.0
        %1112 = vmatprep.subr.mxu0 0.0
        %1113 = vmatpush1.msra.mxu0 0.0
        %1114 = vmatprep.subr.mxu0 0.0
        %1115 = vmatpush1.msra.mxu0 0.0
        %1116 = vmatprep.subr.mxu0 0.0
        %1117 = vmatpush1.msra.mxu0 0.0
        %1118 = vmatprep.subr.mxu0 0.0
        %1119 = vmatpush1.msra.mxu0 0.0
        %1120 = vmatprep.subr.mxu0 0.0
        %1121 = vmatpush1.msra.mxu0 %v1005
        %1122 = vmatprep.subr.mxu0 0.0
        %1123 = vmatpush2.msra.mxu0 0.0
        %1124 = vmatprep.subr.mxu0 0.0
        %1125 = vmatpush2.msra.mxu0 0.0
        %1126 = vmatprep.subr.mxu0 0.0
        %1127 = vmatpush2.msra.mxu0 0.0
        %1128 = vmatprep.subr.mxu0 0.0
        %1129 = vmatpush2.msra.mxu0 0.0
        %1130 = vmatprep.subr.mxu0 0.0
        %1131 = vmatpush2.msra.mxu0 0.0
        %1132 = vmatprep.subr.mxu0 0.0
        %1133 = vmatpush2.msra.mxu0 0.0
        %1134 = vmatprep.subr.mxu0 0.0
        %1135 = vmatpush2.msra.mxu0 0.0
        %1136 = vmatprep.subr.mxu0 0.0
        %1137 = vmatpush2.msra.mxu0 0.0
        %1138 = vmatprep.subr.mxu0 0.0
        %1139 = vmatpush2.msra.mxu0 0.0
        %1140 = vmatprep.subr.mxu0 0.0
        %1141 = vmatpush2.msra.mxu0 0.0
        %1142 = vmatprep.subr.mxu0 0.0
        %1143 = vmatpush2.msra.mxu0 0.0
        %1144 = vmatprep.subr.mxu0 0.0
        %1145 = vmatpush2.msra.mxu0 0.0
        %1146 = vmatprep.subr.mxu0 0.0
        %1147 = vmatpush2.msra.mxu0 0.0
        %1148 = vmatprep.subr.mxu0 0.0
        %1149 = vmatpush2.msra.mxu0 0.0
        %1150 = vmatprep.subr.mxu0 0.0
        %1151 = vmatpush2.msra.mxu0 0.0
        %1152 = vmatprep.subr.mxu0 0.0
        %1153 = vmatpush2.msra.mxu0 0.0
        %1154 = vmatprep.mubr.f32.mxu0 0.0
        %1155 = vmatmul.mubr.f32.gmra.mxu0 %v1088
        %v1156 = vpop.f32.mrf.mxu0
        %v1157 = vadd.f32 %v1084, %v1156
        %v1158 = vpop.f32.mrf.mxu0
        %1159 = vdwg.mxu0
        %1160 = vrot.lane.b32.xlu0 %v992, 120
        %v1161 = vpop.permute.xlu0 %1160
        %1163 = vrot.lane.b32.xlu0 %v1001, 127
        %v1164 = vpop.permute.xlu0 %1163
        %v1166 = vsel %vm1013, %v1161, 0
        %1168 = vmatprep.subr.mxu0 0.0
        %1169 = vmatpush1.msra.mxu0 0.0
        %1170 = vmatprep.subr.mxu0 0.0
        %1171 = vmatpush1.msra.mxu0 0.0
        %1172 = vmatprep.subr.mxu0 0.0
        %1173 = vmatpush1.msra.mxu0 0.0
        %1174 = vmatprep.subr.mxu0 0.0
        %1175 = vmatpush1.msra.mxu0 0.0
        %1176 = vmatprep.subr.mxu0 0.0
        %1177 = vmatpush1.msra.mxu0 0.0
        %1178 = vmatprep.subr.mxu0 0.0
        %1179 = vmatpush1.msra.mxu0 0.0
        %1180 = vmatprep.subr.mxu0 0.0
        %1181 = vmatpush1.msra.mxu0 0.0
        %1182 = vmatprep.subr.mxu0 0.0
        %1183 = vmatpush1.msra.mxu0 0.0
        %1184 = vmatprep.subr.mxu0 0.0
        %1185 = vmatpush1.msra.mxu0 0.0
        %1186 = vmatprep.subr.mxu0 0.0
        %1187 = vmatpush1.msra.mxu0 0.0
        %1188 = vmatprep.subr.mxu0 0.0
        %1189 = vmatpush1.msra.mxu0 0.0
        %1190 = vmatprep.subr.mxu0 0.0
        %1191 = vmatpush1.msra.mxu0 0.0
        %1192 = vmatprep.subr.mxu0 0.0
        %1193 = vmatpush1.msra.mxu0 0.0
        %1194 = vmatprep.subr.mxu0 0.0
        %1195 = vmatpush1.msra.mxu0 0.0
        %1196 = vmatprep.subr.mxu0 0.0
        %1197 = vmatpush1.msra.mxu0 0.0
        %1198 = vmatprep.subr.mxu0 0.0
        %1199 = vmatpush1.msra.mxu0 %v1164
        %1200 = vmatprep.subr.mxu0 0.0
        %1201 = vmatpush2.msra.mxu0 0.0
        %1202 = vmatprep.subr.mxu0 0.0
        %1203 = vmatpush2.msra.mxu0 0.0
        %1204 = vmatprep.subr.mxu0 0.0
        %1205 = vmatpush2.msra.mxu0 0.0
        %1206 = vmatprep.subr.mxu0 0.0
        %1207 = vmatpush2.msra.mxu0 0.0
        %1208 = vmatprep.subr.mxu0 0.0
        %1209 = vmatpush2.msra.mxu0 0.0
        %1210 = vmatprep.subr.mxu0 0.0
        %1211 = vmatpush2.msra.mxu0 0.0
        %1212 = vmatprep.subr.mxu0 0.0
        %1213 = vmatpush2.msra.mxu0 0.0
        %1214 = vmatprep.subr.mxu0 0.0
        %1215 = vmatpush2.msra.mxu0 0.0
        %1216 = vmatprep.subr.mxu0 0.0
        %1217 = vmatpush2.msra.mxu0 0.0
        %1218 = vmatprep.subr.mxu0 0.0
        %1219 = vmatpush2.msra.mxu0 0.0
        %1220 = vmatprep.subr.mxu0 0.0
        %1221 = vmatpush2.msra.mxu0 0.0
        %1222 = vmatprep.subr.mxu0 0.0
        %1223 = vmatpush2.msra.mxu0 0.0
        %1224 = vmatprep.subr.mxu0 0.0
        %1225 = vmatpush2.msra.mxu0 0.0
        %1226 = vmatprep.subr.mxu0 0.0
        %1227 = vmatpush2.msra.mxu0 0.0
        %1228 = vmatprep.subr.mxu0 0.0
        %1229 = vmatpush2.msra.mxu0 0.0
        %1230 = vmatprep.subr.mxu0 0.0
        %1231 = vmatpush2.msra.mxu0 0.0
        %1232 = vmatprep.mubr.f32.mxu0 0.0
        %1233 = vmatmul.mubr.f32.gmra.mxu0 %v1166
        %v1234 = vpop.f32.mrf.mxu0
        %v1235 = vadd.f32 0.0, %v1234
        %v1236 = vpop.f32.mrf.mxu0
        %1237 = vdwg.mxu0
        %v1238 = vadd.f32 %v1157, %v1235
        %1239 = vrot.lane.b32.xlu0 %v993, 120
        %v1240 = vpop.permute.xlu0 %1239
        %1242 = vrot.lane.b32.xlu0 %v1011, 127
        %v1243 = vpop.permute.xlu0 %1242
        %v1245 = vsel %vm1013, %v1240, 0
        %1247 = vmatprep.subr.mxu0 0.0
        %1248 = vmatpush1.msra.mxu0 0.0
        %1249 = vmatprep.subr.mxu0 0.0
        %1250 = vmatpush1.msra.mxu0 0.0
        %1251 = vmatprep.subr.mxu0 0.0
        %1252 = vmatpush1.msra.mxu0 0.0
        %1253 = vmatprep.subr.mxu0 0.0
        %1254 = vmatpush1.msra.mxu0 0.0
        %1255 = vmatprep.subr.mxu0 0.0
        %1256 = vmatpush1.msra.mxu0 0.0
        %1257 = vmatprep.subr.mxu0 0.0
        %1258 = vmatpush1.msra.mxu0 0.0
        %1259 = vmatprep.subr.mxu0 0.0
        %1260 = vmatpush1.msra.mxu0 0.0
        %1261 = vmatprep.subr.mxu0 0.0
        %1262 = vmatpush1.msra.mxu0 0.0
        %1263 = vmatprep.subr.mxu0 0.0
        %1264 = vmatpush1.msra.mxu0 0.0
        %1265 = vmatprep.subr.mxu0 0.0
        %1266 = vmatpush1.msra.mxu0 0.0
        %1267 = vmatprep.subr.mxu0 0.0
        %1268 = vmatpush1.msra.mxu0 0.0
        %1269 = vmatprep.subr.mxu0 0.0
        %1270 = vmatpush1.msra.mxu0 0.0
        %1271 = vmatprep.subr.mxu0 0.0
        %1272 = vmatpush1.msra.mxu0 0.0
        %1273 = vmatprep.subr.mxu0 0.0
        %1274 = vmatpush1.msra.mxu0 0.0
        %1275 = vmatprep.subr.mxu0 0.0
        %1276 = vmatpush1.msra.mxu0 0.0
        %1277 = vmatprep.subr.mxu0 0.0
        %1278 = vmatpush1.msra.mxu0 %v1243
        %1279 = vmatprep.subr.mxu0 0.0
        %1280 = vmatpush2.msra.mxu0 0.0
        %1281 = vmatprep.subr.mxu0 0.0
        %1282 = vmatpush2.msra.mxu0 0.0
        %1283 = vmatprep.subr.mxu0 0.0
        %1284 = vmatpush2.msra.mxu0 0.0
        %1285 = vmatprep.subr.mxu0 0.0
        %1286 = vmatpush2.msra.mxu0 0.0
        %1287 = vmatprep.subr.mxu0 0.0
        %1288 = vmatpush2.msra.mxu0 0.0
        %1289 = vmatprep.subr.mxu0 0.0
        %1290 = vmatpush2.msra.mxu0 0.0
        %1291 = vmatprep.subr.mxu0 0.0
        %1292 = vmatpush2.msra.mxu0 0.0
        %1293 = vmatprep.subr.mxu0 0.0
        %1294 = vmatpush2.msra.mxu0 0.0
        %1295 = vmatprep.subr.mxu0 0.0
        %1296 = vmatpush2.msra.mxu0 0.0
        %1297 = vmatprep.subr.mxu0 0.0
        %1298 = vmatpush2.msra.mxu0 0.0
        %1299 = vmatprep.subr.mxu0 0.0
        %1300 = vmatpush2.msra.mxu0 0.0
        %1301 = vmatprep.subr.mxu0 0.0
        %1302 = vmatpush2.msra.mxu0 0.0
        %1303 = vmatprep.subr.mxu0 0.0
        %1304 = vmatpush2.msra.mxu0 0.0
        %1305 = vmatprep.subr.mxu0 0.0
        %1306 = vmatpush2.msra.mxu0 0.0
        %1307 = vmatprep.subr.mxu0 0.0
        %1308 = vmatpush2.msra.mxu0 0.0
        %1309 = vmatprep.subr.mxu0 0.0
        %1310 = vmatpush2.msra.mxu0 0.0
        %1311 = vmatprep.mubr.f32.mxu0 0.0
        %1312 = vmatmul.mubr.f32.gmra.mxu0 %v1245
        %v1313 = vpop.f32.mrf.mxu0
        %v1314 = vadd.f32 0.0, %v1313
        %v1315 = vpop.f32.mrf.mxu0
        %1316 = vdwg.mxu0
        %v1317 = vadd.f32 %v1238, %v1314
        %vm1318 = vcmp.lt.s32.totalorder %v991, 7
        %v1319 = vsel %vm1318, 1, 0
        %vm1320 = vcmp.eq.s32.totalorder %v1319, 1
        %1321 = vrot.lane.b32.xlu0 %v1001, 126
        %v1322 = vpop.permute.xlu0 %1321
        %v1324 = vsel %vm1320, %v1322, 0.0
        %1325 = vrot.lane.b32.xlu0 %v992, 112
        %v1326 = vpop.permute.xlu0 %1325
        %v1327 = vsel %vm1013, %v1326, 0
        %1329 = vmatprep.subr.mxu0 0.0
        %1330 = vmatpush1.msra.mxu0 0.0
        %1331 = vmatprep.subr.mxu0 0.0
        %1332 = vmatpush1.msra.mxu0 0.0
        %1333 = vmatprep.subr.mxu0 0.0
        %1334 = vmatpush1.msra.mxu0 0.0
        %1335 = vmatprep.subr.mxu0 0.0
        %1336 = vmatpush1.msra.mxu0 0.0
        %1337 = vmatprep.subr.mxu0 0.0
        %1338 = vmatpush1.msra.mxu0 0.0
        %1339 = vmatprep.subr.mxu0 0.0
        %1340 = vmatpush1.msra.mxu0 0.0
        %1341 = vmatprep.subr.mxu0 0.0
        %1342 = vmatpush1.msra.mxu0 0.0
        %1343 = vmatprep.subr.mxu0 0.0
        %1344 = vmatpush1.msra.mxu0 0.0
        %1345 = vmatprep.subr.mxu0 0.0
        %1346 = vmatpush1.msra.mxu0 0.0
        %1347 = vmatprep.subr.mxu0 0.0
        %1348 = vmatpush1.msra.mxu0 0.0
        %1349 = vmatprep.subr.mxu0 0.0
        %1350 = vmatpush1.msra.mxu0 0.0
        %1351 = vmatprep.subr.mxu0 0.0
        %1352 = vmatpush1.msra.mxu0 0.0
        %1353 = vmatprep.subr.mxu0 0.0
        %1354 = vmatpush1.msra.mxu0 0.0
        %1355 = vmatprep.subr.mxu0 0.0
        %1356 = vmatpush1.msra.mxu0 0.0
        %1357 = vmatprep.subr.mxu0 0.0
        %1358 = vmatpush1.msra.mxu0 0.0
        %1359 = vmatprep.subr.mxu0 0.0
        %1360 = vmatpush1.msra.mxu0 %v1324
        %1361 = vmatprep.subr.mxu0 0.0
        %1362 = vmatpush2.msra.mxu0 0.0
        %1363 = vmatprep.subr.mxu0 0.0
        %1364 = vmatpush2.msra.mxu0 0.0
        %1365 = vmatprep.subr.mxu0 0.0
        %1366 = vmatpush2.msra.mxu0 0.0
        %1367 = vmatprep.subr.mxu0 0.0
        %1368 = vmatpush2.msra.mxu0 0.0
        %1369 = vmatprep.subr.mxu0 0.0
        %1370 = vmatpush2.msra.mxu0 0.0
        %1371 = vmatprep.subr.mxu0 0.0
        %1372 = vmatpush2.msra.mxu0 0.0
        %1373 = vmatprep.subr.mxu0 0.0
        %1374 = vmatpush2.msra.mxu0 0.0
        %1375 = vmatprep.subr.mxu0 0.0
        %1376 = vmatpush2.msra.mxu0 0.0
        %1377 = vmatprep.subr.mxu0 0.0
        %1378 = vmatpush2.msra.mxu0 0.0
        %1379 = vmatprep.subr.mxu0 0.0
        %1380 = vmatpush2.msra.mxu0 0.0
        %1381 = vmatprep.subr.mxu0 0.0
        %1382 = vmatpush2.msra.mxu0 0.0
        %1383 = vmatprep.subr.mxu0 0.0
        %1384 = vmatpush2.msra.mxu0 0.0
        %1385 = vmatprep.subr.mxu0 0.0
        %1386 = vmatpush2.msra.mxu0 0.0
        %1387 = vmatprep.subr.mxu0 0.0
        %1388 = vmatpush2.msra.mxu0 0.0
        %1389 = vmatprep.subr.mxu0 0.0
        %1390 = vmatpush2.msra.mxu0 0.0
        %1391 = vmatprep.subr.mxu0 0.0
        %1392 = vmatpush2.msra.mxu0 0.0
        %1393 = vmatprep.mubr.f32.mxu0 0.0
        %1394 = vmatmul.mubr.f32.gmra.mxu0 %v1327
        %v1395 = vpop.f32.mrf.mxu0
        %v1396 = vadd.f32 0.0, %v1395
        %v1397 = vpop.f32.mrf.mxu0
        %1398 = vdwg.mxu0
        %v1399 = vadd.f32 %v1317, %v1396
        %1400 = vrot.lane.b32.xlu0 %v1011, 126
        %v1401 = vpop.permute.xlu0 %1400
        %v1403 = vsel %vm1320, %v1401, 0.0
        %1404 = vrot.lane.b32.xlu0 %v993, 112
        %v1405 = vpop.permute.xlu0 %1404
        %v1406 = vsel %vm1013, %v1405, 0
        %1408 = vmatprep.subr.mxu0 0.0
        %1409 = vmatpush1.msra.mxu0 0.0
        %1410 = vmatprep.subr.mxu0 0.0
        %1411 = vmatpush1.msra.mxu0 0.0
        %1412 = vmatprep.subr.mxu0 0.0
        %1413 = vmatpush1.msra.mxu0 0.0
        %1414 = vmatprep.subr.mxu0 0.0
        %1415 = vmatpush1.msra.mxu0 0.0
        %1416 = vmatprep.subr.mxu0 0.0
        %1417 = vmatpush1.msra.mxu0 0.0
        %1418 = vmatprep.subr.mxu0 0.0
        %1419 = vmatpush1.msra.mxu0 0.0
        %1420 = vmatprep.subr.mxu0 0.0
        %1421 = vmatpush1.msra.mxu0 0.0
        %1422 = vmatprep.subr.mxu0 0.0
        %1423 = vmatpush1.msra.mxu0 0.0
        %1424 = vmatprep.subr.mxu0 0.0
        %1425 = vmatpush1.msra.mxu0 0.0
        %1426 = vmatprep.subr.mxu0 0.0
        %1427 = vmatpush1.msra.mxu0 0.0
        %1428 = vmatprep.subr.mxu0 0.0
        %1429 = vmatpush1.msra.mxu0 0.0
        %1430 = vmatprep.subr.mxu0 0.0
        %1431 = vmatpush1.msra.mxu0 0.0
        %1432 = vmatprep.subr.mxu0 0.0
        %1433 = vmatpush1.msra.mxu0 0.0
        %1434 = vmatprep.subr.mxu0 0.0
        %1435 = vmatpush1.msra.mxu0 0.0
        %1436 = vmatprep.subr.mxu0 0.0
        %1437 = vmatpush1.msra.mxu0 0.0
        %1438 = vmatprep.subr.mxu0 0.0
        %1439 = vmatpush1.msra.mxu0 %v1403
        %1440 = vmatprep.subr.mxu0 0.0
        %1441 = vmatpush2.msra.mxu0 0.0
        %1442 = vmatprep.subr.mxu0 0.0
        %1443 = vmatpush2.msra.mxu0 0.0
        %1444 = vmatprep.subr.mxu0 0.0
        %1445 = vmatpush2.msra.mxu0 0.0
        %1446 = vmatprep.subr.mxu0 0.0
        %1447 = vmatpush2.msra.mxu0 0.0
        %1448 = vmatprep.subr.mxu0 0.0
        %1449 = vmatpush2.msra.mxu0 0.0
        %1450 = vmatprep.subr.mxu0 0.0
        %1451 = vmatpush2.msra.mxu0 0.0
        %1452 = vmatprep.subr.mxu0 0.0
        %1453 = vmatpush2.msra.mxu0 0.0
        %1454 = vmatprep.subr.mxu0 0.0
        %1455 = vmatpush2.msra.mxu0 0.0
        %1456 = vmatprep.subr.mxu0 0.0
        %1457 = vmatpush2.msra.mxu0 0.0
        %1458 = vmatprep.subr.mxu0 0.0
        %1459 = vmatpush2.msra.mxu0 0.0
        %1460 = vmatprep.subr.mxu0 0.0
        %1461 = vmatpush2.msra.mxu0 0.0
        %1462 = vmatprep.subr.mxu0 0.0
        %1463 = vmatpush2.msra.mxu0 0.0
        %1464 = vmatprep.subr.mxu0 0.0
        %1465 = vmatpush2.msra.mxu0 0.0
        %1466 = vmatprep.subr.mxu0 0.0
        %1467 = vmatpush2.msra.mxu0 0.0
        %1468 = vmatprep.subr.mxu0 0.0
        %1469 = vmatpush2.msra.mxu0 0.0
        %1470 = vmatprep.subr.mxu0 0.0
        %1471 = vmatpush2.msra.mxu0 0.0
        %1472 = vmatprep.mubr.f32.mxu0 0.0
        %1473 = vmatmul.mubr.f32.gmra.mxu0 %v1406
        %v1474 = vpop.f32.mrf.mxu0
        %v1475 = vadd.f32 0.0, %v1474
        %v1476 = vpop.f32.mrf.mxu0
        %1477 = vdwg.mxu0
        %v1478 = vadd.f32 %v1399, %v1475
        %1479 = vrot.lane.b32.xlu0 %v1001, 120
        %v1480 = vpop.permute.xlu0 %1479
        %v1482 = vsel %vm1004, %v1480, 0.0
        %1483 = vrot.lane.b32.xlu0 %v992, 104
        %v1484 = vpop.permute.xlu0 %1483
        %v1485 = vsel %vm1013, %v1484, 0
        %1487 = vmatprep.subr.mxu0 0.0
        %1488 = vmatpush1.msra.mxu0 0.0
        %1489 = vmatprep.subr.mxu0 0.0
        %1490 = vmatpush1.msra.mxu0 0.0
        %1491 = vmatprep.subr.mxu0 0.0
        %1492 = vmatpush1.msra.mxu0 0.0
        %1493 = vmatprep.subr.mxu0 0.0
        %1494 = vmatpush1.msra.mxu0 0.0
        %1495 = vmatprep.subr.mxu0 0.0
        %1496 = vmatpush1.msra.mxu0 0.0
        %1497 = vmatprep.subr.mxu0 0.0
        %1498 = vmatpush1.msra.mxu0 0.0
        %1499 = vmatprep.subr.mxu0 0.0
        %1500 = vmatpush1.msra.mxu0 0.0
        %1501 = vmatprep.subr.mxu0 0.0
        %1502 = vmatpush1.msra.mxu0 0.0
        %1503 = vmatprep.subr.mxu0 0.0
        %1504 = vmatpush1.msra.mxu0 0.0
        %1505 = vmatprep.subr.mxu0 0.0
        %1506 = vmatpush1.msra.mxu0 0.0
        %1507 = vmatprep.subr.mxu0 0.0
        %1508 = vmatpush1.msra.mxu0 0.0
        %1509 = vmatprep.subr.mxu0 0.0
        %1510 = vmatpush1.msra.mxu0 0.0
        %1511 = vmatprep.subr.mxu0 0.0
        %1512 = vmatpush1.msra.mxu0 0.0
        %1513 = vmatprep.subr.mxu0 0.0
        %1514 = vmatpush1.msra.mxu0 0.0
        %1515 = vmatprep.subr.mxu0 0.0
        %1516 = vmatpush1.msra.mxu0 0.0
        %1517 = vmatprep.subr.mxu0 0.0
        %1518 = vmatpush1.msra.mxu0 %v1482
        %1519 = vmatprep.subr.mxu0 0.0
        %1520 = vmatpush2.msra.mxu0 0.0
        %1521 = vmatprep.subr.mxu0 0.0
        %1522 = vmatpush2.msra.mxu0 0.0
        %1523 = vmatprep.subr.mxu0 0.0
        %1524 = vmatpush2.msra.mxu0 0.0
        %1525 = vmatprep.subr.mxu0 0.0
        %1526 = vmatpush2.msra.mxu0 0.0
        %1527 = vmatprep.subr.mxu0 0.0
        %1528 = vmatpush2.msra.mxu0 0.0
        %1529 = vmatprep.subr.mxu0 0.0
        %1530 = vmatpush2.msra.mxu0 0.0
        %1531 = vmatprep.subr.mxu0 0.0
        %1532 = vmatpush2.msra.mxu0 0.0
        %1533 = vmatprep.subr.mxu0 0.0
        %1534 = vmatpush2.msra.mxu0 0.0
        %1535 = vmatprep.subr.mxu0 0.0
        %1536 = vmatpush2.msra.mxu0 0.0
        %1537 = vmatprep.subr.mxu0 0.0
        %1538 = vmatpush2.msra.mxu0 0.0
        %1539 = vmatprep.subr.mxu0 0.0
        %1540 = vmatpush2.msra.mxu0 0.0
        %1541 = vmatprep.subr.mxu0 0.0
        %1542 = vmatpush2.msra.mxu0 0.0
        %1543 = vmatprep.subr.mxu0 0.0
        %1544 = vmatpush2.msra.mxu0 0.0
        %1545 = vmatprep.subr.mxu0 0.0
        %1546 = vmatpush2.msra.mxu0 0.0
        %1547 = vmatprep.subr.mxu0 0.0
        %1548 = vmatpush2.msra.mxu0 0.0
        %1549 = vmatprep.subr.mxu0 0.0
        %1550 = vmatpush2.msra.mxu0 0.0
        %1551 = vmatprep.mubr.f32.mxu0 0.0
        %1552 = vmatmul.mubr.f32.gmra.mxu0 %v1485
        %v1553 = vpop.f32.mrf.mxu0
        %v1554 = vadd.f32 0.0, %v1553
        %v1555 = vpop.f32.mrf.mxu0
        %1556 = vdwg.mxu0
        %v1557 = vadd.f32 %v1478, %v1554
        %1558 = vrot.lane.b32.xlu0 %v1011, 120
        %v1559 = vpop.permute.xlu0 %1558
        %v1561 = vsel %vm1004, %v1559, 0.0
        %1562 = vrot.lane.b32.xlu0 %v993, 104
        %v1563 = vpop.permute.xlu0 %1562
        %v1564 = vsel %vm1013, %v1563, 0
        %1566 = vmatprep.subr.mxu0 0.0
        %1567 = vmatpush1.msra.mxu0 0.0
        %1568 = vmatprep.subr.mxu0 0.0
        %1569 = vmatpush1.msra.mxu0 0.0
        %1570 = vmatprep.subr.mxu0 0.0
        %1571 = vmatpush1.msra.mxu0 0.0
        %1572 = vmatprep.subr.mxu0 0.0
        %1573 = vmatpush1.msra.mxu0 0.0
        %1574 = vmatprep.subr.mxu0 0.0
        %1575 = vmatpush1.msra.mxu0 0.0
        %1576 = vmatprep.subr.mxu0 0.0
        %1577 = vmatpush1.msra.mxu0 0.0
        %1578 = vmatprep.subr.mxu0 0.0
        %1579 = vmatpush1.msra.mxu0 0.0
        %1580 = vmatprep.subr.mxu0 0.0
        %1581 = vmatpush1.msra.mxu0 0.0
        %1582 = vmatprep.subr.mxu0 0.0
        %1583 = vmatpush1.msra.mxu0 0.0
        %1584 = vmatprep.subr.mxu0 0.0
        %1585 = vmatpush1.msra.mxu0 0.0
        %1586 = vmatprep.subr.mxu0 0.0
        %1587 = vmatpush1.msra.mxu0 0.0
        %1588 = vmatprep.subr.mxu0 0.0
        %1589 = vmatpush1.msra.mxu0 0.0
        %1590 = vmatprep.subr.mxu0 0.0
        %1591 = vmatpush1.msra.mxu0 0.0
        %1592 = vmatprep.subr.mxu0 0.0
        %1593 = vmatpush1.msra.mxu0 0.0
        %1594 = vmatprep.subr.mxu0 0.0
        %1595 = vmatpush1.msra.mxu0 0.0
        %1596 = vmatprep.subr.mxu0 0.0
        %1597 = vmatpush1.msra.mxu0 %v1561
        %1598 = vmatprep.subr.mxu0 0.0
        %1599 = vmatpush2.msra.mxu0 0.0
        %1600 = vmatprep.subr.mxu0 0.0
        %1601 = vmatpush2.msra.mxu0 0.0
        %1602 = vmatprep.subr.mxu0 0.0
        %1603 = vmatpush2.msra.mxu0 0.0
        %1604 = vmatprep.subr.mxu0 0.0
        %1605 = vmatpush2.msra.mxu0 0.0
        %1606 = vmatprep.subr.mxu0 0.0
        %1607 = vmatpush2.msra.mxu0 0.0
        %1608 = vmatprep.subr.mxu0 0.0
        %1609 = vmatpush2.msra.mxu0 0.0
        %1610 = vmatprep.subr.mxu0 0.0
        %1611 = vmatpush2.msra.mxu0 0.0
        %1612 = vmatprep.subr.mxu0 0.0
        %1613 = vmatpush2.msra.mxu0 0.0
        %1614 = vmatprep.subr.mxu0 0.0
        %1615 = vmatpush2.msra.mxu0 0.0
        %1616 = vmatprep.subr.mxu0 0.0
        %1617 = vmatpush2.msra.mxu0 0.0
        %1618 = vmatprep.subr.mxu0 0.0
        %1619 = vmatpush2.msra.mxu0 0.0
        %1620 = vmatprep.subr.mxu0 0.0
        %1621 = vmatpush2.msra.mxu0 0.0
        %1622 = vmatprep.subr.mxu0 0.0
        %1623 = vmatpush2.msra.mxu0 0.0
        %1624 = vmatprep.subr.mxu0 0.0
        %1625 = vmatpush2.msra.mxu0 0.0
        %1626 = vmatprep.subr.mxu0 0.0
        %1627 = vmatpush2.msra.mxu0 0.0
        %1628 = vmatprep.subr.mxu0 0.0
        %1629 = vmatpush2.msra.mxu0 0.0
        %1630 = vmatprep.mubr.f32.mxu0 0.0
        %1631 = vmatmul.mubr.f32.gmra.mxu0 %v1564
        %v1632 = vpop.f32.mrf.mxu0
        %v1633 = vadd.f32 0.0, %v1632
        %v1634 = vpop.f32.mrf.mxu0
        %1635 = vdwg.mxu0
        %v1636 = vadd.f32 %v1557, %v1633
        %1637 = vrot.lane.b32.xlu0 %v992, 96
        %v1638 = vpop.permute.xlu0 %1637
        %v1639 = vsel %vm1013, %v1638, 0
        %1641 = vmatprep.subr.mxu0 0.0
        %1642 = vmatpush1.msra.mxu0 0.0
        %1643 = vmatprep.subr.mxu0 0.0
        %1644 = vmatpush1.msra.mxu0 0.0
        %1645 = vmatprep.subr.mxu0 0.0
        %1646 = vmatpush1.msra.mxu0 0.0
        %1647 = vmatprep.subr.mxu0 0.0
        %1648 = vmatpush1.msra.mxu0 0.0
        %1649 = vmatprep.subr.mxu0 0.0
        %1650 = vmatpush1.msra.mxu0 0.0
        %1651 = vmatprep.subr.mxu0 0.0
        %1652 = vmatpush1.msra.mxu0 0.0
        %1653 = vmatprep.subr.mxu0 0.0
        %1654 = vmatpush1.msra.mxu0 0.0
        %1655 = vmatprep.subr.mxu0 0.0
        %1656 = vmatpush1.msra.mxu0 0.0
        %1657 = vmatprep.subr.mxu0 0.0
        %1658 = vmatpush1.msra.mxu0 0.0
        %1659 = vmatprep.subr.mxu0 0.0
        %1660 = vmatpush1.msra.mxu0 0.0
        %1661 = vmatprep.subr.mxu0 0.0
        %1662 = vmatpush1.msra.mxu0 0.0
        %1663 = vmatprep.subr.mxu0 0.0
        %1664 = vmatpush1.msra.mxu0 0.0
        %1665 = vmatprep.subr.mxu0 0.0
        %1666 = vmatpush1.msra.mxu0 0.0
        %1667 = vmatprep.subr.mxu0 0.0
        %1668 = vmatpush1.msra.mxu0 0.0
        %1669 = vmatprep.subr.mxu0 0.0
        %1670 = vmatpush1.msra.mxu0 0.0
        %1671 = vmatprep.subr.mxu0 0.0
        %1672 = vmatpush1.msra.mxu0 %v979
        %1673 = vmatprep.subr.mxu0 0.0
        %1674 = vmatpush2.msra.mxu0 0.0
        %1675 = vmatprep.subr.mxu0 0.0
        %1676 = vmatpush2.msra.mxu0 0.0
        %1677 = vmatprep.subr.mxu0 0.0
        %1678 = vmatpush2.msra.mxu0 0.0
        %1679 = vmatprep.subr.mxu0 0.0
        %1680 = vmatpush2.msra.mxu0 0.0
        %1681 = vmatprep.subr.mxu0 0.0
        %1682 = vmatpush2.msra.mxu0 0.0
        %1683 = vmatprep.subr.mxu0 0.0
        %1684 = vmatpush2.msra.mxu0 0.0
        %1685 = vmatprep.subr.mxu0 0.0
        %1686 = vmatpush2.msra.mxu0 0.0
        %1687 = vmatprep.subr.mxu0 0.0
        %1688 = vmatpush2.msra.mxu0 0.0
        %1689 = vmatprep.subr.mxu0 0.0
        %1690 = vmatpush2.msra.mxu0 0.0
        %1691 = vmatprep.subr.mxu0 0.0
        %1692 = vmatpush2.msra.mxu0 0.0
        %1693 = vmatprep.subr.mxu0 0.0
        %1694 = vmatpush2.msra.mxu0 0.0
        %1695 = vmatprep.subr.mxu0 0.0
        %1696 = vmatpush2.msra.mxu0 0.0
        %1697 = vmatprep.subr.mxu0 0.0
        %1698 = vmatpush2.msra.mxu0 0.0
        %1699 = vmatprep.subr.mxu0 0.0
        %1700 = vmatpush2.msra.mxu0 0.0
        %1701 = vmatprep.subr.mxu0 0.0
        %1702 = vmatpush2.msra.mxu0 0.0
        %1703 = vmatprep.subr.mxu0 0.0
        %1704 = vmatpush2.msra.mxu0 0.0
        %1705 = vmatprep.mubr.f32.mxu0 0.0
        %1706 = vmatmul.mubr.f32.gmra.mxu0 %v1639
        %v1707 = vpop.f32.mrf.mxu0
        %v1708 = vadd.f32 0.0, %v1707
        %v1709 = vpop.f32.mrf.mxu0
        %1710 = vdwg.mxu0
        %v1711 = vadd.f32 %v1636, %v1708
        %1712 = vrot.lane.b32.xlu0 %v993, 96
        %v1713 = vpop.permute.xlu0 %1712
        %v1714 = vsel %vm1013, %v1713, 0
        %1716 = vmatprep.subr.mxu0 0.0
        %1717 = vmatpush1.msra.mxu0 0.0
        %1718 = vmatprep.subr.mxu0 0.0
        %1719 = vmatpush1.msra.mxu0 0.0
        %1720 = vmatprep.subr.mxu0 0.0
        %1721 = vmatpush1.msra.mxu0 0.0
        %1722 = vmatprep.subr.mxu0 0.0
        %1723 = vmatpush1.msra.mxu0 0.0
        %1724 = vmatprep.subr.mxu0 0.0
        %1725 = vmatpush1.msra.mxu0 0.0
        %1726 = vmatprep.subr.mxu0 0.0
        %1727 = vmatpush1.msra.mxu0 0.0
        %1728 = vmatprep.subr.mxu0 0.0
        %1729 = vmatpush1.msra.mxu0 0.0
        %1730 = vmatprep.subr.mxu0 0.0
        %1731 = vmatpush1.msra.mxu0 0.0
        %1732 = vmatprep.subr.mxu0 0.0
        %1733 = vmatpush1.msra.mxu0 0.0
        %1734 = vmatprep.subr.mxu0 0.0
        %1735 = vmatpush1.msra.mxu0 0.0
        %1736 = vmatprep.subr.mxu0 0.0
        %1737 = vmatpush1.msra.mxu0 0.0
        %1738 = vmatprep.subr.mxu0 0.0
        %1739 = vmatpush1.msra.mxu0 0.0
        %1740 = vmatprep.subr.mxu0 0.0
        %1741 = vmatpush1.msra.mxu0 0.0
        %1742 = vmatprep.subr.mxu0 0.0
        %1743 = vmatpush1.msra.mxu0 0.0
        %1744 = vmatprep.subr.mxu0 0.0
        %1745 = vmatpush1.msra.mxu0 0.0
        %1746 = vmatprep.subr.mxu0 0.0
        %1747 = vmatpush1.msra.mxu0 %v978
        %1748 = vmatprep.subr.mxu0 0.0
        %1749 = vmatpush2.msra.mxu0 0.0
        %1750 = vmatprep.subr.mxu0 0.0
        %1751 = vmatpush2.msra.mxu0 0.0
        %1752 = vmatprep.subr.mxu0 0.0
        %1753 = vmatpush2.msra.mxu0 0.0
        %1754 = vmatprep.subr.mxu0 0.0
        %1755 = vmatpush2.msra.mxu0 0.0
        %1756 = vmatprep.subr.mxu0 0.0
        %1757 = vmatpush2.msra.mxu0 0.0
        %1758 = vmatprep.subr.mxu0 0.0
        %1759 = vmatpush2.msra.mxu0 0.0
        %1760 = vmatprep.subr.mxu0 0.0
        %1761 = vmatpush2.msra.mxu0 0.0
        %1762 = vmatprep.subr.mxu0 0.0
        %1763 = vmatpush2.msra.mxu0 0.0
        %1764 = vmatprep.subr.mxu0 0.0
        %1765 = vmatpush2.msra.mxu0 0.0
        %1766 = vmatprep.subr.mxu0 0.0
        %1767 = vmatpush2.msra.mxu0 0.0
        %1768 = vmatprep.subr.mxu0 0.0
        %1769 = vmatpush2.msra.mxu0 0.0
        %1770 = vmatprep.subr.mxu0 0.0
        %1771 = vmatpush2.msra.mxu0 0.0
        %1772 = vmatprep.subr.mxu0 0.0
        %1773 = vmatpush2.msra.mxu0 0.0
        %1774 = vmatprep.subr.mxu0 0.0
        %1775 = vmatpush2.msra.mxu0 0.0
        %1776 = vmatprep.subr.mxu0 0.0
        %1777 = vmatpush2.msra.mxu0 0.0
        %1778 = vmatprep.subr.mxu0 0.0
        %1779 = vmatpush2.msra.mxu0 0.0
        %1780 = vmatprep.mubr.f32.mxu0 0.0
        %1781 = vmatmul.mubr.f32.gmra.mxu0 %v1714
        %v1782 = vpop.f32.mrf.mxu0
        %v1783 = vadd.f32 0.0, %v1782
        %v1784 = vpop.f32.mrf.mxu0
        %1785 = vdwg.mxu0
        %v1786 = vadd.f32 %v1711, %v1783
        %1787 = vrot.lane.b32.xlu0 %v1001, 118
        %v1788 = vpop.permute.xlu0 %1787
        %v1790 = vsel %vm1320, %v1788, 0.0
        %1791 = vrot.lane.b32.xlu0 %v992, 88
        %v1792 = vpop.permute.xlu0 %1791
        %v1793 = vsel %vm1013, %v1792, 0
        %1795 = vmatprep.subr.mxu0 0.0
        %1796 = vmatpush1.msra.mxu0 0.0
        %1797 = vmatprep.subr.mxu0 0.0
        %1798 = vmatpush1.msra.mxu0 0.0
        %1799 = vmatprep.subr.mxu0 0.0
        %1800 = vmatpush1.msra.mxu0 0.0
        %1801 = vmatprep.subr.mxu0 0.0
        %1802 = vmatpush1.msra.mxu0 0.0
        %1803 = vmatprep.subr.mxu0 0.0
        %1804 = vmatpush1.msra.mxu0 0.0
        %1805 = vmatprep.subr.mxu0 0.0
        %1806 = vmatpush1.msra.mxu0 0.0
        %1807 = vmatprep.subr.mxu0 0.0
        %1808 = vmatpush1.msra.mxu0 0.0
        %1809 = vmatprep.subr.mxu0 0.0
        %1810 = vmatpush1.msra.mxu0 0.0
        %1811 = vmatprep.subr.mxu0 0.0
        %1812 = vmatpush1.msra.mxu0 0.0
        %1813 = vmatprep.subr.mxu0 0.0
        %1814 = vmatpush1.msra.mxu0 0.0
        %1815 = vmatprep.subr.mxu0 0.0
        %1816 = vmatpush1.msra.mxu0 0.0
        %1817 = vmatprep.subr.mxu0 0.0
        %1818 = vmatpush1.msra.mxu0 0.0
        %1819 = vmatprep.subr.mxu0 0.0
        %1820 = vmatpush1.msra.mxu0 0.0
        %1821 = vmatprep.subr.mxu0 0.0
        %1822 = vmatpush1.msra.mxu0 0.0
        %1823 = vmatprep.subr.mxu0 0.0
        %1824 = vmatpush1.msra.mxu0 0.0
        %1825 = vmatprep.subr.mxu0 0.0
        %1826 = vmatpush1.msra.mxu0 %v1790
        %1827 = vmatprep.subr.mxu0 0.0
        %1828 = vmatpush2.msra.mxu0 0.0
        %1829 = vmatprep.subr.mxu0 0.0
        %1830 = vmatpush2.msra.mxu0 0.0
        %1831 = vmatprep.subr.mxu0 0.0
        %1832 = vmatpush2.msra.mxu0 0.0
        %1833 = vmatprep.subr.mxu0 0.0
        %1834 = vmatpush2.msra.mxu0 0.0
        %1835 = vmatprep.subr.mxu0 0.0
        %1836 = vmatpush2.msra.mxu0 0.0
        %1837 = vmatprep.subr.mxu0 0.0
        %1838 = vmatpush2.msra.mxu0 0.0
        %1839 = vmatprep.subr.mxu0 0.0
        %1840 = vmatpush2.msra.mxu0 0.0
        %1841 = vmatprep.subr.mxu0 0.0
        %1842 = vmatpush2.msra.mxu0 0.0
        %1843 = vmatprep.subr.mxu0 0.0
        %1844 = vmatpush2.msra.mxu0 0.0
        %1845 = vmatprep.subr.mxu0 0.0
        %1846 = vmatpush2.msra.mxu0 0.0
        %1847 = vmatprep.subr.mxu0 0.0
        %1848 = vmatpush2.msra.mxu0 0.0
        %1849 = vmatprep.subr.mxu0 0.0
        %1850 = vmatpush2.msra.mxu0 0.0
        %1851 = vmatprep.subr.mxu0 0.0
        %1852 = vmatpush2.msra.mxu0 0.0
        %1853 = vmatprep.subr.mxu0 0.0
        %1854 = vmatpush2.msra.mxu0 0.0
        %1855 = vmatprep.subr.mxu0 0.0
        %1856 = vmatpush2.msra.mxu0 0.0
        %1857 = vmatprep.subr.mxu0 0.0
        %1858 = vmatpush2.msra.mxu0 0.0
        %1859 = vmatprep.mubr.f32.mxu0 0.0
        %1860 = vmatmul.mubr.f32.gmra.mxu0 %v1793
        %v1861 = vpop.f32.mrf.mxu0
        %v1862 = vadd.f32 0.0, %v1861
        %v1863 = vpop.f32.mrf.mxu0
        %1864 = vdwg.mxu0
        %v1865 = vadd.f32 %v1786, %v1862
        %1866 = vrot.lane.b32.xlu0 %v1011, 118
        %v1867 = vpop.permute.xlu0 %1866
        %v1869 = vsel %vm1320, %v1867, 0.0
        %1870 = vrot.lane.b32.xlu0 %v993, 88
        %v1871 = vpop.permute.xlu0 %1870
        %v1872 = vsel %vm1013, %v1871, 0
        %1874 = vmatprep.subr.mxu0 0.0
        %1875 = vmatpush1.msra.mxu0 0.0
        %1876 = vmatprep.subr.mxu0 0.0
        %1877 = vmatpush1.msra.mxu0 0.0
        %1878 = vmatprep.subr.mxu0 0.0
        %1879 = vmatpush1.msra.mxu0 0.0
        %1880 = vmatprep.subr.mxu0 0.0
        %1881 = vmatpush1.msra.mxu0 0.0
        %1882 = vmatprep.subr.mxu0 0.0
        %1883 = vmatpush1.msra.mxu0 0.0
        %1884 = vmatprep.subr.mxu0 0.0
        %1885 = vmatpush1.msra.mxu0 0.0
        %1886 = vmatprep.subr.mxu0 0.0
        %1887 = vmatpush1.msra.mxu0 0.0
        %1888 = vmatprep.subr.mxu0 0.0
        %1889 = vmatpush1.msra.mxu0 0.0
        %1890 = vmatprep.subr.mxu0 0.0
        %1891 = vmatpush1.msra.mxu0 0.0
        %1892 = vmatprep.subr.mxu0 0.0
        %1893 = vmatpush1.msra.mxu0 0.0
        %1894 = vmatprep.subr.mxu0 0.0
        %1895 = vmatpush1.msra.mxu0 0.0
        %1896 = vmatprep.subr.mxu0 0.0
        %1897 = vmatpush1.msra.mxu0 0.0
        %1898 = vmatprep.subr.mxu0 0.0
        %1899 = vmatpush1.msra.mxu0 0.0
        %1900 = vmatprep.subr.mxu0 0.0
        %1901 = vmatpush1.msra.mxu0 0.0
        %1902 = vmatprep.subr.mxu0 0.0
        %1903 = vmatpush1.msra.mxu0 0.0
        %1904 = vmatprep.subr.mxu0 0.0
        %1905 = vmatpush1.msra.mxu0 %v1869
        %1906 = vmatprep.subr.mxu0 0.0
        %1907 = vmatpush2.msra.mxu0 0.0
        %1908 = vmatprep.subr.mxu0 0.0
        %1909 = vmatpush2.msra.mxu0 0.0
        %1910 = vmatprep.subr.mxu0 0.0
        %1911 = vmatpush2.msra.mxu0 0.0
        %1912 = vmatprep.subr.mxu0 0.0
        %1913 = vmatpush2.msra.mxu0 0.0
        %1914 = vmatprep.subr.mxu0 0.0
        %1915 = vmatpush2.msra.mxu0 0.0
        %1916 = vmatprep.subr.mxu0 0.0
        %1917 = vmatpush2.msra.mxu0 0.0
        %1918 = vmatprep.subr.mxu0 0.0
        %1919 = vmatpush2.msra.mxu0 0.0
        %1920 = vmatprep.subr.mxu0 0.0
        %1921 = vmatpush2.msra.mxu0 0.0
        %1922 = vmatprep.subr.mxu0 0.0
        %1923 = vmatpush2.msra.mxu0 0.0
        %1924 = vmatprep.subr.mxu0 0.0
        %1925 = vmatpush2.msra.mxu0 0.0
        %1926 = vmatprep.subr.mxu0 0.0
        %1927 = vmatpush2.msra.mxu0 0.0
        %1928 = vmatprep.subr.mxu0 0.0
        %1929 = vmatpush2.msra.mxu0 0.0
        %1930 = vmatprep.subr.mxu0 0.0
        %1931 = vmatpush2.msra.mxu0 0.0
        %1932 = vmatprep.subr.mxu0 0.0
        %1933 = vmatpush2.msra.mxu0 0.0
        %1934 = vmatprep.subr.mxu0 0.0
        %1935 = vmatpush2.msra.mxu0 0.0
        %1936 = vmatprep.subr.mxu0 0.0
        %1937 = vmatpush2.msra.mxu0 0.0
        %1938 = vmatprep.mubr.f32.mxu0 0.0
        %1939 = vmatmul.mubr.f32.gmra.mxu0 %v1872
        %v1940 = vpop.f32.mrf.mxu0
        %v1941 = vadd.f32 0.0, %v1940
        %v1942 = vpop.f32.mrf.mxu0
        %1943 = vdwg.mxu0
        %v1944 = vadd.f32 %v1865, %v1941
        %1945 = vrot.lane.b32.xlu0 %v1001, 112
        %v1946 = vpop.permute.xlu0 %1945
        %v1948 = vsel %vm1004, %v1946, 0.0
        %1949 = vrot.lane.b32.xlu0 %v992, 80
        %v1950 = vpop.permute.xlu0 %1949
        %v1951 = vsel %vm1013, %v1950, 0
        %1953 = vmatprep.subr.mxu0 0.0
        %1954 = vmatpush1.msra.mxu0 0.0
        %1955 = vmatprep.subr.mxu0 0.0
        %1956 = vmatpush1.msra.mxu0 0.0
        %1957 = vmatprep.subr.mxu0 0.0
        %1958 = vmatpush1.msra.mxu0 0.0
        %1959 = vmatprep.subr.mxu0 0.0
        %1960 = vmatpush1.msra.mxu0 0.0
        %1961 = vmatprep.subr.mxu0 0.0
        %1962 = vmatpush1.msra.mxu0 0.0
        %1963 = vmatprep.subr.mxu0 0.0
        %1964 = vmatpush1.msra.mxu0 0.0
        %1965 = vmatprep.subr.mxu0 0.0
        %1966 = vmatpush1.msra.mxu0 0.0
        %1967 = vmatprep.subr.mxu0 0.0
        %1968 = vmatpush1.msra.mxu0 0.0
        %1969 = vmatprep.subr.mxu0 0.0
        %1970 = vmatpush1.msra.mxu0 0.0
        %1971 = vmatprep.subr.mxu0 0.0
        %1972 = vmatpush1.msra.mxu0 0.0
        %1973 = vmatprep.subr.mxu0 0.0
        %1974 = vmatpush1.msra.mxu0 0.0
        %1975 = vmatprep.subr.mxu0 0.0
        %1976 = vmatpush1.msra.mxu0 0.0
        %1977 = vmatprep.subr.mxu0 0.0
        %1978 = vmatpush1.msra.mxu0 0.0
        %1979 = vmatprep.subr.mxu0 0.0
        %1980 = vmatpush1.msra.mxu0 0.0
        %1981 = vmatprep.subr.mxu0 0.0
        %1982 = vmatpush1.msra.mxu0 0.0
        %1983 = vmatprep.subr.mxu0 0.0
        %1984 = vmatpush1.msra.mxu0 %v1948
        %1985 = vmatprep.subr.mxu0 0.0
        %1986 = vmatpush2.msra.mxu0 0.0
        %1987 = vmatprep.subr.mxu0 0.0
        %1988 = vmatpush2.msra.mxu0 0.0
        %1989 = vmatprep.subr.mxu0 0.0
        %1990 = vmatpush2.msra.mxu0 0.0
        %1991 = vmatprep.subr.mxu0 0.0
        %1992 = vmatpush2.msra.mxu0 0.0
        %1993 = vmatprep.subr.mxu0 0.0
        %1994 = vmatpush2.msra.mxu0 0.0
        %1995 = vmatprep.subr.mxu0 0.0
        %1996 = vmatpush2.msra.mxu0 0.0
        %1997 = vmatprep.subr.mxu0 0.0
        %1998 = vmatpush2.msra.mxu0 0.0
        %1999 = vmatprep.subr.mxu0 0.0
        %2000 = vmatpush2.msra.mxu0 0.0
        %2001 = vmatprep.subr.mxu0 0.0
        %2002 = vmatpush2.msra.mxu0 0.0
        %2003 = vmatprep.subr.mxu0 0.0
        %2004 = vmatpush2.msra.mxu0 0.0
        %2005 = vmatprep.subr.mxu0 0.0
        %2006 = vmatpush2.msra.mxu0 0.0
        %2007 = vmatprep.subr.mxu0 0.0
        %2008 = vmatpush2.msra.mxu0 0.0
        %2009 = vmatprep.subr.mxu0 0.0
        %2010 = vmatpush2.msra.mxu0 0.0
        %2011 = vmatprep.subr.mxu0 0.0
        %2012 = vmatpush2.msra.mxu0 0.0
        %2013 = vmatprep.subr.mxu0 0.0
        %2014 = vmatpush2.msra.mxu0 0.0
        %2015 = vmatprep.subr.mxu0 0.0
        %2016 = vmatpush2.msra.mxu0 0.0
        %2017 = vmatprep.mubr.f32.mxu0 0.0
        %2018 = vmatmul.mubr.f32.gmra.mxu0 %v1951
        %v2019 = vpop.f32.mrf.mxu0
        %v2020 = vadd.f32 0.0, %v2019
        %v2021 = vpop.f32.mrf.mxu0
        %2022 = vdwg.mxu0
        %v2023 = vadd.f32 %v1944, %v2020
        %2024 = vrot.lane.b32.xlu0 %v1011, 112
        %v2025 = vpop.permute.xlu0 %2024
        %v2027 = vsel %vm1004, %v2025, 0.0
        %2028 = vrot.lane.b32.xlu0 %v993, 80
        %v2029 = vpop.permute.xlu0 %2028
        %v2030 = vsel %vm1013, %v2029, 0
        %2032 = vmatprep.subr.mxu0 0.0
        %2033 = vmatpush1.msra.mxu0 0.0
        %2034 = vmatprep.subr.mxu0 0.0
        %2035 = vmatpush1.msra.mxu0 0.0
        %2036 = vmatprep.subr.mxu0 0.0
        %2037 = vmatpush1.msra.mxu0 0.0
        %2038 = vmatprep.subr.mxu0 0.0
        %2039 = vmatpush1.msra.mxu0 0.0
        %2040 = vmatprep.subr.mxu0 0.0
        %2041 = vmatpush1.msra.mxu0 0.0
        %2042 = vmatprep.subr.mxu0 0.0
        %2043 = vmatpush1.msra.mxu0 0.0
        %2044 = vmatprep.subr.mxu0 0.0
        %2045 = vmatpush1.msra.mxu0 0.0
        %2046 = vmatprep.subr.mxu0 0.0
        %2047 = vmatpush1.msra.mxu0 0.0
        %2048 = vmatprep.subr.mxu0 0.0
        %2049 = vmatpush1.msra.mxu0 0.0
        %2050 = vmatprep.subr.mxu0 0.0
        %2051 = vmatpush1.msra.mxu0 0.0
        %2052 = vmatprep.subr.mxu0 0.0
        %2053 = vmatpush1.msra.mxu0 0.0
        %2054 = vmatprep.subr.mxu0 0.0
        %2055 = vmatpush1.msra.mxu0 0.0
        %2056 = vmatprep.subr.mxu0 0.0
        %2057 = vmatpush1.msra.mxu0 0.0
        %2058 = vmatprep.subr.mxu0 0.0
        %2059 = vmatpush1.msra.mxu0 0.0
        %2060 = vmatprep.subr.mxu0 0.0
        %2061 = vmatpush1.msra.mxu0 0.0
        %2062 = vmatprep.subr.mxu0 0.0
        %2063 = vmatpush1.msra.mxu0 %v2027
        %2064 = vmatprep.subr.mxu0 0.0
        %2065 = vmatpush2.msra.mxu0 0.0
        %2066 = vmatprep.subr.mxu0 0.0
        %2067 = vmatpush2.msra.mxu0 0.0
        %2068 = vmatprep.subr.mxu0 0.0
        %2069 = vmatpush2.msra.mxu0 0.0
        %2070 = vmatprep.subr.mxu0 0.0
        %2071 = vmatpush2.msra.mxu0 0.0
        %2072 = vmatprep.subr.mxu0 0.0
        %2073 = vmatpush2.msra.mxu0 0.0
        %2074 = vmatprep.subr.mxu0 0.0
        %2075 = vmatpush2.msra.mxu0 0.0
        %2076 = vmatprep.subr.mxu0 0.0
        %2077 = vmatpush2.msra.mxu0 0.0
        %2078 = vmatprep.subr.mxu0 0.0
        %2079 = vmatpush2.msra.mxu0 0.0
        %2080 = vmatprep.subr.mxu0 0.0
        %2081 = vmatpush2.msra.mxu0 0.0
        %2082 = vmatprep.subr.mxu0 0.0
        %2083 = vmatpush2.msra.mxu0 0.0
        %2084 = vmatprep.subr.mxu0 0.0
        %2085 = vmatpush2.msra.mxu0 0.0
        %2086 = vmatprep.subr.mxu0 0.0
        %2087 = vmatpush2.msra.mxu0 0.0
        %2088 = vmatprep.subr.mxu0 0.0
        %2089 = vmatpush2.msra.mxu0 0.0
        %2090 = vmatprep.subr.mxu0 0.0
        %2091 = vmatpush2.msra.mxu0 0.0
        %2092 = vmatprep.subr.mxu0 0.0
        %2093 = vmatpush2.msra.mxu0 0.0
        %2094 = vmatprep.subr.mxu0 0.0
        %2095 = vmatpush2.msra.mxu0 0.0
        %2096 = vmatprep.mubr.f32.mxu0 0.0
        %2097 = vmatmul.mubr.f32.gmra.mxu0 %v2030
        %v2098 = vpop.f32.mrf.mxu0
        %v2099 = vadd.f32 0.0, %v2098
        %v2100 = vpop.f32.mrf.mxu0
        %2101 = vdwg.mxu0
        %v2102 = vadd.f32 %v2023, %v2099
        %2103 = vrot.lane.b32.xlu0 %v992, 72
        %v2104 = vpop.permute.xlu0 %2103
        %2105 = vrot.lane.b32.xlu0 %v1001, 111
        %v2106 = vpop.permute.xlu0 %2105
        %v2108 = vsel %vm1013, %v2104, 0
        %2110 = vmatprep.subr.mxu0 0.0
        %2111 = vmatpush1.msra.mxu0 0.0
        %2112 = vmatprep.subr.mxu0 0.0
        %2113 = vmatpush1.msra.mxu0 0.0
        %2114 = vmatprep.subr.mxu0 0.0
        %2115 = vmatpush1.msra.mxu0 0.0
        %2116 = vmatprep.subr.mxu0 0.0
        %2117 = vmatpush1.msra.mxu0 0.0
        %2118 = vmatprep.subr.mxu0 0.0
        %2119 = vmatpush1.msra.mxu0 0.0
        %2120 = vmatprep.subr.mxu0 0.0
        %2121 = vmatpush1.msra.mxu0 0.0
        %2122 = vmatprep.subr.mxu0 0.0
        %2123 = vmatpush1.msra.mxu0 0.0
        %2124 = vmatprep.subr.mxu0 0.0
        %2125 = vmatpush1.msra.mxu0 0.0
        %2126 = vmatprep.subr.mxu0 0.0
        %2127 = vmatpush1.msra.mxu0 0.0
        %2128 = vmatprep.subr.mxu0 0.0
        %2129 = vmatpush1.msra.mxu0 0.0
        %2130 = vmatprep.subr.mxu0 0.0
        %2131 = vmatpush1.msra.mxu0 0.0
        %2132 = vmatprep.subr.mxu0 0.0
        %2133 = vmatpush1.msra.mxu0 0.0
        %2134 = vmatprep.subr.mxu0 0.0
        %2135 = vmatpush1.msra.mxu0 0.0
        %2136 = vmatprep.subr.mxu0 0.0
        %2137 = vmatpush1.msra.mxu0 0.0
        %2138 = vmatprep.subr.mxu0 0.0
        %2139 = vmatpush1.msra.mxu0 0.0
        %2140 = vmatprep.subr.mxu0 0.0
        %2141 = vmatpush1.msra.mxu0 %v2106
        %2142 = vmatprep.subr.mxu0 0.0
        %2143 = vmatpush2.msra.mxu0 0.0
        %2144 = vmatprep.subr.mxu0 0.0
        %2145 = vmatpush2.msra.mxu0 0.0
        %2146 = vmatprep.subr.mxu0 0.0
        %2147 = vmatpush2.msra.mxu0 0.0
        %2148 = vmatprep.subr.mxu0 0.0
        %2149 = vmatpush2.msra.mxu0 0.0
        %2150 = vmatprep.subr.mxu0 0.0
        %2151 = vmatpush2.msra.mxu0 0.0
        %2152 = vmatprep.subr.mxu0 0.0
        %2153 = vmatpush2.msra.mxu0 0.0
        %2154 = vmatprep.subr.mxu0 0.0
        %2155 = vmatpush2.msra.mxu0 0.0
        %2156 = vmatprep.subr.mxu0 0.0
        %2157 = vmatpush2.msra.mxu0 0.0
        %2158 = vmatprep.subr.mxu0 0.0
        %2159 = vmatpush2.msra.mxu0 0.0
        %2160 = vmatprep.subr.mxu0 0.0
        %2161 = vmatpush2.msra.mxu0 0.0
        %2162 = vmatprep.subr.mxu0 0.0
        %2163 = vmatpush2.msra.mxu0 0.0
        %2164 = vmatprep.subr.mxu0 0.0
        %2165 = vmatpush2.msra.mxu0 0.0
        %2166 = vmatprep.subr.mxu0 0.0
        %2167 = vmatpush2.msra.mxu0 0.0
        %2168 = vmatprep.subr.mxu0 0.0
        %2169 = vmatpush2.msra.mxu0 0.0
        %2170 = vmatprep.subr.mxu0 0.0
        %2171 = vmatpush2.msra.mxu0 0.0
        %2172 = vmatprep.subr.mxu0 0.0
        %2173 = vmatpush2.msra.mxu0 0.0
        %2174 = vmatprep.mubr.f32.mxu0 0.0
        %2175 = vmatmul.mubr.f32.gmra.mxu0 %v2108
        %v2176 = vpop.f32.mrf.mxu0
        %v2177 = vadd.f32 0.0, %v2176
        %v2178 = vpop.f32.mrf.mxu0
        %2179 = vdwg.mxu0
        %v2180 = vadd.f32 %v2102, %v2177
        %2181 = vrot.lane.b32.xlu0 %v993, 72
        %v2182 = vpop.permute.xlu0 %2181
        %2183 = vrot.lane.b32.xlu0 %v1011, 111
        %v2184 = vpop.permute.xlu0 %2183
        %v2186 = vsel %vm1013, %v2182, 0
        %2188 = vmatprep.subr.mxu0 0.0
        %2189 = vmatpush1.msra.mxu0 0.0
        %2190 = vmatprep.subr.mxu0 0.0
        %2191 = vmatpush1.msra.mxu0 0.0
        %2192 = vmatprep.subr.mxu0 0.0
        %2193 = vmatpush1.msra.mxu0 0.0
        %2194 = vmatprep.subr.mxu0 0.0
        %2195 = vmatpush1.msra.mxu0 0.0
        %2196 = vmatprep.subr.mxu0 0.0
        %2197 = vmatpush1.msra.mxu0 0.0
        %2198 = vmatprep.subr.mxu0 0.0
        %2199 = vmatpush1.msra.mxu0 0.0
        %2200 = vmatprep.subr.mxu0 0.0
        %2201 = vmatpush1.msra.mxu0 0.0
        %2202 = vmatprep.subr.mxu0 0.0
        %2203 = vmatpush1.msra.mxu0 0.0
        %2204 = vmatprep.subr.mxu0 0.0
        %2205 = vmatpush1.msra.mxu0 0.0
        %2206 = vmatprep.subr.mxu0 0.0
        %2207 = vmatpush1.msra.mxu0 0.0
        %2208 = vmatprep.subr.mxu0 0.0
        %2209 = vmatpush1.msra.mxu0 0.0
        %2210 = vmatprep.subr.mxu0 0.0
        %2211 = vmatpush1.msra.mxu0 0.0
        %2212 = vmatprep.subr.mxu0 0.0
        %2213 = vmatpush1.msra.mxu0 0.0
        %2214 = vmatprep.subr.mxu0 0.0
        %2215 = vmatpush1.msra.mxu0 0.0
        %2216 = vmatprep.subr.mxu0 0.0
        %2217 = vmatpush1.msra.mxu0 0.0
        %2218 = vmatprep.subr.mxu0 0.0
        %2219 = vmatpush1.msra.mxu0 %v2184
        %2220 = vmatprep.subr.mxu0 0.0
        %2221 = vmatpush2.msra.mxu0 0.0
        %2222 = vmatprep.subr.mxu0 0.0
        %2223 = vmatpush2.msra.mxu0 0.0
        %2224 = vmatprep.subr.mxu0 0.0
        %2225 = vmatpush2.msra.mxu0 0.0
        %2226 = vmatprep.subr.mxu0 0.0
        %2227 = vmatpush2.msra.mxu0 0.0
        %2228 = vmatprep.subr.mxu0 0.0
        %2229 = vmatpush2.msra.mxu0 0.0
        %2230 = vmatprep.subr.mxu0 0.0
        %2231 = vmatpush2.msra.mxu0 0.0
        %2232 = vmatprep.subr.mxu0 0.0
        %2233 = vmatpush2.msra.mxu0 0.0
        %2234 = vmatprep.subr.mxu0 0.0
        %2235 = vmatpush2.msra.mxu0 0.0
        %2236 = vmatprep.subr.mxu0 0.0
        %2237 = vmatpush2.msra.mxu0 0.0
        %2238 = vmatprep.subr.mxu0 0.0
        %2239 = vmatpush2.msra.mxu0 0.0
        %2240 = vmatprep.subr.mxu0 0.0
        %2241 = vmatpush2.msra.mxu0 0.0
        %2242 = vmatprep.subr.mxu0 0.0
        %2243 = vmatpush2.msra.mxu0 0.0
        %2244 = vmatprep.subr.mxu0 0.0
        %2245 = vmatpush2.msra.mxu0 0.0
        %2246 = vmatprep.subr.mxu0 0.0
        %2247 = vmatpush2.msra.mxu0 0.0
        %2248 = vmatprep.subr.mxu0 0.0
        %2249 = vmatpush2.msra.mxu0 0.0
        %2250 = vmatprep.subr.mxu0 0.0
        %2251 = vmatpush2.msra.mxu0 0.0
        %2252 = vmatprep.mubr.f32.mxu0 0.0
        %2253 = vmatmul.mubr.f32.gmra.mxu0 %v2186
        %v2254 = vpop.f32.mrf.mxu0
        %v2255 = vadd.f32 0.0, %v2254
        %v2256 = vpop.f32.mrf.mxu0
        %2257 = vdwg.mxu0
        %v2258 = vadd.f32 %v2180, %v2255
        %2259 = vrot.lane.b32.xlu0 %v1001, 110
        %v2260 = vpop.permute.xlu0 %2259
        %v2262 = vsel %vm1320, %v2260, 0.0
        %2263 = vrot.lane.b32.xlu0 %v992, 64
        %v2264 = vpop.permute.xlu0 %2263
        %v2265 = vsel %vm1013, %v2264, 0
        %2267 = vmatprep.subr.mxu0 0.0
        %2268 = vmatpush1.msra.mxu0 0.0
        %2269 = vmatprep.subr.mxu0 0.0
        %2270 = vmatpush1.msra.mxu0 0.0
        %2271 = vmatprep.subr.mxu0 0.0
        %2272 = vmatpush1.msra.mxu0 0.0
        %2273 = vmatprep.subr.mxu0 0.0
        %2274 = vmatpush1.msra.mxu0 0.0
        %2275 = vmatprep.subr.mxu0 0.0
        %2276 = vmatpush1.msra.mxu0 0.0
        %2277 = vmatprep.subr.mxu0 0.0
        %2278 = vmatpush1.msra.mxu0 0.0
        %2279 = vmatprep.subr.mxu0 0.0
        %2280 = vmatpush1.msra.mxu0 0.0
        %2281 = vmatprep.subr.mxu0 0.0
        %2282 = vmatpush1.msra.mxu0 0.0
        %2283 = vmatprep.subr.mxu0 0.0
        %2284 = vmatpush1.msra.mxu0 0.0
        %2285 = vmatprep.subr.mxu0 0.0
        %2286 = vmatpush1.msra.mxu0 0.0
        %2287 = vmatprep.subr.mxu0 0.0
        %2288 = vmatpush1.msra.mxu0 0.0
        %2289 = vmatprep.subr.mxu0 0.0
        %2290 = vmatpush1.msra.mxu0 0.0
        %2291 = vmatprep.subr.mxu0 0.0
        %2292 = vmatpush1.msra.mxu0 0.0
        %2293 = vmatprep.subr.mxu0 0.0
        %2294 = vmatpush1.msra.mxu0 0.0
        %2295 = vmatprep.subr.mxu0 0.0
        %2296 = vmatpush1.msra.mxu0 0.0
        %2297 = vmatprep.subr.mxu0 0.0
        %2298 = vmatpush1.msra.mxu0 %v2262
        %2299 = vmatprep.subr.mxu0 0.0
        %2300 = vmatpush2.msra.mxu0 0.0
        %2301 = vmatprep.subr.mxu0 0.0
        %2302 = vmatpush2.msra.mxu0 0.0
        %2303 = vmatprep.subr.mxu0 0.0
        %2304 = vmatpush2.msra.mxu0 0.0
        %2305 = vmatprep.subr.mxu0 0.0
        %2306 = vmatpush2.msra.mxu0 0.0
        %2307 = vmatprep.subr.mxu0 0.0
        %2308 = vmatpush2.msra.mxu0 0.0
        %2309 = vmatprep.subr.mxu0 0.0
        %2310 = vmatpush2.msra.mxu0 0.0
        %2311 = vmatprep.subr.mxu0 0.0
        %2312 = vmatpush2.msra.mxu0 0.0
        %2313 = vmatprep.subr.mxu0 0.0
        %2314 = vmatpush2.msra.mxu0 0.0
        %2315 = vmatprep.subr.mxu0 0.0
        %2316 = vmatpush2.msra.mxu0 0.0
        %2317 = vmatprep.subr.mxu0 0.0
        %2318 = vmatpush2.msra.mxu0 0.0
        %2319 = vmatprep.subr.mxu0 0.0
        %2320 = vmatpush2.msra.mxu0 0.0
        %2321 = vmatprep.subr.mxu0 0.0
        %2322 = vmatpush2.msra.mxu0 0.0
        %2323 = vmatprep.subr.mxu0 0.0
        %2324 = vmatpush2.msra.mxu0 0.0
        %2325 = vmatprep.subr.mxu0 0.0
        %2326 = vmatpush2.msra.mxu0 0.0
        %2327 = vmatprep.subr.mxu0 0.0
        %2328 = vmatpush2.msra.mxu0 0.0
        %2329 = vmatprep.subr.mxu0 0.0
        %2330 = vmatpush2.msra.mxu0 0.0
        %2331 = vmatprep.mubr.f32.mxu0 0.0
        %2332 = vmatmul.mubr.f32.gmra.mxu0 %v2265
        %v2333 = vpop.f32.mrf.mxu0
        %v2334 = vadd.f32 0.0, %v2333
        %v2335 = vpop.f32.mrf.mxu0
        %2336 = vdwg.mxu0
        %v2337 = vadd.f32 %v2258, %v2334
        %2338 = vrot.lane.b32.xlu0 %v1011, 110
        %v2339 = vpop.permute.xlu0 %2338
        %v2341 = vsel %vm1320, %v2339, 0.0
        %2342 = vrot.lane.b32.xlu0 %v993, 64
        %v2343 = vpop.permute.xlu0 %2342
        %v2344 = vsel %vm1013, %v2343, 0
        %2346 = vmatprep.subr.mxu0 0.0
        %2347 = vmatpush1.msra.mxu0 0.0
        %2348 = vmatprep.subr.mxu0 0.0
        %2349 = vmatpush1.msra.mxu0 0.0
        %2350 = vmatprep.subr.mxu0 0.0
        %2351 = vmatpush1.msra.mxu0 0.0
        %2352 = vmatprep.subr.mxu0 0.0
        %2353 = vmatpush1.msra.mxu0 0.0
        %2354 = vmatprep.subr.mxu0 0.0
        %2355 = vmatpush1.msra.mxu0 0.0
        %2356 = vmatprep.subr.mxu0 0.0
        %2357 = vmatpush1.msra.mxu0 0.0
        %2358 = vmatprep.subr.mxu0 0.0
        %2359 = vmatpush1.msra.mxu0 0.0
        %2360 = vmatprep.subr.mxu0 0.0
        %2361 = vmatpush1.msra.mxu0 0.0
        %2362 = vmatprep.subr.mxu0 0.0
        %2363 = vmatpush1.msra.mxu0 0.0
        %2364 = vmatprep.subr.mxu0 0.0
        %2365 = vmatpush1.msra.mxu0 0.0
        %2366 = vmatprep.subr.mxu0 0.0
        %2367 = vmatpush1.msra.mxu0 0.0
        %2368 = vmatprep.subr.mxu0 0.0
        %2369 = vmatpush1.msra.mxu0 0.0
        %2370 = vmatprep.subr.mxu0 0.0
        %2371 = vmatpush1.msra.mxu0 0.0
        %2372 = vmatprep.subr.mxu0 0.0
        %2373 = vmatpush1.msra.mxu0 0.0
        %2374 = vmatprep.subr.mxu0 0.0
        %2375 = vmatpush1.msra.mxu0 0.0
        %2376 = vmatprep.subr.mxu0 0.0
        %2377 = vmatpush1.msra.mxu0 %v2341
        %2378 = vmatprep.subr.mxu0 0.0
        %2379 = vmatpush2.msra.mxu0 0.0
        %2380 = vmatprep.subr.mxu0 0.0
        %2381 = vmatpush2.msra.mxu0 0.0
        %2382 = vmatprep.subr.mxu0 0.0
        %2383 = vmatpush2.msra.mxu0 0.0
        %2384 = vmatprep.subr.mxu0 0.0
        %2385 = vmatpush2.msra.mxu0 0.0
        %2386 = vmatprep.subr.mxu0 0.0
        %2387 = vmatpush2.msra.mxu0 0.0
        %2388 = vmatprep.subr.mxu0 0.0
        %2389 = vmatpush2.msra.mxu0 0.0
        %2390 = vmatprep.subr.mxu0 0.0
        %2391 = vmatpush2.msra.mxu0 0.0
        %2392 = vmatprep.subr.mxu0 0.0
        %2393 = vmatpush2.msra.mxu0 0.0
        %2394 = vmatprep.subr.mxu0 0.0
        %2395 = vmatpush2.msra.mxu0 0.0
        %2396 = vmatprep.subr.mxu0 0.0
        %2397 = vmatpush2.msra.mxu0 0.0
        %2398 = vmatprep.subr.mxu0 0.0
        %2399 = vmatpush2.msra.mxu0 0.0
        %2400 = vmatprep.subr.mxu0 0.0
        %2401 = vmatpush2.msra.mxu0 0.0
        %2402 = vmatprep.subr.mxu0 0.0
        %2403 = vmatpush2.msra.mxu0 0.0
        %2404 = vmatprep.subr.mxu0 0.0
        %2405 = vmatpush2.msra.mxu0 0.0
        %2406 = vmatprep.subr.mxu0 0.0
        %2407 = vmatpush2.msra.mxu0 0.0
        %2408 = vmatprep.subr.mxu0 0.0
        %2409 = vmatpush2.msra.mxu0 0.0
        %2410 = vmatprep.mubr.f32.mxu0 0.0
        %2411 = vmatmul.mubr.f32.gmra.mxu0 %v2344
        %v2412 = vpop.f32.mrf.mxu0
        %v2413 = vadd.f32 0.0, %v2412
        %v2414 = vpop.f32.mrf.mxu0
        %2415 = vdwg.mxu0
        %v2416 = vadd.f32 %v2337, %v2413
        %v2417 = vld [vmem:[%s8] sm:$0xff]
        %2419 = vset.pattern.permute.xlu0 0
        %2420 = vperm.xlu0 %2419, %v2417
        %v2421 = vpop.permute.xlu0 %2420
        %v2423 = vadd.f32 %v2416, %v2421
        %v2424 = vmax.f32 %v2423, 0.0
        %vm2425 = vcmask 523264
        %2426 = vst.msk [vmem:[%s415] sm:$0xff] %vm2425, %v2424
        %s2427 = sand.u32 %s235, 1
        %s2428 = scalar_lea.sflag [#allocation4], %s2427
        %s2429 = sand.u32 %s235, 1
        %s2430 = smul.addr %s2429, 8
        %s2431 = scalar_lea.vmem [#allocation11], %s2430
        // Predicated region
        $region77: #{tpu_custom_call.1} parent=55 // pred_check
          %p2432 = pneg %p245
        $region78: #{tpu_custom_call.1} parent=55 // pred_check_branch
          %2434 = sbr.rel (%p2432) target = $region80
        $region79: #{tpu_custom_call.1} parent=55 // pred_region
          %s2436 = ssub.s32 128, 128
          %2437 = vsyncadd %s2428, %s2436
          %s2438 = smul.addr %s28, 128
          %s2439 = scalar_lea.hbm %s9, %s2438
          %s2441 = sshll.u32 %s2431, 4
          %s2442 = int_to_ptr.vmem [resolvable:$true] %s2441
          %2444 = dma.vmem_to_hbm [thread:$0]  %s2442, 128, %s2439, %s2428
        $region80: #{tpu_custom_call.1} parent=55 // pred_fallthru
          _
      $region56: #{tpu_custom_call.1} parent=5 // pred_fallthru
        _
      %p2445 = scmp.le.s32.totalorder 2, %s23
      // Predicated region
      $region81: #{tpu_custom_call.1} parent=5 // pred_check
        %p2446 = pneg %p2445
      $region82: #{tpu_custom_call.1} parent=5 // pred_check_branch
        %2448 = sbr.rel (%p2446) target = $region84
      $region83: #{tpu_custom_call.1} parent=5 // pred_region
        %s2449 = ssub.s32 %s23, 2
        // Predicated region
        $region85: #{tpu_custom_call.1} parent=83 // pred_check
          %p2450 = pneg %p251
        $region86: #{tpu_custom_call.1} parent=83 // pred_check_branch
          %2452 = sbr.rel (%p2450) target = $region88
        $region87: #{tpu_custom_call.1} parent=83 // pred_region
          %s2453 = sand.u32 %s236, 1
          %s2454 = scalar_lea.sflag [#allocation4], %s2453
          %s2455 = sand.u32 %s236, 1
          %s2456 = smul.addr %s2455, 8
          %s2457 = scalar_lea.vmem [#allocation11], %s2456
          %2458 = dma.done %s2454, 128
        $region88: #{tpu_custom_call.1} parent=83 // pred_fallthru
          _
      $region84: #{tpu_custom_call.1} parent=5 // pred_fallthru
        _
    $region6: #{tpu_custom_call.1} parent=1 // loop_footer
      %s27 = sadd.s32 1, %s23
    $region7: #{tpu_custom_call.1} parent=1 // loop_footer_branch
      %22 = sbr.rel target = $region3
    $region8: #{tpu_custom_call.1} parent=1 // loop_exit
      _
    %2459 = vsyncpa [#allocation3], 1
    %s2460 = scalar_lea.sflag [#allocation3], 1
    %2461 = vsyncpa %s2460, 1
    %2462 = vsyncpa [#allocation6], 1
    %2463 = vsyncpa [#allocation9], 1
    %2464 = vsyncpa [#allocation4], 1
    %s2465 = scalar_lea.sflag [#allocation4], 1
    %2466 = vsyncpa %s2465, 1

</llo_original>
